<compile_context>
chip_gen: v6e
topology: v6e:2x2x1
jax: 0.10.0
libtpu: 0.0.40
codegen_flags: <defaults>
</compile_context>

<pallas_src>
import functools

import jax
import jax.numpy as jnp
from jax.experimental import pallas as pl
from jax.experimental.pallas import tpu as pltpu


def transformer_classifier_kernel(x_ref, wq_ref, wk_ref, wv_ref, wc_ref,
                                  b_ref, out_ref, *, batch_tile, seq, heads):
    TB, S, H = batch_tile, seq, heads
    x = x_ref[...]                                  # [TB*S, D] compute dtype
    D = x.shape[-1]
    hd = D // H
    scale = 1.0 / float(hd) ** 0.5
    mdt = x.dtype                                   # MXU feed dtype (f32 / bf16)

    # Full-width QKV projections (scale folded into Q once), f32 accumulation.
    q = jnp.dot(x, wq_ref[...], preferred_element_type=jnp.float32) * scale
    k = jnp.dot(x, wk_ref[...], preferred_element_type=jnp.float32)
    v = jnp.dot(x, wv_ref[...], preferred_element_type=jnp.float32)

    # [TB, S, D] views for batched per-head contractions (leading-dim reshape).
    q3 = q.reshape(TB, S, D).astype(mdt)
    k3 = k.reshape(TB, S, D).astype(mdt)
    v3 = v.reshape(TB, S, D).astype(mdt)

    pooled_parts = []
    for h in range(H):                              # static unroll, H is small
        lo, hi = h * hd, (h + 1) * hd
        # Q.K^T for all TB batch rows of this head in one batched contraction.
        s_h = jnp.einsum('bqd,bkd->bqk', q3[:, :, lo:hi], k3[:, :, lo:hi],
                         preferred_element_type=jnp.float32)       # [TB, S, S]
        # Numerically stable softmax over the key axis.
        s_h = s_h - jnp.max(s_h, axis=-1, keepdims=True)
        e_h = jnp.exp(s_h)
        p_h = e_h / jnp.sum(e_h, axis=-1, keepdims=True)           # [TB, S, S]
        # Pool over query positions BEFORE P@V (mean commutes with the matmul),
        # turning the [S,S]x[S,hd] product into a [1,S]x[S,hd] one per batch.
        pbar = jnp.mean(p_h, axis=1, keepdims=True).astype(mdt)    # [TB, 1, S]
        ctx = jnp.einsum('bqk,bkd->bqd', pbar, v3[:, :, lo:hi],
                         preferred_element_type=jnp.float32)       # [TB, 1, hd]
        pooled_parts.append(ctx[:, 0, :])                          # [TB, hd]

    pooled = jnp.concatenate(pooled_parts, axis=-1)                # [TB, D]

    # Fused epilogue: W_o and the classifier were pre-folded into wc ([D, Cp]),
    # so the per-token output projection is gone; one tiny [TB, D] x [D, Cp]
    # matmul + bias, stored as a lane-dense 128-wide slab.
    out_ref[...] = (jnp.dot(pooled, wc_ref[...],
                            preferred_element_type=jnp.float32)
                    + b_ref[...])                                  # [TB, Cp]


def _pick_batch_tile(B, S, target_rows=256):
    """Batch tile: divides B, multiple of 8 (or == B), prefers TB*S >= 256
    with grid >= 2 so the DMA pipeline / megacore have work."""
    cands = [tb for tb in range(8, B, 8) if B % tb == 0]
    for tb in sorted(cands):
        if tb * S >= target_rows:
            return tb
    return cands[-1] if cands else B


def transformer_classifier(x, wq, wk, wv, wo, fcw, fcb, *, heads,
                           batch_tile=None, compute_dtype=jnp.float32):
    B, S, D = x.shape
    C = fcw.shape[0]
    assert D % heads == 0

    TB = batch_tile if batch_tile is not None else _pick_batch_tile(B, S)
    assert B % TB == 0 and (TB == B or TB % 8 == 0), "bad batch tile"

    # Lane-dense classifier width (pad C up to a multiple of 128).
    Cp = 128 * pl.cdiv(C, 128)

    # Fold W_o into the classifier: logits = mean_seq(ctx) @ (W_o @ fcw.T) + b.
    wc = jnp.zeros((D, Cp), jnp.float32)
    wc = wc.at[:, :C].set(wo.astype(jnp.float32) @ fcw.astype(jnp.float32).T)
    bias = jnp.zeros((1, Cp), jnp.float32).at[0, :C].set(fcb.astype(jnp.float32))

    # Flatten batch/seq so each grid step feeds the MXU TB*S rows at once.
    x2d = x.reshape(B * S, D).astype(compute_dtype)
    wq = wq.astype(compute_dtype)
    wk = wk.astype(compute_dtype)
    wv = wv.astype(compute_dtype)

    kernel = functools.partial(transformer_classifier_kernel,
                               batch_tile=TB, seq=S, heads=heads)

    # Working-set estimate for the scoped-VMEM limit (generous floor so toy
    # shapes keep the default behaviour; re-derive the cap per chip at scale).
    itemsize = jnp.dtype(compute_dtype).itemsize
    rows = TB * S
    est = (2 * rows * D * itemsize                              # x tile (x2 buf)
           + 2 * (3 * D * D * itemsize + D * Cp * 4 + Cp * 4)   # weights
           + 3 * rows * D * 4                                   # q, k, v
           + 4 * TB * S * S * 4                                 # score temps
           + 2 * TB * Cp * 4)                                   # logits tile
    vmem_limit = int(min(max(est + (8 << 20), 32 << 20), 48 << 20))

    out = pl.pallas_call(
        kernel,
        out_shape=jax.ShapeDtypeStruct((B, Cp), jnp.float32),
        grid=(B // TB,),
        in_specs=[
            pl.BlockSpec((TB * S, D), lambda i: (i, 0)),   # batch tile of rows
            pl.BlockSpec((D, D), lambda i: (0, 0)),        # W_q (resident)
            pl.BlockSpec((D, D), lambda i: (0, 0)),        # W_k
            pl.BlockSpec((D, D), lambda i: (0, 0)),        # W_v
            pl.BlockSpec((D, Cp), lambda i: (0, 0)),       # W_o @ fcw.T (folded)
            pl.BlockSpec((1, Cp), lambda i: (0, 0)),       # classifier bias
        ],
        # Each grid step owns its own output rows -> batch-tile axis shards
        # across v7x's two TensorCores (neutral on v5e/v6e).
        out_specs=pl.BlockSpec((TB, Cp), lambda i: (i, 0)),
        compiler_params=pltpu.CompilerParams(
            dimension_semantics=("parallel",),
            vmem_limit_bytes=vmem_limit),
    )(x2d, wq, wk, wv, wc, bias)

    return out[:, :C]


def reference_forward(x, wq, wk, wv, wo, fcw, fcb, *, heads):
    """Pure-JAX reference mirroring the PyTorch module semantics."""
    B, S, D = x.shape
    hd = D // heads
    q = x @ wq
    k = x @ wk
    v = x @ wv
    qh = q.reshape(B, S, heads, hd).transpose(0, 2, 1, 3)
    kh = k.reshape(B, S, heads, hd).transpose(0, 2, 1, 3)
    vh = v.reshape(B, S, heads, hd).transpose(0, 2, 1, 3)
    s = jnp.einsum('bhqd,bhkd->bhqk', qh, kh) / (hd ** 0.5)
    p = jax.nn.softmax(s, axis=-1)
    ctx = jnp.einsum('bhqk,bhkd->bhqd', p, vh).transpose(0, 2, 1, 3).reshape(B, S, D)
    out = ctx @ wo
    pooled = out.mean(axis=1)
    return pooled @ fcw.T + fcb


if __name__ == "__main__":
    # Small shapes consistent with the module (d_model divisible by heads).
    B, S, D, H, C = 2, 8, 32, 8, 2

    key = jax.random.PRNGKey(0)
    kx, kq, kk, kv, ko, kw, kb = jax.random.split(key, 7)

    x = jax.random.normal(kx, (B, S, D), jnp.float32)
    # torch.randn-style init for the attention parameters.
    wq = jax.random.normal(kq, (D, D), jnp.float32)
    wk = jax.random.normal(kk, (D, D), jnp.float32)
    wv = jax.random.normal(kv, (D, D), jnp.float32)
    wo = jax.random.normal(ko, (D, D), jnp.float32)
    # nn.Linear-style uniform init for the classifier head.
    lim = 1.0 / (D ** 0.5)
    fcw = jax.random.uniform(kw, (C, D), jnp.float32, minval=-lim, maxval=lim)
    fcb = jax.random.uniform(kb, (C,), jnp.float32, minval=-lim, maxval=lim)

    out = transformer_classifier(x, wq, wk, wv, wo, fcw, fcb, heads=H)
    out = jax.block_until_ready(out)

    ref = reference_forward(x, wq, wk, wv, wo, fcw, fcb, heads=H)
    assert out.shape == (B, C)
    assert jnp.allclose(out, ref, rtol=1e-3, atol=1e-3), (out, ref)

    print("KERNEL_OK")
</pallas_src>

<mosaic_0001>
module attributes {stable_mosaic.version = 11 : i64} {
  func.func @transformer_classifier_kernel(%arg0: i32, %arg1: memref<16x32xf32, #tpu.memory_space<vmem>>, %arg2: memref<32x32xf32, #tpu.memory_space<vmem>>, %arg3: memref<32x32xf32, #tpu.memory_space<vmem>>, %arg4: memref<32x32xf32, #tpu.memory_space<vmem>>, %arg5: memref<32x128xf32, #tpu.memory_space<vmem>>, %arg6: memref<1x128xf32, #tpu.memory_space<vmem>>, %arg7: memref<2x128xf32, #tpu.memory_space<vmem>>) attributes {dimension_semantics = [#tpu.dimension_semantics<parallel>], iteration_bounds = array<i64: 1>, scalar_prefetch = 0 : i64, scratch_operands = 0 : i64, tpu.core_type = #tpu.core_type<tc>, window_params = [{transform_indices = @transform_0, window_bounds = array<i64: 16, 32>}, {pipeline_mode = #tpu.pipeline_mode<synchronous>, transform_indices = @transform_1, window_bounds = array<i64: 32, 32>}, {pipeline_mode = #tpu.pipeline_mode<synchronous>, transform_indices = @transform_2, window_bounds = array<i64: 32, 32>}, {pipeline_mode = #tpu.pipeline_mode<synchronous>, transform_indices = @transform_3, window_bounds = array<i64: 32, 32>}, {pipeline_mode = #tpu.pipeline_mode<synchronous>, transform_indices = @transform_4, window_bounds = array<i64: 32, 128>}, {pipeline_mode = #tpu.pipeline_mode<synchronous>, transform_indices = @transform_5, window_bounds = array<i64: 1, 128>}, {transform_indices = @transform_6, window_bounds = array<i64: 2, 128>}]} {
    %c0 = arith.constant 0 : index
    %c0_0 = arith.constant 0 : index
    %0 = vector.load %arg1[%c0, %c0_0] : memref<16x32xf32, #tpu.memory_space<vmem>>, vector<16x32xf32>
    %c0_1 = arith.constant 0 : index
    %c0_2 = arith.constant 0 : index
    %1 = vector.load %arg2[%c0_1, %c0_2] : memref<32x32xf32, #tpu.memory_space<vmem>>, vector<32x32xf32>
    %cst = arith.constant dense<0.000000e+00> : vector<16x32xf32>
    %2 = tpu.matmul %0, %1, %cst {dimension_numbers = #tpu.dot_dimension_numbers<[1], [0], [0], [1], [0, 0, 1, 1], [], []>} : vector<16x32xf32>, vector<32x32xf32>, vector<16x32xf32> -> vector<16x32xf32>
    %cst_3 = arith.constant 5.000000e-01 : f32
    %3 = vector.broadcast %cst_3 : f32 to vector<16x32xf32>
    %4 = arith.mulf %2, %3 : vector<16x32xf32>
    %c0_4 = arith.constant 0 : index
    %c0_5 = arith.constant 0 : index
    %5 = vector.load %arg3[%c0_4, %c0_5] : memref<32x32xf32, #tpu.memory_space<vmem>>, vector<32x32xf32>
    %cst_6 = arith.constant dense<0.000000e+00> : vector<16x32xf32>
    %6 = tpu.matmul %0, %5, %cst_6 {dimension_numbers = #tpu.dot_dimension_numbers<[1], [0], [0], [1], [0, 0, 1, 1], [], []>} : vector<16x32xf32>, vector<32x32xf32>, vector<16x32xf32> -> vector<16x32xf32>
    %c0_7 = arith.constant 0 : index
    %c0_8 = arith.constant 0 : index
    %7 = vector.load %arg4[%c0_7, %c0_8] : memref<32x32xf32, #tpu.memory_space<vmem>>, vector<32x32xf32>
    %cst_9 = arith.constant dense<0.000000e+00> : vector<16x32xf32>
    %8 = tpu.matmul %0, %7, %cst_9 {dimension_numbers = #tpu.dot_dimension_numbers<[1], [0], [0], [1], [0, 0, 1, 1], [], []>} : vector<16x32xf32>, vector<32x32xf32>, vector<16x32xf32> -> vector<16x32xf32>
    %9 = vector.shape_cast %4 : vector<16x32xf32> to vector<2x8x32xf32>
    %10 = vector.shape_cast %6 : vector<16x32xf32> to vector<2x8x32xf32>
    %11 = vector.shape_cast %8 : vector<16x32xf32> to vector<2x8x32xf32>
    %12 = vector.extract_strided_slice %9 {offsets = [0, 0, 0], sizes = [2, 8, 4], strides = [1, 1, 1]} : vector<2x8x32xf32> to vector<2x8x4xf32>
    %13 = vector.extract_strided_slice %10 {offsets = [0, 0, 0], sizes = [2, 8, 4], strides = [1, 1, 1]} : vector<2x8x32xf32> to vector<2x8x4xf32>
    "tpu.trace_start"() <{level = 10 : i32, message = "bqd,bkd->bqk"}> : () -> ()
    %cst_10 = arith.constant dense<0.000000e+00> : vector<2x8x8xf32>
    %14 = tpu.matmul %12, %13, %cst_10 {dimension_numbers = #tpu.dot_dimension_numbers<[2], [2], [1], [1], [0, 0, 0, 1, 1, 1], [0], [0]>} : vector<2x8x4xf32>, vector<2x8x4xf32>, vector<2x8x8xf32> -> vector<2x8x8xf32>
    "tpu.trace_stop"() : () -> ()
    %cst_11 = arith.constant dense<0xFF800000> : vector<2x8xf32>
    %15 = vector.multi_reduction <maximumf>, %14, %cst_11 [2] : vector<2x8x8xf32> to vector<2x8xf32>
    %16 = vector.shape_cast %15 : vector<2x8xf32> to vector<2x8x1xf32>
    %17 = vector.broadcast %16 : vector<2x8x1xf32> to vector<2x8x8xf32>
    %18 = arith.subf %14, %17 : vector<2x8x8xf32>
    %19 = math.exp %18 : vector<2x8x8xf32>
    %cst_12 = arith.constant dense<0.000000e+00> : vector<2x8xf32>
    %20 = vector.multi_reduction <add>, %19, %cst_12 [2] : vector<2x8x8xf32> to vector<2x8xf32>
    %21 = vector.shape_cast %20 : vector<2x8xf32> to vector<2x8x1xf32>
    %22 = vector.broadcast %21 : vector<2x8x1xf32> to vector<2x8x8xf32>
    %23 = arith.divf %19, %22 : vector<2x8x8xf32>
    %cst_13 = arith.constant dense<0.000000e+00> : vector<2x8xf32>
    %24 = vector.multi_reduction <add>, %23, %cst_13 [1] : vector<2x8x8xf32> to vector<2x8xf32>
    %25 = vector.shape_cast %24 : vector<2x8xf32> to vector<2x1x8xf32>
    %cst_14 = arith.constant 8.000000e+00 : f32
    %26 = vector.broadcast %cst_14 : f32 to vector<2x1x8xf32>
    %27 = arith.divf %25, %26 : vector<2x1x8xf32>
    %28 = vector.extract_strided_slice %11 {offsets = [0, 0, 0], sizes = [2, 8, 4], strides = [1, 1, 1]} : vector<2x8x32xf32> to vector<2x8x4xf32>
    "tpu.trace_start"() <{level = 10 : i32, message = "bqk,bkd->bqd"}> : () -> ()
    %cst_15 = arith.constant dense<0.000000e+00> : vector<2x1x4xf32>
    %29 = tpu.matmul %27, %28, %cst_15 {dimension_numbers = #tpu.dot_dimension_numbers<[2], [1], [1], [2], [0, 0, 0, 1, 1, 2], [0], [0]>} : vector<2x1x8xf32>, vector<2x8x4xf32>, vector<2x1x4xf32> -> vector<2x1x4xf32>
    "tpu.trace_stop"() : () -> ()
    %30 = vector.shape_cast %29 : vector<2x1x4xf32> to vector<2x4xf32>
    %31 = vector.extract_strided_slice %9 {offsets = [0, 0, 4], sizes = [2, 8, 4], strides = [1, 1, 1]} : vector<2x8x32xf32> to vector<2x8x4xf32>
    %32 = vector.extract_strided_slice %10 {offsets = [0, 0, 4], sizes = [2, 8, 4], strides = [1, 1, 1]} : vector<2x8x32xf32> to vector<2x8x4xf32>
    "tpu.trace_start"() <{level = 10 : i32, message = "bqd,bkd->bqk"}> : () -> ()
    %cst_16 = arith.constant dense<0.000000e+00> : vector<2x8x8xf32>
    %33 = tpu.matmul %31, %32, %cst_16 {dimension_numbers = #tpu.dot_dimension_numbers<[2], [2], [1], [1], [0, 0, 0, 1, 1, 1], [0], [0]>} : vector<2x8x4xf32>, vector<2x8x4xf32>, vector<2x8x8xf32> -> vector<2x8x8xf32>
    "tpu.trace_stop"() : () -> ()
    %cst_17 = arith.constant dense<0xFF800000> : vector<2x8xf32>
    %34 = vector.multi_reduction <maximumf>, %33, %cst_17 [2] : vector<2x8x8xf32> to vector<2x8xf32>
    %35 = vector.shape_cast %34 : vector<2x8xf32> to vector<2x8x1xf32>
    %36 = vector.broadcast %35 : vector<2x8x1xf32> to vector<2x8x8xf32>
    %37 = arith.subf %33, %36 : vector<2x8x8xf32>
    %38 = math.exp %37 : vector<2x8x8xf32>
    %cst_18 = arith.constant dense<0.000000e+00> : vector<2x8xf32>
    %39 = vector.multi_reduction <add>, %38, %cst_18 [2] : vector<2x8x8xf32> to vector<2x8xf32>
    %40 = vector.shape_cast %39 : vector<2x8xf32> to vector<2x8x1xf32>
    %41 = vector.broadcast %40 : vector<2x8x1xf32> to vector<2x8x8xf32>
    %42 = arith.divf %38, %41 : vector<2x8x8xf32>
    %cst_19 = arith.constant dense<0.000000e+00> : vector<2x8xf32>
    %43 = vector.multi_reduction <add>, %42, %cst_19 [1] : vector<2x8x8xf32> to vector<2x8xf32>
    %44 = vector.shape_cast %43 : vector<2x8xf32> to vector<2x1x8xf32>
    %cst_20 = arith.constant 8.000000e+00 : f32
    %45 = vector.broadcast %cst_20 : f32 to vector<2x1x8xf32>
    %46 = arith.divf %44, %45 : vector<2x1x8xf32>
    %47 = vector.extract_strided_slice %11 {offsets = [0, 0, 4], sizes = [2, 8, 4], strides = [1, 1, 1]} : vector<2x8x32xf32> to vector<2x8x4xf32>
    "tpu.trace_start"() <{level = 10 : i32, message = "bqk,bkd->bqd"}> : () -> ()
    %cst_21 = arith.constant dense<0.000000e+00> : vector<2x1x4xf32>
    %48 = tpu.matmul %46, %47, %cst_21 {dimension_numbers = #tpu.dot_dimension_numbers<[2], [1], [1], [2], [0, 0, 0, 1, 1, 2], [0], [0]>} : vector<2x1x8xf32>, vector<2x8x4xf32>, vector<2x1x4xf32> -> vector<2x1x4xf32>
    "tpu.trace_stop"() : () -> ()
    %49 = vector.shape_cast %48 : vector<2x1x4xf32> to vector<2x4xf32>
    %50 = vector.extract_strided_slice %9 {offsets = [0, 0, 8], sizes = [2, 8, 4], strides = [1, 1, 1]} : vector<2x8x32xf32> to vector<2x8x4xf32>
    %51 = vector.extract_strided_slice %10 {offsets = [0, 0, 8], sizes = [2, 8, 4], strides = [1, 1, 1]} : vector<2x8x32xf32> to vector<2x8x4xf32>
    "tpu.trace_start"() <{level = 10 : i32, message = "bqd,bkd->bqk"}> : () -> ()
    %cst_22 = arith.constant dense<0.000000e+00> : vector<2x8x8xf32>
    %52 = tpu.matmul %50, %51, %cst_22 {dimension_numbers = #tpu.dot_dimension_numbers<[2], [2], [1], [1], [0, 0, 0, 1, 1, 1], [0], [0]>} : vector<2x8x4xf32>, vector<2x8x4xf32>, vector<2x8x8xf32> -> vector<2x8x8xf32>
    "tpu.trace_stop"() : () -> ()
    %cst_23 = arith.constant dense<0xFF800000> : vector<2x8xf32>
    %53 = vector.multi_reduction <maximumf>, %52, %cst_23 [2] : vector<2x8x8xf32> to vector<2x8xf32>
    %54 = vector.shape_cast %53 : vector<2x8xf32> to vector<2x8x1xf32>
    %55 = vector.broadcast %54 : vector<2x8x1xf32> to vector<2x8x8xf32>
    %56 = arith.subf %52, %55 : vector<2x8x8xf32>
    %57 = math.exp %56 : vector<2x8x8xf32>
    %cst_24 = arith.constant dense<0.000000e+00> : vector<2x8xf32>
    %58 = vector.multi_reduction <add>, %57, %cst_24 [2] : vector<2x8x8xf32> to vector<2x8xf32>
    %59 = vector.shape_cast %58 : vector<2x8xf32> to vector<2x8x1xf32>
    %60 = vector.broadcast %59 : vector<2x8x1xf32> to vector<2x8x8xf32>
    %61 = arith.divf %57, %60 : vector<2x8x8xf32>
    %cst_25 = arith.constant dense<0.000000e+00> : vector<2x8xf32>
    %62 = vector.multi_reduction <add>, %61, %cst_25 [1] : vector<2x8x8xf32> to vector<2x8xf32>
    %63 = vector.shape_cast %62 : vector<2x8xf32> to vector<2x1x8xf32>
    %cst_26 = arith.constant 8.000000e+00 : f32
    %64 = vector.broadcast %cst_26 : f32 to vector<2x1x8xf32>
    %65 = arith.divf %63, %64 : vector<2x1x8xf32>
    %66 = vector.extract_strided_slice %11 {offsets = [0, 0, 8], sizes = [2, 8, 4], strides = [1, 1, 1]} : vector<2x8x32xf32> to vector<2x8x4xf32>
    "tpu.trace_start"() <{level = 10 : i32, message = "bqk,bkd->bqd"}> : () -> ()
    %cst_27 = arith.constant dense<0.000000e+00> : vector<2x1x4xf32>
    %67 = tpu.matmul %65, %66, %cst_27 {dimension_numbers = #tpu.dot_dimension_numbers<[2], [1], [1], [2], [0, 0, 0, 1, 1, 2], [0], [0]>} : vector<2x1x8xf32>, vector<2x8x4xf32>, vector<2x1x4xf32> -> vector<2x1x4xf32>
    "tpu.trace_stop"() : () -> ()
    %68 = vector.shape_cast %67 : vector<2x1x4xf32> to vector<2x4xf32>
    %69 = vector.extract_strided_slice %9 {offsets = [0, 0, 12], sizes = [2, 8, 4], strides = [1, 1, 1]} : vector<2x8x32xf32> to vector<2x8x4xf32>
    %70 = vector.extract_strided_slice %10 {offsets = [0, 0, 12], sizes = [2, 8, 4], strides = [1, 1, 1]} : vector<2x8x32xf32> to vector<2x8x4xf32>
    "tpu.trace_start"() <{level = 10 : i32, message = "bqd,bkd->bqk"}> : () -> ()
    %cst_28 = arith.constant dense<0.000000e+00> : vector<2x8x8xf32>
    %71 = tpu.matmul %69, %70, %cst_28 {dimension_numbers = #tpu.dot_dimension_numbers<[2], [2], [1], [1], [0, 0, 0, 1, 1, 1], [0], [0]>} : vector<2x8x4xf32>, vector<2x8x4xf32>, vector<2x8x8xf32> -> vector<2x8x8xf32>
    "tpu.trace_stop"() : () -> ()
    %cst_29 = arith.constant dense<0xFF800000> : vector<2x8xf32>
    %72 = vector.multi_reduction <maximumf>, %71, %cst_29 [2] : vector<2x8x8xf32> to vector<2x8xf32>
    %73 = vector.shape_cast %72 : vector<2x8xf32> to vector<2x8x1xf32>
    %74 = vector.broadcast %73 : vector<2x8x1xf32> to vector<2x8x8xf32>
    %75 = arith.subf %71, %74 : vector<2x8x8xf32>
    %76 = math.exp %75 : vector<2x8x8xf32>
    %cst_30 = arith.constant dense<0.000000e+00> : vector<2x8xf32>
    %77 = vector.multi_reduction <add>, %76, %cst_30 [2] : vector<2x8x8xf32> to vector<2x8xf32>
    %78 = vector.shape_cast %77 : vector<2x8xf32> to vector<2x8x1xf32>
    %79 = vector.broadcast %78 : vector<2x8x1xf32> to vector<2x8x8xf32>
    %80 = arith.divf %76, %79 : vector<2x8x8xf32>
    %cst_31 = arith.constant dense<0.000000e+00> : vector<2x8xf32>
    %81 = vector.multi_reduction <add>, %80, %cst_31 [1] : vector<2x8x8xf32> to vector<2x8xf32>
    %82 = vector.shape_cast %81 : vector<2x8xf32> to vector<2x1x8xf32>
    %cst_32 = arith.constant 8.000000e+00 : f32
    %83 = vector.broadcast %cst_32 : f32 to vector<2x1x8xf32>
    %84 = arith.divf %82, %83 : vector<2x1x8xf32>
    %85 = vector.extract_strided_slice %11 {offsets = [0, 0, 12], sizes = [2, 8, 4], strides = [1, 1, 1]} : vector<2x8x32xf32> to vector<2x8x4xf32>
    "tpu.trace_start"() <{level = 10 : i32, message = "bqk,bkd->bqd"}> : () -> ()
    %cst_33 = arith.constant dense<0.000000e+00> : vector<2x1x4xf32>
    %86 = tpu.matmul %84, %85, %cst_33 {dimension_numbers = #tpu.dot_dimension_numbers<[2], [1], [1], [2], [0, 0, 0, 1, 1, 2], [0], [0]>} : vector<2x1x8xf32>, vector<2x8x4xf32>, vector<2x1x4xf32> -> vector<2x1x4xf32>
    "tpu.trace_stop"() : () -> ()
    %87 = vector.shape_cast %86 : vector<2x1x4xf32> to vector<2x4xf32>
    %88 = vector.extract_strided_slice %9 {offsets = [0, 0, 16], sizes = [2, 8, 4], strides = [1, 1, 1]} : vector<2x8x32xf32> to vector<2x8x4xf32>
    %89 = vector.extract_strided_slice %10 {offsets = [0, 0, 16], sizes = [2, 8, 4], strides = [1, 1, 1]} : vector<2x8x32xf32> to vector<2x8x4xf32>
    "tpu.trace_start"() <{level = 10 : i32, message = "bqd,bkd->bqk"}> : () -> ()
    %cst_34 = arith.constant dense<0.000000e+00> : vector<2x8x8xf32>
    %90 = tpu.matmul %88, %89, %cst_34 {dimension_numbers = #tpu.dot_dimension_numbers<[2], [2], [1], [1], [0, 0, 0, 1, 1, 1], [0], [0]>} : vector<2x8x4xf32>, vector<2x8x4xf32>, vector<2x8x8xf32> -> vector<2x8x8xf32>
    "tpu.trace_stop"() : () -> ()
    %cst_35 = arith.constant dense<0xFF800000> : vector<2x8xf32>
    %91 = vector.multi_reduction <maximumf>, %90, %cst_35 [2] : vector<2x8x8xf32> to vector<2x8xf32>
    %92 = vector.shape_cast %91 : vector<2x8xf32> to vector<2x8x1xf32>
    %93 = vector.broadcast %92 : vector<2x8x1xf32> to vector<2x8x8xf32>
    %94 = arith.subf %90, %93 : vector<2x8x8xf32>
    %95 = math.exp %94 : vector<2x8x8xf32>
    %cst_36 = arith.constant dense<0.000000e+00> : vector<2x8xf32>
    %96 = vector.multi_reduction <add>, %95, %cst_36 [2] : vector<2x8x8xf32> to vector<2x8xf32>
    %97 = vector.shape_cast %96 : vector<2x8xf32> to vector<2x8x1xf32>
    %98 = vector.broadcast %97 : vector<2x8x1xf32> to vector<2x8x8xf32>
    %99 = arith.divf %95, %98 : vector<2x8x8xf32>
    %cst_37 = arith.constant dense<0.000000e+00> : vector<2x8xf32>
    %100 = vector.multi_reduction <add>, %99, %cst_37 [1] : vector<2x8x8xf32> to vector<2x8xf32>
    %101 = vector.shape_cast %100 : vector<2x8xf32> to vector<2x1x8xf32>
    %cst_38 = arith.constant 8.000000e+00 : f32
    %102 = vector.broadcast %cst_38 : f32 to vector<2x1x8xf32>
    %103 = arith.divf %101, %102 : vector<2x1x8xf32>
    %104 = vector.extract_strided_slice %11 {offsets = [0, 0, 16], sizes = [2, 8, 4], strides = [1, 1, 1]} : vector<2x8x32xf32> to vector<2x8x4xf32>
    "tpu.trace_start"() <{level = 10 : i32, message = "bqk,bkd->bqd"}> : () -> ()
    %cst_39 = arith.constant dense<0.000000e+00> : vector<2x1x4xf32>
    %105 = tpu.matmul %103, %104, %cst_39 {dimension_numbers = #tpu.dot_dimension_numbers<[2], [1], [1], [2], [0, 0, 0, 1, 1, 2], [0], [0]>} : vector<2x1x8xf32>, vector<2x8x4xf32>, vector<2x1x4xf32> -> vector<2x1x4xf32>
    "tpu.trace_stop"() : () -> ()
    %106 = vector.shape_cast %105 : vector<2x1x4xf32> to vector<2x4xf32>
    %107 = vector.extract_strided_slice %9 {offsets = [0, 0, 20], sizes = [2, 8, 4], strides = [1, 1, 1]} : vector<2x8x32xf32> to vector<2x8x4xf32>
    %108 = vector.extract_strided_slice %10 {offsets = [0, 0, 20], sizes = [2, 8, 4], strides = [1, 1, 1]} : vector<2x8x32xf32> to vector<2x8x4xf32>
    "tpu.trace_start"() <{level = 10 : i32, message = "bqd,bkd->bqk"}> : () -> ()
    %cst_40 = arith.constant dense<0.000000e+00> : vector<2x8x8xf32>
    %109 = tpu.matmul %107, %108, %cst_40 {dimension_numbers = #tpu.dot_dimension_numbers<[2], [2], [1], [1], [0, 0, 0, 1, 1, 1], [0], [0]>} : vector<2x8x4xf32>, vector<2x8x4xf32>, vector<2x8x8xf32> -> vector<2x8x8xf32>
    "tpu.trace_stop"() : () -> ()
    %cst_41 = arith.constant dense<0xFF800000> : vector<2x8xf32>
    %110 = vector.multi_reduction <maximumf>, %109, %cst_41 [2] : vector<2x8x8xf32> to vector<2x8xf32>
    %111 = vector.shape_cast %110 : vector<2x8xf32> to vector<2x8x1xf32>
    %112 = vector.broadcast %111 : vector<2x8x1xf32> to vector<2x8x8xf32>
    %113 = arith.subf %109, %112 : vector<2x8x8xf32>
    %114 = math.exp %113 : vector<2x8x8xf32>
    %cst_42 = arith.constant dense<0.000000e+00> : vector<2x8xf32>
    %115 = vector.multi_reduction <add>, %114, %cst_42 [2] : vector<2x8x8xf32> to vector<2x8xf32>
    %116 = vector.shape_cast %115 : vector<2x8xf32> to vector<2x8x1xf32>
    %117 = vector.broadcast %116 : vector<2x8x1xf32> to vector<2x8x8xf32>
    %118 = arith.divf %114, %117 : vector<2x8x8xf32>
    %cst_43 = arith.constant dense<0.000000e+00> : vector<2x8xf32>
    %119 = vector.multi_reduction <add>, %118, %cst_43 [1] : vector<2x8x8xf32> to vector<2x8xf32>
    %120 = vector.shape_cast %119 : vector<2x8xf32> to vector<2x1x8xf32>
    %cst_44 = arith.constant 8.000000e+00 : f32
    %121 = vector.broadcast %cst_44 : f32 to vector<2x1x8xf32>
    %122 = arith.divf %120, %121 : vector<2x1x8xf32>
    %123 = vector.extract_strided_slice %11 {offsets = [0, 0, 20], sizes = [2, 8, 4], strides = [1, 1, 1]} : vector<2x8x32xf32> to vector<2x8x4xf32>
    "tpu.trace_start"() <{level = 10 : i32, message = "bqk,bkd->bqd"}> : () -> ()
    %cst_45 = arith.constant dense<0.000000e+00> : vector<2x1x4xf32>
    %124 = tpu.matmul %122, %123, %cst_45 {dimension_numbers = #tpu.dot_dimension_numbers<[2], [1], [1], [2], [0, 0, 0, 1, 1, 2], [0], [0]>} : vector<2x1x8xf32>, vector<2x8x4xf32>, vector<2x1x4xf32> -> vector<2x1x4xf32>
    "tpu.trace_stop"() : () -> ()
    %125 = vector.shape_cast %124 : vector<2x1x4xf32> to vector<2x4xf32>
    %126 = vector.extract_strided_slice %9 {offsets = [0, 0, 24], sizes = [2, 8, 4], strides = [1, 1, 1]} : vector<2x8x32xf32> to vector<2x8x4xf32>
    %127 = vector.extract_strided_slice %10 {offsets = [0, 0, 24], sizes = [2, 8, 4], strides = [1, 1, 1]} : vector<2x8x32xf32> to vector<2x8x4xf32>
    "tpu.trace_start"() <{level = 10 : i32, message = "bqd,bkd->bqk"}> : () -> ()
    %cst_46 = arith.constant dense<0.000000e+00> : vector<2x8x8xf32>
    %128 = tpu.matmul %126, %127, %cst_46 {dimension_numbers = #tpu.dot_dimension_numbers<[2], [2], [1], [1], [0, 0, 0, 1, 1, 1], [0], [0]>} : vector<2x8x4xf32>, vector<2x8x4xf32>, vector<2x8x8xf32> -> vector<2x8x8xf32>
    "tpu.trace_stop"() : () -> ()
    %cst_47 = arith.constant dense<0xFF800000> : vector<2x8xf32>
    %129 = vector.multi_reduction <maximumf>, %128, %cst_47 [2] : vector<2x8x8xf32> to vector<2x8xf32>
    %130 = vector.shape_cast %129 : vector<2x8xf32> to vector<2x8x1xf32>
    %131 = vector.broadcast %130 : vector<2x8x1xf32> to vector<2x8x8xf32>
    %132 = arith.subf %128, %131 : vector<2x8x8xf32>
    %133 = math.exp %132 : vector<2x8x8xf32>
    %cst_48 = arith.constant dense<0.000000e+00> : vector<2x8xf32>
    %134 = vector.multi_reduction <add>, %133, %cst_48 [2] : vector<2x8x8xf32> to vector<2x8xf32>
    %135 = vector.shape_cast %134 : vector<2x8xf32> to vector<2x8x1xf32>
    %136 = vector.broadcast %135 : vector<2x8x1xf32> to vector<2x8x8xf32>
    %137 = arith.divf %133, %136 : vector<2x8x8xf32>
    %cst_49 = arith.constant dense<0.000000e+00> : vector<2x8xf32>
    %138 = vector.multi_reduction <add>, %137, %cst_49 [1] : vector<2x8x8xf32> to vector<2x8xf32>
    %139 = vector.shape_cast %138 : vector<2x8xf32> to vector<2x1x8xf32>
    %cst_50 = arith.constant 8.000000e+00 : f32
    %140 = vector.broadcast %cst_50 : f32 to vector<2x1x8xf32>
    %141 = arith.divf %139, %140 : vector<2x1x8xf32>
    %142 = vector.extract_strided_slice %11 {offsets = [0, 0, 24], sizes = [2, 8, 4], strides = [1, 1, 1]} : vector<2x8x32xf32> to vector<2x8x4xf32>
    "tpu.trace_start"() <{level = 10 : i32, message = "bqk,bkd->bqd"}> : () -> ()
    %cst_51 = arith.constant dense<0.000000e+00> : vector<2x1x4xf32>
    %143 = tpu.matmul %141, %142, %cst_51 {dimension_numbers = #tpu.dot_dimension_numbers<[2], [1], [1], [2], [0, 0, 0, 1, 1, 2], [0], [0]>} : vector<2x1x8xf32>, vector<2x8x4xf32>, vector<2x1x4xf32> -> vector<2x1x4xf32>
    "tpu.trace_stop"() : () -> ()
    %144 = vector.shape_cast %143 : vector<2x1x4xf32> to vector<2x4xf32>
    %145 = vector.extract_strided_slice %9 {offsets = [0, 0, 28], sizes = [2, 8, 4], strides = [1, 1, 1]} : vector<2x8x32xf32> to vector<2x8x4xf32>
    %146 = vector.extract_strided_slice %10 {offsets = [0, 0, 28], sizes = [2, 8, 4], strides = [1, 1, 1]} : vector<2x8x32xf32> to vector<2x8x4xf32>
    "tpu.trace_start"() <{level = 10 : i32, message = "bqd,bkd->bqk"}> : () -> ()
    %cst_52 = arith.constant dense<0.000000e+00> : vector<2x8x8xf32>
    %147 = tpu.matmul %145, %146, %cst_52 {dimension_numbers = #tpu.dot_dimension_numbers<[2], [2], [1], [1], [0, 0, 0, 1, 1, 1], [0], [0]>} : vector<2x8x4xf32>, vector<2x8x4xf32>, vector<2x8x8xf32> -> vector<2x8x8xf32>
    "tpu.trace_stop"() : () -> ()
    %cst_53 = arith.constant dense<0xFF800000> : vector<2x8xf32>
    %148 = vector.multi_reduction <maximumf>, %147, %cst_53 [2] : vector<2x8x8xf32> to vector<2x8xf32>
    %149 = vector.shape_cast %148 : vector<2x8xf32> to vector<2x8x1xf32>
    %150 = vector.broadcast %149 : vector<2x8x1xf32> to vector<2x8x8xf32>
    %151 = arith.subf %147, %150 : vector<2x8x8xf32>
    %152 = math.exp %151 : vector<2x8x8xf32>
    %cst_54 = arith.constant dense<0.000000e+00> : vector<2x8xf32>
    %153 = vector.multi_reduction <add>, %152, %cst_54 [2] : vector<2x8x8xf32> to vector<2x8xf32>
    %154 = vector.shape_cast %153 : vector<2x8xf32> to vector<2x8x1xf32>
    %155 = vector.broadcast %154 : vector<2x8x1xf32> to vector<2x8x8xf32>
    %156 = arith.divf %152, %155 : vector<2x8x8xf32>
    %cst_55 = arith.constant dense<0.000000e+00> : vector<2x8xf32>
    %157 = vector.multi_reduction <add>, %156, %cst_55 [1] : vector<2x8x8xf32> to vector<2x8xf32>
    %158 = vector.shape_cast %157 : vector<2x8xf32> to vector<2x1x8xf32>
    %cst_56 = arith.constant 8.000000e+00 : f32
    %159 = vector.broadcast %cst_56 : f32 to vector<2x1x8xf32>
    %160 = arith.divf %158, %159 : vector<2x1x8xf32>
    %161 = vector.extract_strided_slice %11 {offsets = [0, 0, 28], sizes = [2, 8, 4], strides = [1, 1, 1]} : vector<2x8x32xf32> to vector<2x8x4xf32>
    "tpu.trace_start"() <{level = 10 : i32, message = "bqk,bkd->bqd"}> : () -> ()
    %cst_57 = arith.constant dense<0.000000e+00> : vector<2x1x4xf32>
    %162 = tpu.matmul %160, %161, %cst_57 {dimension_numbers = #tpu.dot_dimension_numbers<[2], [1], [1], [2], [0, 0, 0, 1, 1, 2], [0], [0]>} : vector<2x1x8xf32>, vector<2x8x4xf32>, vector<2x1x4xf32> -> vector<2x1x4xf32>
    "tpu.trace_stop"() : () -> ()
    %163 = vector.shape_cast %162 : vector<2x1x4xf32> to vector<2x4xf32>
    %164 = tpu.concatenate %30, %49, %68, %87, %106, %125, %144, %163 in 1 : vector<2x4xf32>, vector<2x4xf32>, vector<2x4xf32>, vector<2x4xf32>, vector<2x4xf32>, vector<2x4xf32>, vector<2x4xf32>, vector<2x4xf32> -> vector<2x32xf32>
    %c0_58 = arith.constant 0 : index
    %c0_59 = arith.constant 0 : index
    %165 = vector.load %arg5[%c0_58, %c0_59] : memref<32x128xf32, #tpu.memory_space<vmem>>, vector<32x128xf32>
    %cst_60 = arith.constant dense<0.000000e+00> : vector<2x128xf32>
    %166 = tpu.matmul %164, %165, %cst_60 {dimension_numbers = #tpu.dot_dimension_numbers<[1], [0], [0], [1], [0, 0, 1, 1], [], []>} : vector<2x32xf32>, vector<32x128xf32>, vector<2x128xf32> -> vector<2x128xf32>
    %c0_61 = arith.constant 0 : index
    %c0_62 = arith.constant 0 : index
    %167 = vector.load %arg6[%c0_61, %c0_62] : memref<1x128xf32, #tpu.memory_space<vmem>>, vector<1x128xf32>
    %168 = vector.broadcast %167 : vector<1x128xf32> to vector<2x128xf32>
    %169 = arith.addf %166, %168 : vector<2x128xf32>
    %c0_63 = arith.constant 0 : index
    %c0_64 = arith.constant 0 : index
    %170 = vector.load %arg7[%c0_63, %c0_64] : memref<2x128xf32, #tpu.memory_space<vmem>>, vector<2x128xf32>
    tpu.vector_store %arg7[%c0_63, %c0_64], %169 {strides = array<i32>} : memref<2x128xf32, #tpu.memory_space<vmem>>, vector<2x128xf32>,
    return
  }
  func.func @transform_0(%arg0: i32) -> (i32, i32) {
    %c0_i32 = arith.constant 0 : i32
    %c0_i32_0 = arith.constant 0 : i32
    return %arg0, %c0_i32 : i32, i32
  }
  func.func @transform_1(%arg0: i32) -> (i32, i32) {
    %c0_i32 = arith.constant 0 : i32
    %c0_i32_0 = arith.constant 0 : i32
    %c0_i32_1 = arith.constant 0 : i32
    return %c0_i32, %c0_i32_0 : i32, i32
  }
  func.func @transform_2(%arg0: i32) -> (i32, i32) {
    %c0_i32 = arith.constant 0 : i32
    %c0_i32_0 = arith.constant 0 : i32
    %c0_i32_1 = arith.constant 0 : i32
    return %c0_i32, %c0_i32_0 : i32, i32
  }
  func.func @transform_3(%arg0: i32) -> (i32, i32) {
    %c0_i32 = arith.constant 0 : i32
    %c0_i32_0 = arith.constant 0 : i32
    %c0_i32_1 = arith.constant 0 : i32
    return %c0_i32, %c0_i32_0 : i32, i32
  }
  func.func @transform_4(%arg0: i32) -> (i32, i32) {
    %c0_i32 = arith.constant 0 : i32
    %c0_i32_0 = arith.constant 0 : i32
    %c0_i32_1 = arith.constant 0 : i32
    return %c0_i32, %c0_i32_0 : i32, i32
  }
  func.func @transform_5(%arg0: i32) -> (i32, i32) {
    %c0_i32 = arith.constant 0 : i32
    %c0_i32_0 = arith.constant 0 : i32
    %c0_i32_1 = arith.constant 0 : i32
    return %c0_i32, %c0_i32_0 : i32, i32
  }
  func.func @transform_6(%arg0: i32) -> (i32, i32) {
    %c0_i32 = arith.constant 0 : i32
    %c0_i32_0 = arith.constant 0 : i32
    return %arg0, %c0_i32 : i32, i32
  }
}

</mosaic_0001>

<llo_original>
// kernel: tpu_custom_call.1
$region0: #{tpu_custom_call.1}
  #allocation0 [shape = 'u32[]', space=smem, size = 0x4, offset = 0x4, fixed_abs, tag = 'smem constant byte address 0x4 - core index']
  #allocation1 [shape = 'u32[144,128]{1,0:T(1,128)}', space=vmem, size = 0x12000, scoped, tag = 'internal scratch']
  %s0 = inlined_call_operand.hbm [shape: f32[16,32], index: 0, kind: input, shape index: {}]
  %s1 = inlined_call_operand.hbm [shape: f32[32,32], index: 1, kind: input, shape index: {}]
  %s2 = inlined_call_operand.hbm [shape: f32[32,32], index: 2, kind: input, shape index: {}]
  %s3 = inlined_call_operand.hbm [shape: f32[32,32], index: 3, kind: input, shape index: {}]
  %s4 = inlined_call_operand.hbm [shape: f32[32,128], index: 4, kind: input, shape index: {}]
  %s5 = inlined_call_operand.vmem [shape: f32[1,128], index: 5, kind: input, shape index: {}]
  %s6 = inlined_call_operand.hbm [shape: f32[2,128], index: 6, kind: output, shape index: {}]
  %s7 = sld [smem:[#allocation0]]
  $region54: #{tpu_custom_call.1} parent=0
    _
  %s9 = ssub.s32 1, %s7
  %s10 = scalar_select 0, %s9, %s7
  $region1: #{tpu_custom_call.1} parent=0
    #allocation2 [shape = 'u8[8192]{0}', space=vmem, size = 0x2000, scoped, tag = 'input window, operand 0, single buffered']
    #allocation3 [shape = 's32[1]{0}', space=sflag, size = 0x4, scoped, tag = 'scoped memory for tpu_custom_call.1']
    #allocation4 [shape = 's32[1]{0}', space=sflag, size = 0x4, scoped, tag = 'scoped memory for tpu_custom_call.1']
    #allocation5 [shape = 'u8[16384]{0}', space=vmem, size = 0x4000, scoped, tag = 'input window, operand 1, single buffered']
    #allocation6 [shape = 's32[1]{0}', space=sflag, size = 0x4, scoped, tag = 'scoped memory for tpu_custom_call.1']
    #allocation7 [shape = 'u8[16384]{0}', space=vmem, size = 0x4000, scoped, tag = 'input window, operand 2, single buffered']
    #allocation8 [shape = 'u8[16384]{0}', space=vmem, size = 0x4000, scoped, tag = 'input window, operand 3, single buffered']
    #allocation9 [shape = 's32[1]{0}', space=sflag, size = 0x4, scoped, tag = 'scoped memory for tpu_custom_call.1']
    #allocation10 [shape = 'u8[16384]{0}', space=vmem, size = 0x4000, scoped, tag = 'input window, operand 4, single buffered']
    #allocation11 [shape = 'u8[1024]{0}', space=vmem, size = 0x400, scoped, tag = 'output window, operand 0, single buffered']
    %11 = vsyncpa [#allocation3], 0
    %12 = vsyncpa [#allocation6], 0
    %13 = vsyncpa [#allocation9], 0
    %14 = vsyncpa [#allocation4], 0
    // Predicated region
    $region2: #{tpu_custom_call.1} parent=1 // pred_check
      _
    $region3: #{tpu_custom_call.1} parent=1 // pred_check_branch
      %16 = sbr.rel (0) target = $region5
    $region4: #{tpu_custom_call.1} parent=1 // pred_region
      %s18 = ssub.s32 256, 256
      %19 = vsyncadd [#allocation3], %s18
      %s20 = sshll.u32 [#allocation2], 4
      %s21 = int_to_ptr.vmem [resolvable:$true] %s20
      %26 = dma.hbm_to_vmem [thread:$0]  %s0, 256, %s21, [#allocation3], 128, 128, 8
    $region5: #{tpu_custom_call.1} parent=1 // pred_fallthru
      _
    // Predicated region
    $region6: #{tpu_custom_call.1} parent=1 // pred_check
      _
    $region7: #{tpu_custom_call.1} parent=1 // pred_check_branch
      %28 = sbr.rel (0) target = $region9
    $region8: #{tpu_custom_call.1} parent=1 // pred_region
      %s30 = ssub.s32 512, 512
      %31 = vsyncadd [#allocation6], %s30
      %s32 = sshll.u32 [#allocation5], 4
      %s33 = int_to_ptr.vmem [resolvable:$true] %s32
      %38 = dma.hbm_to_vmem [thread:$0]  %s1, 512, %s33, [#allocation6], 128, 128, 8
    $region9: #{tpu_custom_call.1} parent=1 // pred_fallthru
      _
    // Predicated region
    $region10: #{tpu_custom_call.1} parent=1 // pred_check
      _
    $region11: #{tpu_custom_call.1} parent=1 // pred_check_branch
      %40 = sbr.rel (0) target = $region13
    $region12: #{tpu_custom_call.1} parent=1 // pred_region
      %s42 = ssub.s32 512, 512
      %43 = vsyncadd [#allocation6], %s42
      %s44 = sshll.u32 [#allocation7], 4
      %s45 = int_to_ptr.vmem [resolvable:$true] %s44
      %50 = dma.hbm_to_vmem [thread:$0]  %s2, 512, %s45, [#allocation6], 128, 128, 8
    $region13: #{tpu_custom_call.1} parent=1 // pred_fallthru
      _
    // Predicated region
    $region14: #{tpu_custom_call.1} parent=1 // pred_check
      _
    $region15: #{tpu_custom_call.1} parent=1 // pred_check_branch
      %52 = sbr.rel (0) target = $region17
    $region16: #{tpu_custom_call.1} parent=1 // pred_region
      %s54 = ssub.s32 512, 512
      %55 = vsyncadd [#allocation9], %s54
      %s56 = sshll.u32 [#allocation8], 4
      %s57 = int_to_ptr.vmem [resolvable:$true] %s56
      %62 = dma.hbm_to_vmem [thread:$0]  %s3, 512, %s57, [#allocation9], 128, 128, 8
    $region17: #{tpu_custom_call.1} parent=1 // pred_fallthru
      _
    // Predicated region
    $region18: #{tpu_custom_call.1} parent=1 // pred_check
      _
    $region19: #{tpu_custom_call.1} parent=1 // pred_check_branch
      %64 = sbr.rel (0) target = $region21
    $region20: #{tpu_custom_call.1} parent=1 // pred_region
      %s66 = ssub.s32 512, 512
      %67 = vsyncadd [#allocation9], %s66
      %s68 = sshll.u32 [#allocation10], 4
      %s69 = int_to_ptr.vmem [resolvable:$true] %s68
      %74 = dma.hbm_to_vmem [thread:$0]  %s4, 512, %s69, [#allocation9], 128, 128, 8
    $region21: #{tpu_custom_call.1} parent=1 // pred_fallthru
      _
    // Predicated region
    $region22: #{tpu_custom_call.1} parent=1 // pred_check
      _
    $region23: #{tpu_custom_call.1} parent=1 // pred_check_branch
      %76 = sbr.rel (0) target = $region25
    $region24: #{tpu_custom_call.1} parent=1 // pred_region
      _
    $region25: #{tpu_custom_call.1} parent=1 // pred_fallthru
      _
    // Predicated region
    $region26: #{tpu_custom_call.1} parent=1 // pred_check
      _
    $region27: #{tpu_custom_call.1} parent=1 // pred_check_branch
      %78 = sbr.rel (0) target = $region29
    $region28: #{tpu_custom_call.1} parent=1 // pred_region
      %79 = dma.done [#allocation3], 256
    $region29: #{tpu_custom_call.1} parent=1 // pred_fallthru
      _
    // Predicated region
    $region30: #{tpu_custom_call.1} parent=1 // pred_check
      _
    $region31: #{tpu_custom_call.1} parent=1 // pred_check_branch
      %81 = sbr.rel (0) target = $region33
    $region32: #{tpu_custom_call.1} parent=1 // pred_region
      %82 = dma.done [#allocation6], 512
    $region33: #{tpu_custom_call.1} parent=1 // pred_fallthru
      _
    // Predicated region
    $region34: #{tpu_custom_call.1} parent=1 // pred_check
      _
    $region35: #{tpu_custom_call.1} parent=1 // pred_check_branch
      %84 = sbr.rel (0) target = $region37
    $region36: #{tpu_custom_call.1} parent=1 // pred_region
      %85 = dma.done [#allocation6], 512
    $region37: #{tpu_custom_call.1} parent=1 // pred_fallthru
      _
    // Predicated region
    $region38: #{tpu_custom_call.1} parent=1 // pred_check
      _
    $region39: #{tpu_custom_call.1} parent=1 // pred_check_branch
      %87 = sbr.rel (0) target = $region41
    $region40: #{tpu_custom_call.1} parent=1 // pred_region
      %88 = dma.done [#allocation9], 512
    $region41: #{tpu_custom_call.1} parent=1 // pred_fallthru
      _
    // Predicated region
    $region42: #{tpu_custom_call.1} parent=1 // pred_check
      _
    $region43: #{tpu_custom_call.1} parent=1 // pred_check_branch
      %90 = sbr.rel (0) target = $region45
    $region44: #{tpu_custom_call.1} parent=1 // pred_region
      %91 = dma.done [#allocation9], 512
    $region45: #{tpu_custom_call.1} parent=1 // pred_fallthru
      _
    %v92 = vld [vmem:[#allocation2] sm:$0xff]
    %v93 = vld [vmem:[#allocation2 + $0x8] sm:$0xff]
    %v94 = vld [vmem:[#allocation5] sm:$0xff]
    %v95 = vld [vmem:[#allocation5 + $0x8] sm:$0xff]
    %v96 = vld [vmem:[#allocation5 + $0x10] sm:$0xff]
    %v97 = vld [vmem:[#allocation5 + $0x18] sm:$0xff]
    %vm98 = vcmask 261120
    %v100 = vsel %vm98, %v92, 0
    %v103 = vsel %vm98, %v93, 0
    %105 = vmatprep.subr.mxu0 0.0
    %106 = vmatpush1.msra.mxu0 0.0
    %107 = vmatprep.subr.mxu0 0.0
    %108 = vmatpush1.msra.mxu0 0.0
    %109 = vmatprep.subr.mxu0 0.0
    %110 = vmatpush1.msra.mxu0 0.0
    %111 = vmatprep.subr.mxu0 0.0
    %112 = vmatpush1.msra.mxu0 0.0
    %113 = vmatprep.subr.mxu0 0.0
    %114 = vmatpush1.msra.mxu0 0.0
    %115 = vmatprep.subr.mxu0 0.0
    %116 = vmatpush1.msra.mxu0 0.0
    %117 = vmatprep.subr.mxu0 0.0
    %118 = vmatpush1.msra.mxu0 0.0
    %119 = vmatprep.subr.mxu0 0.0
    %120 = vmatpush1.msra.mxu0 0.0
    %121 = vmatprep.subr.mxu0 0.0
    %122 = vmatpush1.msra.mxu0 0.0
    %123 = vmatprep.subr.mxu0 0.0
    %124 = vmatpush1.msra.mxu0 0.0
    %125 = vmatprep.subr.mxu0 0.0
    %126 = vmatpush1.msra.mxu0 0.0
    %127 = vmatprep.subr.mxu0 0.0
    %128 = vmatpush1.msra.mxu0 0.0
    %129 = vmatprep.subr.mxu0 0.0
    %130 = vmatpush1.msra.mxu0 %v97
    %131 = vmatprep.subr.mxu0 0.0
    %132 = vmatpush1.msra.mxu0 %v96
    %133 = vmatprep.subr.mxu0 0.0
    %134 = vmatpush1.msra.mxu0 %v95
    %135 = vmatprep.subr.mxu0 0.0
    %136 = vmatpush1.msra.mxu0 %v94
    %137 = vmatprep.subr.mxu0 0.0
    %138 = vmatpush2.msra.mxu0 0.0
    %139 = vmatprep.subr.mxu0 0.0
    %140 = vmatpush2.msra.mxu0 0.0
    %141 = vmatprep.subr.mxu0 0.0
    %142 = vmatpush2.msra.mxu0 0.0
    %143 = vmatprep.subr.mxu0 0.0
    %144 = vmatpush2.msra.mxu0 0.0
    %145 = vmatprep.subr.mxu0 0.0
    %146 = vmatpush2.msra.mxu0 0.0
    %147 = vmatprep.subr.mxu0 0.0
    %148 = vmatpush2.msra.mxu0 0.0
    %149 = vmatprep.subr.mxu0 0.0
    %150 = vmatpush2.msra.mxu0 0.0
    %151 = vmatprep.subr.mxu0 0.0
    %152 = vmatpush2.msra.mxu0 0.0
    %153 = vmatprep.subr.mxu0 0.0
    %154 = vmatpush2.msra.mxu0 0.0
    %155 = vmatprep.subr.mxu0 0.0
    %156 = vmatpush2.msra.mxu0 0.0
    %157 = vmatprep.subr.mxu0 0.0
    %158 = vmatpush2.msra.mxu0 0.0
    %159 = vmatprep.subr.mxu0 0.0
    %160 = vmatpush2.msra.mxu0 0.0
    %161 = vmatprep.subr.mxu0 0.0
    %162 = vmatpush2.msra.mxu0 0.0
    %163 = vmatprep.subr.mxu0 0.0
    %164 = vmatpush2.msra.mxu0 0.0
    %165 = vmatprep.subr.mxu0 0.0
    %166 = vmatpush2.msra.mxu0 0.0
    %167 = vmatprep.subr.mxu0 0.0
    %168 = vmatpush2.msra.mxu0 0.0
    %169 = vmatprep.mubr.f32.mxu0 0.0
    %170 = vmatmul.mubr.f32.gmra.mxu0 %v100
    %v171 = vpop.f32.mrf.mxu0
    %v172 = vadd.f32 0.0, %v171
    %v173 = vpop.f32.mrf.mxu0
    %174 = vmatprep.mubr.f32.mxu0 0.0
    %175 = vmatmul.mubr.f32.gmra.mxu0 %v103
    %v176 = vpop.f32.mrf.mxu0
    %v177 = vadd.f32 0.0, %v176
    %v178 = vpop.f32.mrf.mxu0
    %179 = vdwg.mxu0
    %v180 = vmul.f32 %v172, 0.5
    %v181 = vmul.f32 %v177, 0.5
    %v182 = vld [vmem:[#allocation7] sm:$0xff]
    %v183 = vld [vmem:[#allocation7 + $0x8] sm:$0xff]
    %v184 = vld [vmem:[#allocation7 + $0x10] sm:$0xff]
    %v185 = vld [vmem:[#allocation7 + $0x18] sm:$0xff]
    %186 = vmatprep.subr.mxu0 0.0
    %187 = vmatpush1.msra.mxu0 0.0
    %188 = vmatprep.subr.mxu0 0.0
    %189 = vmatpush1.msra.mxu0 0.0
    %190 = vmatprep.subr.mxu0 0.0
    %191 = vmatpush1.msra.mxu0 0.0
    %192 = vmatprep.subr.mxu0 0.0
    %193 = vmatpush1.msra.mxu0 0.0
    %194 = vmatprep.subr.mxu0 0.0
    %195 = vmatpush1.msra.mxu0 0.0
    %196 = vmatprep.subr.mxu0 0.0
    %197 = vmatpush1.msra.mxu0 0.0
    %198 = vmatprep.subr.mxu0 0.0
    %199 = vmatpush1.msra.mxu0 0.0
    %200 = vmatprep.subr.mxu0 0.0
    %201 = vmatpush1.msra.mxu0 0.0
    %202 = vmatprep.subr.mxu0 0.0
    %203 = vmatpush1.msra.mxu0 0.0
    %204 = vmatprep.subr.mxu0 0.0
    %205 = vmatpush1.msra.mxu0 0.0
    %206 = vmatprep.subr.mxu0 0.0
    %207 = vmatpush1.msra.mxu0 0.0
    %208 = vmatprep.subr.mxu0 0.0
    %209 = vmatpush1.msra.mxu0 0.0
    %210 = vmatprep.subr.mxu0 0.0
    %211 = vmatpush1.msra.mxu0 %v185
    %212 = vmatprep.subr.mxu0 0.0
    %213 = vmatpush1.msra.mxu0 %v184
    %214 = vmatprep.subr.mxu0 0.0
    %215 = vmatpush1.msra.mxu0 %v183
    %216 = vmatprep.subr.mxu0 0.0
    %217 = vmatpush1.msra.mxu0 %v182
    %218 = vmatprep.subr.mxu0 0.0
    %219 = vmatpush2.msra.mxu0 0.0
    %220 = vmatprep.subr.mxu0 0.0
    %221 = vmatpush2.msra.mxu0 0.0
    %222 = vmatprep.subr.mxu0 0.0
    %223 = vmatpush2.msra.mxu0 0.0
    %224 = vmatprep.subr.mxu0 0.0
    %225 = vmatpush2.msra.mxu0 0.0
    %226 = vmatprep.subr.mxu0 0.0
    %227 = vmatpush2.msra.mxu0 0.0
    %228 = vmatprep.subr.mxu0 0.0
    %229 = vmatpush2.msra.mxu0 0.0
    %230 = vmatprep.subr.mxu0 0.0
    %231 = vmatpush2.msra.mxu0 0.0
    %232 = vmatprep.subr.mxu0 0.0
    %233 = vmatpush2.msra.mxu0 0.0
    %234 = vmatprep.subr.mxu0 0.0
    %235 = vmatpush2.msra.mxu0 0.0
    %236 = vmatprep.subr.mxu0 0.0
    %237 = vmatpush2.msra.mxu0 0.0
    %238 = vmatprep.subr.mxu0 0.0
    %239 = vmatpush2.msra.mxu0 0.0
    %240 = vmatprep.subr.mxu0 0.0
    %241 = vmatpush2.msra.mxu0 0.0
    %242 = vmatprep.subr.mxu0 0.0
    %243 = vmatpush2.msra.mxu0 0.0
    %244 = vmatprep.subr.mxu0 0.0
    %245 = vmatpush2.msra.mxu0 0.0
    %246 = vmatprep.subr.mxu0 0.0
    %247 = vmatpush2.msra.mxu0 0.0
    %248 = vmatprep.subr.mxu0 0.0
    %249 = vmatpush2.msra.mxu0 0.0
    %250 = vmatprep.mubr.f32.mxu0 0.0
    %251 = vmatmul.mubr.f32.gmra.mxu0 %v100
    %v252 = vpop.f32.mrf.mxu0
    %v253 = vadd.f32 0.0, %v252
    %v254 = vpop.f32.mrf.mxu0
    %255 = vmatprep.mubr.f32.mxu0 0.0
    %256 = vmatmul.mubr.f32.gmra.mxu0 %v103
    %v257 = vpop.f32.mrf.mxu0
    %v258 = vadd.f32 0.0, %v257
    %v259 = vpop.f32.mrf.mxu0
    %260 = vdwg.mxu0
    %v261 = vld [vmem:[#allocation8] sm:$0xff]
    %v262 = vld [vmem:[#allocation8 + $0x8] sm:$0xff]
    %v263 = vld [vmem:[#allocation8 + $0x10] sm:$0xff]
    %v264 = vld [vmem:[#allocation8 + $0x18] sm:$0xff]
    %265 = vmatprep.subr.mxu0 0.0
    %266 = vmatpush1.msra.mxu0 0.0
    %267 = vmatprep.subr.mxu0 0.0
    %268 = vmatpush1.msra.mxu0 0.0
    %269 = vmatprep.subr.mxu0 0.0
    %270 = vmatpush1.msra.mxu0 0.0
    %271 = vmatprep.subr.mxu0 0.0
    %272 = vmatpush1.msra.mxu0 0.0
    %273 = vmatprep.subr.mxu0 0.0
    %274 = vmatpush1.msra.mxu0 0.0
    %275 = vmatprep.subr.mxu0 0.0
    %276 = vmatpush1.msra.mxu0 0.0
    %277 = vmatprep.subr.mxu0 0.0
    %278 = vmatpush1.msra.mxu0 0.0
    %279 = vmatprep.subr.mxu0 0.0
    %280 = vmatpush1.msra.mxu0 0.0
    %281 = vmatprep.subr.mxu0 0.0
    %282 = vmatpush1.msra.mxu0 0.0
    %283 = vmatprep.subr.mxu0 0.0
    %284 = vmatpush1.msra.mxu0 0.0
    %285 = vmatprep.subr.mxu0 0.0
    %286 = vmatpush1.msra.mxu0 0.0
    %287 = vmatprep.subr.mxu0 0.0
    %288 = vmatpush1.msra.mxu0 0.0
    %289 = vmatprep.subr.mxu0 0.0
    %290 = vmatpush1.msra.mxu0 %v264
    %291 = vmatprep.subr.mxu0 0.0
    %292 = vmatpush1.msra.mxu0 %v263
    %293 = vmatprep.subr.mxu0 0.0
    %294 = vmatpush1.msra.mxu0 %v262
    %295 = vmatprep.subr.mxu0 0.0
    %296 = vmatpush1.msra.mxu0 %v261
    %297 = vmatprep.subr.mxu0 0.0
    %298 = vmatpush2.msra.mxu0 0.0
    %299 = vmatprep.subr.mxu0 0.0
    %300 = vmatpush2.msra.mxu0 0.0
    %301 = vmatprep.subr.mxu0 0.0
    %302 = vmatpush2.msra.mxu0 0.0
    %303 = vmatprep.subr.mxu0 0.0
    %304 = vmatpush2.msra.mxu0 0.0
    %305 = vmatprep.subr.mxu0 0.0
    %306 = vmatpush2.msra.mxu0 0.0
    %307 = vmatprep.subr.mxu0 0.0
    %308 = vmatpush2.msra.mxu0 0.0
    %309 = vmatprep.subr.mxu0 0.0
    %310 = vmatpush2.msra.mxu0 0.0
    %311 = vmatprep.subr.mxu0 0.0
    %312 = vmatpush2.msra.mxu0 0.0
    %313 = vmatprep.subr.mxu0 0.0
    %314 = vmatpush2.msra.mxu0 0.0
    %315 = vmatprep.subr.mxu0 0.0
    %316 = vmatpush2.msra.mxu0 0.0
    %317 = vmatprep.subr.mxu0 0.0
    %318 = vmatpush2.msra.mxu0 0.0
    %319 = vmatprep.subr.mxu0 0.0
    %320 = vmatpush2.msra.mxu0 0.0
    %321 = vmatprep.subr.mxu0 0.0
    %322 = vmatpush2.msra.mxu0 0.0
    %323 = vmatprep.subr.mxu0 0.0
    %324 = vmatpush2.msra.mxu0 0.0
    %325 = vmatprep.subr.mxu0 0.0
    %326 = vmatpush2.msra.mxu0 0.0
    %327 = vmatprep.subr.mxu0 0.0
    %328 = vmatpush2.msra.mxu0 0.0
    %329 = vmatprep.mubr.f32.mxu0 0.0
    %330 = vmatmul.mubr.f32.gmra.mxu0 %v100
    %v331 = vpop.f32.mrf.mxu0
    %v332 = vadd.f32 0.0, %v331
    %v333 = vpop.f32.mrf.mxu0
    %334 = vmatprep.mubr.f32.mxu0 0.0
    %335 = vmatmul.mubr.f32.gmra.mxu0 %v103
    %v336 = vpop.f32.mrf.mxu0
    %v337 = vadd.f32 0.0, %v336
    %v338 = vpop.f32.mrf.mxu0
    %339 = vdwg.mxu0
    %vm340 = vcmask 31744
    %v342 = vsel %vm340, %v180, 0
    %v345 = vsel %vm340, %v253, 0
    %347 = vmatprep.subr.mxu0 0.0
    %348 = vmatpush1.xpose.msra.mxu0 0.0
    %349 = vmatprep.subr.mxu0 0.0
    %350 = vmatpush1.xpose.msra.mxu0 0.0
    %351 = vmatprep.subr.mxu0 0.0
    %352 = vmatpush1.xpose.msra.mxu0 0.0
    %353 = vmatprep.subr.mxu0 0.0
    %354 = vmatpush1.xpose.msra.mxu0 0.0
    %355 = vmatprep.subr.mxu0 0.0
    %356 = vmatpush1.xpose.msra.mxu0 0.0
    %357 = vmatprep.subr.mxu0 0.0
    %358 = vmatpush1.xpose.msra.mxu0 0.0
    %359 = vmatprep.subr.mxu0 0.0
    %360 = vmatpush1.xpose.msra.mxu0 0.0
    %361 = vmatprep.subr.mxu0 0.0
    %362 = vmatpush1.xpose.msra.mxu0 0.0
    %363 = vmatprep.subr.mxu0 0.0
    %364 = vmatpush1.xpose.msra.mxu0 0.0
    %365 = vmatprep.subr.mxu0 0.0
    %366 = vmatpush1.xpose.msra.mxu0 0.0
    %367 = vmatprep.subr.mxu0 0.0
    %368 = vmatpush1.xpose.msra.mxu0 0.0
    %369 = vmatprep.subr.mxu0 0.0
    %370 = vmatpush1.xpose.msra.mxu0 0.0
    %371 = vmatprep.subr.mxu0 0.0
    %372 = vmatpush1.xpose.msra.mxu0 0.0
    %373 = vmatprep.subr.mxu0 0.0
    %374 = vmatpush1.xpose.msra.mxu0 0.0
    %375 = vmatprep.subr.mxu0 0.0
    %376 = vmatpush1.xpose.msra.mxu0 0.0
    %377 = vmatprep.subr.mxu0 0.0
    %378 = vmatpush1.xpose.msra.mxu0 %v345
    %379 = vmatprep.subr.mxu0 0.0
    %380 = vmatpush2.xpose.msra.mxu0 0.0
    %381 = vmatprep.subr.mxu0 0.0
    %382 = vmatpush2.xpose.msra.mxu0 0.0
    %383 = vmatprep.subr.mxu0 0.0
    %384 = vmatpush2.xpose.msra.mxu0 0.0
    %385 = vmatprep.subr.mxu0 0.0
    %386 = vmatpush2.xpose.msra.mxu0 0.0
    %387 = vmatprep.subr.mxu0 0.0
    %388 = vmatpush2.xpose.msra.mxu0 0.0
    %389 = vmatprep.subr.mxu0 0.0
    %390 = vmatpush2.xpose.msra.mxu0 0.0
    %391 = vmatprep.subr.mxu0 0.0
    %392 = vmatpush2.xpose.msra.mxu0 0.0
    %393 = vmatprep.subr.mxu0 0.0
    %394 = vmatpush2.xpose.msra.mxu0 0.0
    %395 = vmatprep.subr.mxu0 0.0
    %396 = vmatpush2.xpose.msra.mxu0 0.0
    %397 = vmatprep.subr.mxu0 0.0
    %398 = vmatpush2.xpose.msra.mxu0 0.0
    %399 = vmatprep.subr.mxu0 0.0
    %400 = vmatpush2.xpose.msra.mxu0 0.0
    %401 = vmatprep.subr.mxu0 0.0
    %402 = vmatpush2.xpose.msra.mxu0 0.0
    %403 = vmatprep.subr.mxu0 0.0
    %404 = vmatpush2.xpose.msra.mxu0 0.0
    %405 = vmatprep.subr.mxu0 0.0
    %406 = vmatpush2.xpose.msra.mxu0 0.0
    %407 = vmatprep.subr.mxu0 0.0
    %408 = vmatpush2.xpose.msra.mxu0 0.0
    %409 = vmatprep.subr.mxu0 0.0
    %410 = vmatpush2.xpose.msra.mxu0 0.0
    %411 = vmatprep.mubr.f32.mxu0 0.0
    %412 = vmatmul.mubr.f32.gmra.mxu0 %v342
    %v413 = vpop.f32.mrf.mxu0
    %v414 = vadd.f32 0.0, %v413
    %v415 = vpop.f32.mrf.mxu0
    %416 = vdwg.mxu0
    %v418 = vsel %vm340, %v181, 0
    %v421 = vsel %vm340, %v258, 0
    %423 = vmatprep.subr.mxu0 0.0
    %424 = vmatpush1.xpose.msra.mxu0 0.0
    %425 = vmatprep.subr.mxu0 0.0
    %426 = vmatpush1.xpose.msra.mxu0 0.0
    %427 = vmatprep.subr.mxu0 0.0
    %428 = vmatpush1.xpose.msra.mxu0 0.0
    %429 = vmatprep.subr.mxu0 0.0
    %430 = vmatpush1.xpose.msra.mxu0 0.0
    %431 = vmatprep.subr.mxu0 0.0
    %432 = vmatpush1.xpose.msra.mxu0 0.0
    %433 = vmatprep.subr.mxu0 0.0
    %434 = vmatpush1.xpose.msra.mxu0 0.0
    %435 = vmatprep.subr.mxu0 0.0
    %436 = vmatpush1.xpose.msra.mxu0 0.0
    %437 = vmatprep.subr.mxu0 0.0
    %438 = vmatpush1.xpose.msra.mxu0 0.0
    %439 = vmatprep.subr.mxu0 0.0
    %440 = vmatpush1.xpose.msra.mxu0 0.0
    %441 = vmatprep.subr.mxu0 0.0
    %442 = vmatpush1.xpose.msra.mxu0 0.0
    %443 = vmatprep.subr.mxu0 0.0
    %444 = vmatpush1.xpose.msra.mxu0 0.0
    %445 = vmatprep.subr.mxu0 0.0
    %446 = vmatpush1.xpose.msra.mxu0 0.0
    %447 = vmatprep.subr.mxu0 0.0
    %448 = vmatpush1.xpose.msra.mxu0 0.0
    %449 = vmatprep.subr.mxu0 0.0
    %450 = vmatpush1.xpose.msra.mxu0 0.0
    %451 = vmatprep.subr.mxu0 0.0
    %452 = vmatpush1.xpose.msra.mxu0 0.0
    %453 = vmatprep.subr.mxu0 0.0
    %454 = vmatpush1.xpose.msra.mxu0 %v421
    %455 = vmatprep.subr.mxu0 0.0
    %456 = vmatpush2.xpose.msra.mxu0 0.0
    %457 = vmatprep.subr.mxu0 0.0
    %458 = vmatpush2.xpose.msra.mxu0 0.0
    %459 = vmatprep.subr.mxu0 0.0
    %460 = vmatpush2.xpose.msra.mxu0 0.0
    %461 = vmatprep.subr.mxu0 0.0
    %462 = vmatpush2.xpose.msra.mxu0 0.0
    %463 = vmatprep.subr.mxu0 0.0
    %464 = vmatpush2.xpose.msra.mxu0 0.0
    %465 = vmatprep.subr.mxu0 0.0
    %466 = vmatpush2.xpose.msra.mxu0 0.0
    %467 = vmatprep.subr.mxu0 0.0
    %468 = vmatpush2.xpose.msra.mxu0 0.0
    %469 = vmatprep.subr.mxu0 0.0
    %470 = vmatpush2.xpose.msra.mxu0 0.0
    %471 = vmatprep.subr.mxu0 0.0
    %472 = vmatpush2.xpose.msra.mxu0 0.0
    %473 = vmatprep.subr.mxu0 0.0
    %474 = vmatpush2.xpose.msra.mxu0 0.0
    %475 = vmatprep.subr.mxu0 0.0
    %476 = vmatpush2.xpose.msra.mxu0 0.0
    %477 = vmatprep.subr.mxu0 0.0
    %478 = vmatpush2.xpose.msra.mxu0 0.0
    %479 = vmatprep.subr.mxu0 0.0
    %480 = vmatpush2.xpose.msra.mxu0 0.0
    %481 = vmatprep.subr.mxu0 0.0
    %482 = vmatpush2.xpose.msra.mxu0 0.0
    %483 = vmatprep.subr.mxu0 0.0
    %484 = vmatpush2.xpose.msra.mxu0 0.0
    %485 = vmatprep.subr.mxu0 0.0
    %486 = vmatpush2.xpose.msra.mxu0 0.0
    %487 = vmatprep.mubr.f32.mxu0 0.0
    %488 = vmatmul.mubr.f32.gmra.mxu0 %v418
    %v489 = vpop.f32.mrf.mxu0
    %v490 = vadd.f32 0.0, %v489
    %v491 = vpop.f32.mrf.mxu0
    %492 = vdwg.mxu0
    %vm493 = vcmask 64512
    %v494 = vsel %vm493, %v414, -inf
    %495 = vmax.xlane.f32.xlu0 %v494
    %v496 = vpop.xlane.xlu0 %495
    %v497 = vsel %vm493, %v490, -inf
    %498 = vmax.xlane.f32.xlu0 %v497
    %v499 = vpop.xlane.xlu0 %498
    %v500 = vsub.f32 %v414, %v496
    %v501 = vsub.f32 %v490, %v499
    %v502 = vmul.f32 %v500, 1.442695
    %v503 = vpow.pop %v502
    %v504 = vmul.f32 %v501, 1.442695
    %v505 = vpow.pop %v504
    %v506 = vsel %vm493, %v503, 0.0
    %507 = vadd.xlane.f32.xlu0 %v506
    %v508 = vpop.xlane.xlu0 %507
    %v509 = vsel %vm493, %v505, 0.0
    %510 = vadd.xlane.f32.xlu0 %v509
    %v511 = vpop.xlane.xlu0 %510
    %v512 = vrcp.pop %v508
    %v513 = vmul.f32 %v503, %v512
    %v514 = vrcp.pop %v511
    %v515 = vmul.f32 %v505, %v514
    %v516 = vsel %vm493, %v513, 0.0
    %v517 = vrot.slane %v516, 4
    %v518 = vadd.f32 %v516, %v517
    %v519 = vrot.slane %v518, 2
    %v520 = vadd.f32 %v518, %v519
    %v521 = vrot.slane %v520, 1
    %v522 = vadd.f32 %v520, %v521
    %v523 = vsel %vm493, %v515, 0.0
    %v524 = vrot.slane %v523, 4
    %v525 = vadd.f32 %v523, %v524
    %v526 = vrot.slane %v525, 2
    %v527 = vadd.f32 %v525, %v526
    %v528 = vrot.slane %v527, 1
    %v529 = vadd.f32 %v527, %v528
    %v530 = vrcp.pop 8.0
    %v531 = vmul.f32 %v522, %v530
    %v532 = vmul.f32 %v529, %v530
    %v534 = vsel %vm493, %v531, 0
    %536 = vmatprep.subr.mxu0 0.0
    %537 = vmatpush1.msra.mxu0 0.0
    %538 = vmatprep.subr.mxu0 0.0
    %539 = vmatpush1.msra.mxu0 0.0
    %540 = vmatprep.subr.mxu0 0.0
    %541 = vmatpush1.msra.mxu0 0.0
    %542 = vmatprep.subr.mxu0 0.0
    %543 = vmatpush1.msra.mxu0 0.0
    %544 = vmatprep.subr.mxu0 0.0
    %545 = vmatpush1.msra.mxu0 0.0
    %546 = vmatprep.subr.mxu0 0.0
    %547 = vmatpush1.msra.mxu0 0.0
    %548 = vmatprep.subr.mxu0 0.0
    %549 = vmatpush1.msra.mxu0 0.0
    %550 = vmatprep.subr.mxu0 0.0
    %551 = vmatpush1.msra.mxu0 0.0
    %552 = vmatprep.subr.mxu0 0.0
    %553 = vmatpush1.msra.mxu0 0.0
    %554 = vmatprep.subr.mxu0 0.0
    %555 = vmatpush1.msra.mxu0 0.0
    %556 = vmatprep.subr.mxu0 0.0
    %557 = vmatpush1.msra.mxu0 0.0
    %558 = vmatprep.subr.mxu0 0.0
    %559 = vmatpush1.msra.mxu0 0.0
    %560 = vmatprep.subr.mxu0 0.0
    %561 = vmatpush1.msra.mxu0 0.0
    %562 = vmatprep.subr.mxu0 0.0
    %563 = vmatpush1.msra.mxu0 0.0
    %564 = vmatprep.subr.mxu0 0.0
    %565 = vmatpush1.msra.mxu0 0.0
    %566 = vmatprep.subr.mxu0 0.0
    %567 = vmatpush1.msra.mxu0 %v332
    %568 = vmatprep.subr.mxu0 0.0
    %569 = vmatpush2.msra.mxu0 0.0
    %570 = vmatprep.subr.mxu0 0.0
    %571 = vmatpush2.msra.mxu0 0.0
    %572 = vmatprep.subr.mxu0 0.0
    %573 = vmatpush2.msra.mxu0 0.0
    %574 = vmatprep.subr.mxu0 0.0
    %575 = vmatpush2.msra.mxu0 0.0
    %576 = vmatprep.subr.mxu0 0.0
    %577 = vmatpush2.msra.mxu0 0.0
    %578 = vmatprep.subr.mxu0 0.0
    %579 = vmatpush2.msra.mxu0 0.0
    %580 = vmatprep.subr.mxu0 0.0
    %581 = vmatpush2.msra.mxu0 0.0
    %582 = vmatprep.subr.mxu0 0.0
    %583 = vmatpush2.msra.mxu0 0.0
    %584 = vmatprep.subr.mxu0 0.0
    %585 = vmatpush2.msra.mxu0 0.0
    %586 = vmatprep.subr.mxu0 0.0
    %587 = vmatpush2.msra.mxu0 0.0
    %588 = vmatprep.subr.mxu0 0.0
    %589 = vmatpush2.msra.mxu0 0.0
    %590 = vmatprep.subr.mxu0 0.0
    %591 = vmatpush2.msra.mxu0 0.0
    %592 = vmatprep.subr.mxu0 0.0
    %593 = vmatpush2.msra.mxu0 0.0
    %594 = vmatprep.subr.mxu0 0.0
    %595 = vmatpush2.msra.mxu0 0.0
    %596 = vmatprep.subr.mxu0 0.0
    %597 = vmatpush2.msra.mxu0 0.0
    %598 = vmatprep.subr.mxu0 0.0
    %599 = vmatpush2.msra.mxu0 0.0
    %600 = vmatprep.mubr.f32.mxu0 0.0
    %601 = vmatmul.mubr.f32.gmra.mxu0 %v534
    %v602 = vpop.f32.mrf.mxu0
    %v603 = vadd.f32 0.0, %v602
    %v604 = vpop.f32.mrf.mxu0
    %605 = vdwg.mxu0
    %v607 = vsel %vm493, %v532, 0
    %609 = vmatprep.subr.mxu0 0.0
    %610 = vmatpush1.msra.mxu0 0.0
    %611 = vmatprep.subr.mxu0 0.0
    %612 = vmatpush1.msra.mxu0 0.0
    %613 = vmatprep.subr.mxu0 0.0
    %614 = vmatpush1.msra.mxu0 0.0
    %615 = vmatprep.subr.mxu0 0.0
    %616 = vmatpush1.msra.mxu0 0.0
    %617 = vmatprep.subr.mxu0 0.0
    %618 = vmatpush1.msra.mxu0 0.0
    %619 = vmatprep.subr.mxu0 0.0
    %620 = vmatpush1.msra.mxu0 0.0
    %621 = vmatprep.subr.mxu0 0.0
    %622 = vmatpush1.msra.mxu0 0.0
    %623 = vmatprep.subr.mxu0 0.0
    %624 = vmatpush1.msra.mxu0 0.0
    %625 = vmatprep.subr.mxu0 0.0
    %626 = vmatpush1.msra.mxu0 0.0
    %627 = vmatprep.subr.mxu0 0.0
    %628 = vmatpush1.msra.mxu0 0.0
    %629 = vmatprep.subr.mxu0 0.0
    %630 = vmatpush1.msra.mxu0 0.0
    %631 = vmatprep.subr.mxu0 0.0
    %632 = vmatpush1.msra.mxu0 0.0
    %633 = vmatprep.subr.mxu0 0.0
    %634 = vmatpush1.msra.mxu0 0.0
    %635 = vmatprep.subr.mxu0 0.0
    %636 = vmatpush1.msra.mxu0 0.0
    %637 = vmatprep.subr.mxu0 0.0
    %638 = vmatpush1.msra.mxu0 0.0
    %639 = vmatprep.subr.mxu0 0.0
    %640 = vmatpush1.msra.mxu0 %v337
    %641 = vmatprep.subr.mxu0 0.0
    %642 = vmatpush2.msra.mxu0 0.0
    %643 = vmatprep.subr.mxu0 0.0
    %644 = vmatpush2.msra.mxu0 0.0
    %645 = vmatprep.subr.mxu0 0.0
    %646 = vmatpush2.msra.mxu0 0.0
    %647 = vmatprep.subr.mxu0 0.0
    %648 = vmatpush2.msra.mxu0 0.0
    %649 = vmatprep.subr.mxu0 0.0
    %650 = vmatpush2.msra.mxu0 0.0
    %651 = vmatprep.subr.mxu0 0.0
    %652 = vmatpush2.msra.mxu0 0.0
    %653 = vmatprep.subr.mxu0 0.0
    %654 = vmatpush2.msra.mxu0 0.0
    %655 = vmatprep.subr.mxu0 0.0
    %656 = vmatpush2.msra.mxu0 0.0
    %657 = vmatprep.subr.mxu0 0.0
    %658 = vmatpush2.msra.mxu0 0.0
    %659 = vmatprep.subr.mxu0 0.0
    %660 = vmatpush2.msra.mxu0 0.0
    %661 = vmatprep.subr.mxu0 0.0
    %662 = vmatpush2.msra.mxu0 0.0
    %663 = vmatprep.subr.mxu0 0.0
    %664 = vmatpush2.msra.mxu0 0.0
    %665 = vmatprep.subr.mxu0 0.0
    %666 = vmatpush2.msra.mxu0 0.0
    %667 = vmatprep.subr.mxu0 0.0
    %668 = vmatpush2.msra.mxu0 0.0
    %669 = vmatprep.subr.mxu0 0.0
    %670 = vmatpush2.msra.mxu0 0.0
    %671 = vmatprep.subr.mxu0 0.0
    %672 = vmatpush2.msra.mxu0 0.0
    %673 = vmatprep.mubr.f32.mxu0 0.0
    %674 = vmatmul.mubr.f32.gmra.mxu0 %v607
    %v675 = vpop.f32.mrf.mxu0
    %v676 = vadd.f32 0.0, %v675
    %v677 = vpop.f32.mrf.mxu0
    %678 = vdwg.mxu0
    %679 = vrot.lane.b32.xlu0 %v180, 124
    %v680 = vpop.permute.xlu0 %679
    %681 = vrot.lane.b32.xlu0 %v253, 124
    %v682 = vpop.permute.xlu0 %681
    %v683 = vsel %vm340, %v680, 0
    %v685 = vsel %vm340, %v682, 0
    %687 = vmatprep.subr.mxu0 0.0
    %688 = vmatpush1.xpose.msra.mxu0 0.0
    %689 = vmatprep.subr.mxu0 0.0
    %690 = vmatpush1.xpose.msra.mxu0 0.0
    %691 = vmatprep.subr.mxu0 0.0
    %692 = vmatpush1.xpose.msra.mxu0 0.0
    %693 = vmatprep.subr.mxu0 0.0
    %694 = vmatpush1.xpose.msra.mxu0 0.0
    %695 = vmatprep.subr.mxu0 0.0
    %696 = vmatpush1.xpose.msra.mxu0 0.0
    %697 = vmatprep.subr.mxu0 0.0
    %698 = vmatpush1.xpose.msra.mxu0 0.0
    %699 = vmatprep.subr.mxu0 0.0
    %700 = vmatpush1.xpose.msra.mxu0 0.0
    %701 = vmatprep.subr.mxu0 0.0
    %702 = vmatpush1.xpose.msra.mxu0 0.0
    %703 = vmatprep.subr.mxu0 0.0
    %704 = vmatpush1.xpose.msra.mxu0 0.0
    %705 = vmatprep.subr.mxu0 0.0
    %706 = vmatpush1.xpose.msra.mxu0 0.0
    %707 = vmatprep.subr.mxu0 0.0
    %708 = vmatpush1.xpose.msra.mxu0 0.0
    %709 = vmatprep.subr.mxu0 0.0
    %710 = vmatpush1.xpose.msra.mxu0 0.0
    %711 = vmatprep.subr.mxu0 0.0
    %712 = vmatpush1.xpose.msra.mxu0 0.0
    %713 = vmatprep.subr.mxu0 0.0
    %714 = vmatpush1.xpose.msra.mxu0 0.0
    %715 = vmatprep.subr.mxu0 0.0
    %716 = vmatpush1.xpose.msra.mxu0 0.0
    %717 = vmatprep.subr.mxu0 0.0
    %718 = vmatpush1.xpose.msra.mxu0 %v685
    %719 = vmatprep.subr.mxu0 0.0
    %720 = vmatpush2.xpose.msra.mxu0 0.0
    %721 = vmatprep.subr.mxu0 0.0
    %722 = vmatpush2.xpose.msra.mxu0 0.0
    %723 = vmatprep.subr.mxu0 0.0
    %724 = vmatpush2.xpose.msra.mxu0 0.0
    %725 = vmatprep.subr.mxu0 0.0
    %726 = vmatpush2.xpose.msra.mxu0 0.0
    %727 = vmatprep.subr.mxu0 0.0
    %728 = vmatpush2.xpose.msra.mxu0 0.0
    %729 = vmatprep.subr.mxu0 0.0
    %730 = vmatpush2.xpose.msra.mxu0 0.0
    %731 = vmatprep.subr.mxu0 0.0
    %732 = vmatpush2.xpose.msra.mxu0 0.0
    %733 = vmatprep.subr.mxu0 0.0
    %734 = vmatpush2.xpose.msra.mxu0 0.0
    %735 = vmatprep.subr.mxu0 0.0
    %736 = vmatpush2.xpose.msra.mxu0 0.0
    %737 = vmatprep.subr.mxu0 0.0
    %738 = vmatpush2.xpose.msra.mxu0 0.0
    %739 = vmatprep.subr.mxu0 0.0
    %740 = vmatpush2.xpose.msra.mxu0 0.0
    %741 = vmatprep.subr.mxu0 0.0
    %742 = vmatpush2.xpose.msra.mxu0 0.0
    %743 = vmatprep.subr.mxu0 0.0
    %744 = vmatpush2.xpose.msra.mxu0 0.0
    %745 = vmatprep.subr.mxu0 0.0
    %746 = vmatpush2.xpose.msra.mxu0 0.0
    %747 = vmatprep.subr.mxu0 0.0
    %748 = vmatpush2.xpose.msra.mxu0 0.0
    %749 = vmatprep.subr.mxu0 0.0
    %750 = vmatpush2.xpose.msra.mxu0 0.0
    %751 = vmatprep.mubr.f32.mxu0 0.0
    %752 = vmatmul.mubr.f32.gmra.mxu0 %v683
    %v753 = vpop.f32.mrf.mxu0
    %v754 = vadd.f32 0.0, %v753
    %v755 = vpop.f32.mrf.mxu0
    %756 = vdwg.mxu0
    %757 = vrot.lane.b32.xlu0 %v181, 124
    %v758 = vpop.permute.xlu0 %757
    %759 = vrot.lane.b32.xlu0 %v258, 124
    %v760 = vpop.permute.xlu0 %759
    %v761 = vsel %vm340, %v758, 0
    %v763 = vsel %vm340, %v760, 0
    %765 = vmatprep.subr.mxu0 0.0
    %766 = vmatpush1.xpose.msra.mxu0 0.0
    %767 = vmatprep.subr.mxu0 0.0
    %768 = vmatpush1.xpose.msra.mxu0 0.0
    %769 = vmatprep.subr.mxu0 0.0
    %770 = vmatpush1.xpose.msra.mxu0 0.0
    %771 = vmatprep.subr.mxu0 0.0
    %772 = vmatpush1.xpose.msra.mxu0 0.0
    %773 = vmatprep.subr.mxu0 0.0
    %774 = vmatpush1.xpose.msra.mxu0 0.0
    %775 = vmatprep.subr.mxu0 0.0
    %776 = vmatpush1.xpose.msra.mxu0 0.0
    %777 = vmatprep.subr.mxu0 0.0
    %778 = vmatpush1.xpose.msra.mxu0 0.0
    %779 = vmatprep.subr.mxu0 0.0
    %780 = vmatpush1.xpose.msra.mxu0 0.0
    %781 = vmatprep.subr.mxu0 0.0
    %782 = vmatpush1.xpose.msra.mxu0 0.0
    %783 = vmatprep.subr.mxu0 0.0
    %784 = vmatpush1.xpose.msra.mxu0 0.0
    %785 = vmatprep.subr.mxu0 0.0
    %786 = vmatpush1.xpose.msra.mxu0 0.0
    %787 = vmatprep.subr.mxu0 0.0
    %788 = vmatpush1.xpose.msra.mxu0 0.0
    %789 = vmatprep.subr.mxu0 0.0
    %790 = vmatpush1.xpose.msra.mxu0 0.0
    %791 = vmatprep.subr.mxu0 0.0
    %792 = vmatpush1.xpose.msra.mxu0 0.0
    %793 = vmatprep.subr.mxu0 0.0
    %794 = vmatpush1.xpose.msra.mxu0 0.0
    %795 = vmatprep.subr.mxu0 0.0
    %796 = vmatpush1.xpose.msra.mxu0 %v763
    %797 = vmatprep.subr.mxu0 0.0
    %798 = vmatpush2.xpose.msra.mxu0 0.0
    %799 = vmatprep.subr.mxu0 0.0
    %800 = vmatpush2.xpose.msra.mxu0 0.0
    %801 = vmatprep.subr.mxu0 0.0
    %802 = vmatpush2.xpose.msra.mxu0 0.0
    %803 = vmatprep.subr.mxu0 0.0
    %804 = vmatpush2.xpose.msra.mxu0 0.0
    %805 = vmatprep.subr.mxu0 0.0
    %806 = vmatpush2.xpose.msra.mxu0 0.0
    %807 = vmatprep.subr.mxu0 0.0
    %808 = vmatpush2.xpose.msra.mxu0 0.0
    %809 = vmatprep.subr.mxu0 0.0
    %810 = vmatpush2.xpose.msra.mxu0 0.0
    %811 = vmatprep.subr.mxu0 0.0
    %812 = vmatpush2.xpose.msra.mxu0 0.0
    %813 = vmatprep.subr.mxu0 0.0
    %814 = vmatpush2.xpose.msra.mxu0 0.0
    %815 = vmatprep.subr.mxu0 0.0
    %816 = vmatpush2.xpose.msra.mxu0 0.0
    %817 = vmatprep.subr.mxu0 0.0
    %818 = vmatpush2.xpose.msra.mxu0 0.0
    %819 = vmatprep.subr.mxu0 0.0
    %820 = vmatpush2.xpose.msra.mxu0 0.0
    %821 = vmatprep.subr.mxu0 0.0
    %822 = vmatpush2.xpose.msra.mxu0 0.0
    %823 = vmatprep.subr.mxu0 0.0
    %824 = vmatpush2.xpose.msra.mxu0 0.0
    %825 = vmatprep.subr.mxu0 0.0
    %826 = vmatpush2.xpose.msra.mxu0 0.0
    %827 = vmatprep.subr.mxu0 0.0
    %828 = vmatpush2.xpose.msra.mxu0 0.0
    %829 = vmatprep.mubr.f32.mxu0 0.0
    %830 = vmatmul.mubr.f32.gmra.mxu0 %v761
    %v831 = vpop.f32.mrf.mxu0
    %v832 = vadd.f32 0.0, %v831
    %v833 = vpop.f32.mrf.mxu0
    %834 = vdwg.mxu0
    %v835 = vsel %vm493, %v754, -inf
    %836 = vmax.xlane.f32.xlu0 %v835
    %v837 = vpop.xlane.xlu0 %836
    %v838 = vsel %vm493, %v832, -inf
    %839 = vmax.xlane.f32.xlu0 %v838
    %v840 = vpop.xlane.xlu0 %839
    %v841 = vsub.f32 %v754, %v837
    %v842 = vsub.f32 %v832, %v840
    %v843 = vmul.f32 %v841, 1.442695
    %v844 = vpow.pop %v843
    %v845 = vmul.f32 %v842, 1.442695
    %v846 = vpow.pop %v845
    %v847 = vsel %vm493, %v844, 0.0
    %848 = vadd.xlane.f32.xlu0 %v847
    %v849 = vpop.xlane.xlu0 %848
    %v850 = vsel %vm493, %v846, 0.0
    %851 = vadd.xlane.f32.xlu0 %v850
    %v852 = vpop.xlane.xlu0 %851
    %v853 = vrcp.pop %v849
    %v854 = vmul.f32 %v844, %v853
    %v855 = vrcp.pop %v852
    %v856 = vmul.f32 %v846, %v855
    %v857 = vsel %vm493, %v854, 0.0
    %v858 = vrot.slane %v857, 4
    %v859 = vadd.f32 %v857, %v858
    %v860 = vrot.slane %v859, 2
    %v861 = vadd.f32 %v859, %v860
    %v862 = vrot.slane %v861, 1
    %v863 = vadd.f32 %v861, %v862
    %v864 = vsel %vm493, %v856, 0.0
    %v865 = vrot.slane %v864, 4
    %v866 = vadd.f32 %v864, %v865
    %v867 = vrot.slane %v866, 2
    %v868 = vadd.f32 %v866, %v867
    %v869 = vrot.slane %v868, 1
    %v870 = vadd.f32 %v868, %v869
    %v871 = vmul.f32 %v863, %v530
    %v872 = vmul.f32 %v870, %v530
    %874 = vrot.lane.b32.xlu0 %v332, 124
    %v875 = vpop.permute.xlu0 %874
    %v878 = vsel %vm493, %v871, 0
    %880 = vmatprep.subr.mxu0 0.0
    %881 = vmatpush1.msra.mxu0 0.0
    %882 = vmatprep.subr.mxu0 0.0
    %883 = vmatpush1.msra.mxu0 0.0
    %884 = vmatprep.subr.mxu0 0.0
    %885 = vmatpush1.msra.mxu0 0.0
    %886 = vmatprep.subr.mxu0 0.0
    %887 = vmatpush1.msra.mxu0 0.0
    %888 = vmatprep.subr.mxu0 0.0
    %889 = vmatpush1.msra.mxu0 0.0
    %890 = vmatprep.subr.mxu0 0.0
    %891 = vmatpush1.msra.mxu0 0.0
    %892 = vmatprep.subr.mxu0 0.0
    %893 = vmatpush1.msra.mxu0 0.0
    %894 = vmatprep.subr.mxu0 0.0
    %895 = vmatpush1.msra.mxu0 0.0
    %896 = vmatprep.subr.mxu0 0.0
    %897 = vmatpush1.msra.mxu0 0.0
    %898 = vmatprep.subr.mxu0 0.0
    %899 = vmatpush1.msra.mxu0 0.0
    %900 = vmatprep.subr.mxu0 0.0
    %901 = vmatpush1.msra.mxu0 0.0
    %902 = vmatprep.subr.mxu0 0.0
    %903 = vmatpush1.msra.mxu0 0.0
    %904 = vmatprep.subr.mxu0 0.0
    %905 = vmatpush1.msra.mxu0 0.0
    %906 = vmatprep.subr.mxu0 0.0
    %907 = vmatpush1.msra.mxu0 0.0
    %908 = vmatprep.subr.mxu0 0.0
    %909 = vmatpush1.msra.mxu0 0.0
    %910 = vmatprep.subr.mxu0 0.0
    %911 = vmatpush1.msra.mxu0 %v875
    %912 = vmatprep.subr.mxu0 0.0
    %913 = vmatpush2.msra.mxu0 0.0
    %914 = vmatprep.subr.mxu0 0.0
    %915 = vmatpush2.msra.mxu0 0.0
    %916 = vmatprep.subr.mxu0 0.0
    %917 = vmatpush2.msra.mxu0 0.0
    %918 = vmatprep.subr.mxu0 0.0
    %919 = vmatpush2.msra.mxu0 0.0
    %920 = vmatprep.subr.mxu0 0.0
    %921 = vmatpush2.msra.mxu0 0.0
    %922 = vmatprep.subr.mxu0 0.0
    %923 = vmatpush2.msra.mxu0 0.0
    %924 = vmatprep.subr.mxu0 0.0
    %925 = vmatpush2.msra.mxu0 0.0
    %926 = vmatprep.subr.mxu0 0.0
    %927 = vmatpush2.msra.mxu0 0.0
    %928 = vmatprep.subr.mxu0 0.0
    %929 = vmatpush2.msra.mxu0 0.0
    %930 = vmatprep.subr.mxu0 0.0
    %931 = vmatpush2.msra.mxu0 0.0
    %932 = vmatprep.subr.mxu0 0.0
    %933 = vmatpush2.msra.mxu0 0.0
    %934 = vmatprep.subr.mxu0 0.0
    %935 = vmatpush2.msra.mxu0 0.0
    %936 = vmatprep.subr.mxu0 0.0
    %937 = vmatpush2.msra.mxu0 0.0
    %938 = vmatprep.subr.mxu0 0.0
    %939 = vmatpush2.msra.mxu0 0.0
    %940 = vmatprep.subr.mxu0 0.0
    %941 = vmatpush2.msra.mxu0 0.0
    %942 = vmatprep.subr.mxu0 0.0
    %943 = vmatpush2.msra.mxu0 0.0
    %944 = vmatprep.mubr.f32.mxu0 0.0
    %945 = vmatmul.mubr.f32.gmra.mxu0 %v878
    %v946 = vpop.f32.mrf.mxu0
    %v947 = vadd.f32 0.0, %v946
    %v948 = vpop.f32.mrf.mxu0
    %949 = vdwg.mxu0
    %951 = vrot.lane.b32.xlu0 %v337, 124
    %v952 = vpop.permute.xlu0 %951
    %v955 = vsel %vm493, %v872, 0
    %957 = vmatprep.subr.mxu0 0.0
    %958 = vmatpush1.msra.mxu0 0.0
    %959 = vmatprep.subr.mxu0 0.0
    %960 = vmatpush1.msra.mxu0 0.0
    %961 = vmatprep.subr.mxu0 0.0
    %962 = vmatpush1.msra.mxu0 0.0
    %963 = vmatprep.subr.mxu0 0.0
    %964 = vmatpush1.msra.mxu0 0.0
    %965 = vmatprep.subr.mxu0 0.0
    %966 = vmatpush1.msra.mxu0 0.0
    %967 = vmatprep.subr.mxu0 0.0
    %968 = vmatpush1.msra.mxu0 0.0
    %969 = vmatprep.subr.mxu0 0.0
    %970 = vmatpush1.msra.mxu0 0.0
    %971 = vmatprep.subr.mxu0 0.0
    %972 = vmatpush1.msra.mxu0 0.0
    %973 = vmatprep.subr.mxu0 0.0
    %974 = vmatpush1.msra.mxu0 0.0
    %975 = vmatprep.subr.mxu0 0.0
    %976 = vmatpush1.msra.mxu0 0.0
    %977 = vmatprep.subr.mxu0 0.0
    %978 = vmatpush1.msra.mxu0 0.0
    %979 = vmatprep.subr.mxu0 0.0
    %980 = vmatpush1.msra.mxu0 0.0
    %981 = vmatprep.subr.mxu0 0.0
    %982 = vmatpush1.msra.mxu0 0.0
    %983 = vmatprep.subr.mxu0 0.0
    %984 = vmatpush1.msra.mxu0 0.0
    %985 = vmatprep.subr.mxu0 0.0
    %986 = vmatpush1.msra.mxu0 0.0
    %987 = vmatprep.subr.mxu0 0.0
    %988 = vmatpush1.msra.mxu0 %v952
    %989 = vmatprep.subr.mxu0 0.0
    %990 = vmatpush2.msra.mxu0 0.0
    %991 = vmatprep.subr.mxu0 0.0
    %992 = vmatpush2.msra.mxu0 0.0
    %993 = vmatprep.subr.mxu0 0.0
    %994 = vmatpush2.msra.mxu0 0.0
    %995 = vmatprep.subr.mxu0 0.0
    %996 = vmatpush2.msra.mxu0 0.0
    %997 = vmatprep.subr.mxu0 0.0
    %998 = vmatpush2.msra.mxu0 0.0
    %999 = vmatprep.subr.mxu0 0.0
    %1000 = vmatpush2.msra.mxu0 0.0
    %1001 = vmatprep.subr.mxu0 0.0
    %1002 = vmatpush2.msra.mxu0 0.0
    %1003 = vmatprep.subr.mxu0 0.0
    %1004 = vmatpush2.msra.mxu0 0.0
    %1005 = vmatprep.subr.mxu0 0.0
    %1006 = vmatpush2.msra.mxu0 0.0
    %1007 = vmatprep.subr.mxu0 0.0
    %1008 = vmatpush2.msra.mxu0 0.0
    %1009 = vmatprep.subr.mxu0 0.0
    %1010 = vmatpush2.msra.mxu0 0.0
    %1011 = vmatprep.subr.mxu0 0.0
    %1012 = vmatpush2.msra.mxu0 0.0
    %1013 = vmatprep.subr.mxu0 0.0
    %1014 = vmatpush2.msra.mxu0 0.0
    %1015 = vmatprep.subr.mxu0 0.0
    %1016 = vmatpush2.msra.mxu0 0.0
    %1017 = vmatprep.subr.mxu0 0.0
    %1018 = vmatpush2.msra.mxu0 0.0
    %1019 = vmatprep.subr.mxu0 0.0
    %1020 = vmatpush2.msra.mxu0 0.0
    %1021 = vmatprep.mubr.f32.mxu0 0.0
    %1022 = vmatmul.mubr.f32.gmra.mxu0 %v955
    %v1023 = vpop.f32.mrf.mxu0
    %v1024 = vadd.f32 0.0, %v1023
    %v1025 = vpop.f32.mrf.mxu0
    %1026 = vdwg.mxu0
    %1027 = vrot.lane.b32.xlu0 %v180, 120
    %v1028 = vpop.permute.xlu0 %1027
    %1029 = vrot.lane.b32.xlu0 %v253, 120
    %v1030 = vpop.permute.xlu0 %1029
    %v1031 = vsel %vm340, %v1028, 0
    %v1033 = vsel %vm340, %v1030, 0
    %1035 = vmatprep.subr.mxu0 0.0
    %1036 = vmatpush1.xpose.msra.mxu0 0.0
    %1037 = vmatprep.subr.mxu0 0.0
    %1038 = vmatpush1.xpose.msra.mxu0 0.0
    %1039 = vmatprep.subr.mxu0 0.0
    %1040 = vmatpush1.xpose.msra.mxu0 0.0
    %1041 = vmatprep.subr.mxu0 0.0
    %1042 = vmatpush1.xpose.msra.mxu0 0.0
    %1043 = vmatprep.subr.mxu0 0.0
    %1044 = vmatpush1.xpose.msra.mxu0 0.0
    %1045 = vmatprep.subr.mxu0 0.0
    %1046 = vmatpush1.xpose.msra.mxu0 0.0
    %1047 = vmatprep.subr.mxu0 0.0
    %1048 = vmatpush1.xpose.msra.mxu0 0.0
    %1049 = vmatprep.subr.mxu0 0.0
    %1050 = vmatpush1.xpose.msra.mxu0 0.0
    %1051 = vmatprep.subr.mxu0 0.0
    %1052 = vmatpush1.xpose.msra.mxu0 0.0
    %1053 = vmatprep.subr.mxu0 0.0
    %1054 = vmatpush1.xpose.msra.mxu0 0.0
    %1055 = vmatprep.subr.mxu0 0.0
    %1056 = vmatpush1.xpose.msra.mxu0 0.0
    %1057 = vmatprep.subr.mxu0 0.0
    %1058 = vmatpush1.xpose.msra.mxu0 0.0
    %1059 = vmatprep.subr.mxu0 0.0
    %1060 = vmatpush1.xpose.msra.mxu0 0.0
    %1061 = vmatprep.subr.mxu0 0.0
    %1062 = vmatpush1.xpose.msra.mxu0 0.0
    %1063 = vmatprep.subr.mxu0 0.0
    %1064 = vmatpush1.xpose.msra.mxu0 0.0
    %1065 = vmatprep.subr.mxu0 0.0
    %1066 = vmatpush1.xpose.msra.mxu0 %v1033
    %1067 = vmatprep.subr.mxu0 0.0
    %1068 = vmatpush2.xpose.msra.mxu0 0.0
    %1069 = vmatprep.subr.mxu0 0.0
    %1070 = vmatpush2.xpose.msra.mxu0 0.0
    %1071 = vmatprep.subr.mxu0 0.0
    %1072 = vmatpush2.xpose.msra.mxu0 0.0
    %1073 = vmatprep.subr.mxu0 0.0
    %1074 = vmatpush2.xpose.msra.mxu0 0.0
    %1075 = vmatprep.subr.mxu0 0.0
    %1076 = vmatpush2.xpose.msra.mxu0 0.0
    %1077 = vmatprep.subr.mxu0 0.0
    %1078 = vmatpush2.xpose.msra.mxu0 0.0
    %1079 = vmatprep.subr.mxu0 0.0
    %1080 = vmatpush2.xpose.msra.mxu0 0.0
    %1081 = vmatprep.subr.mxu0 0.0
    %1082 = vmatpush2.xpose.msra.mxu0 0.0
    %1083 = vmatprep.subr.mxu0 0.0
    %1084 = vmatpush2.xpose.msra.mxu0 0.0
    %1085 = vmatprep.subr.mxu0 0.0
    %1086 = vmatpush2.xpose.msra.mxu0 0.0
    %1087 = vmatprep.subr.mxu0 0.0
    %1088 = vmatpush2.xpose.msra.mxu0 0.0
    %1089 = vmatprep.subr.mxu0 0.0
    %1090 = vmatpush2.xpose.msra.mxu0 0.0
    %1091 = vmatprep.subr.mxu0 0.0
    %1092 = vmatpush2.xpose.msra.mxu0 0.0
    %1093 = vmatprep.subr.mxu0 0.0
    %1094 = vmatpush2.xpose.msra.mxu0 0.0
    %1095 = vmatprep.subr.mxu0 0.0
    %1096 = vmatpush2.xpose.msra.mxu0 0.0
    %1097 = vmatprep.subr.mxu0 0.0
    %1098 = vmatpush2.xpose.msra.mxu0 0.0
    %1099 = vmatprep.mubr.f32.mxu0 0.0
    %1100 = vmatmul.mubr.f32.gmra.mxu0 %v1031
    %v1101 = vpop.f32.mrf.mxu0
    %v1102 = vadd.f32 0.0, %v1101
    %v1103 = vpop.f32.mrf.mxu0
    %1104 = vdwg.mxu0
    %1105 = vrot.lane.b32.xlu0 %v181, 120
    %v1106 = vpop.permute.xlu0 %1105
    %1107 = vrot.lane.b32.xlu0 %v258, 120
    %v1108 = vpop.permute.xlu0 %1107
    %v1109 = vsel %vm340, %v1106, 0
    %v1111 = vsel %vm340, %v1108, 0
    %1113 = vmatprep.subr.mxu0 0.0
    %1114 = vmatpush1.xpose.msra.mxu0 0.0
    %1115 = vmatprep.subr.mxu0 0.0
    %1116 = vmatpush1.xpose.msra.mxu0 0.0
    %1117 = vmatprep.subr.mxu0 0.0
    %1118 = vmatpush1.xpose.msra.mxu0 0.0
    %1119 = vmatprep.subr.mxu0 0.0
    %1120 = vmatpush1.xpose.msra.mxu0 0.0
    %1121 = vmatprep.subr.mxu0 0.0
    %1122 = vmatpush1.xpose.msra.mxu0 0.0
    %1123 = vmatprep.subr.mxu0 0.0
    %1124 = vmatpush1.xpose.msra.mxu0 0.0
    %1125 = vmatprep.subr.mxu0 0.0
    %1126 = vmatpush1.xpose.msra.mxu0 0.0
    %1127 = vmatprep.subr.mxu0 0.0
    %1128 = vmatpush1.xpose.msra.mxu0 0.0
    %1129 = vmatprep.subr.mxu0 0.0
    %1130 = vmatpush1.xpose.msra.mxu0 0.0
    %1131 = vmatprep.subr.mxu0 0.0
    %1132 = vmatpush1.xpose.msra.mxu0 0.0
    %1133 = vmatprep.subr.mxu0 0.0
    %1134 = vmatpush1.xpose.msra.mxu0 0.0
    %1135 = vmatprep.subr.mxu0 0.0
    %1136 = vmatpush1.xpose.msra.mxu0 0.0
    %1137 = vmatprep.subr.mxu0 0.0
    %1138 = vmatpush1.xpose.msra.mxu0 0.0
    %1139 = vmatprep.subr.mxu0 0.0
    %1140 = vmatpush1.xpose.msra.mxu0 0.0
    %1141 = vmatprep.subr.mxu0 0.0
    %1142 = vmatpush1.xpose.msra.mxu0 0.0
    %1143 = vmatprep.subr.mxu0 0.0
    %1144 = vmatpush1.xpose.msra.mxu0 %v1111
    %1145 = vmatprep.subr.mxu0 0.0
    %1146 = vmatpush2.xpose.msra.mxu0 0.0
    %1147 = vmatprep.subr.mxu0 0.0
    %1148 = vmatpush2.xpose.msra.mxu0 0.0
    %1149 = vmatprep.subr.mxu0 0.0
    %1150 = vmatpush2.xpose.msra.mxu0 0.0
    %1151 = vmatprep.subr.mxu0 0.0
    %1152 = vmatpush2.xpose.msra.mxu0 0.0
    %1153 = vmatprep.subr.mxu0 0.0
    %1154 = vmatpush2.xpose.msra.mxu0 0.0
    %1155 = vmatprep.subr.mxu0 0.0
    %1156 = vmatpush2.xpose.msra.mxu0 0.0
    %1157 = vmatprep.subr.mxu0 0.0
    %1158 = vmatpush2.xpose.msra.mxu0 0.0
    %1159 = vmatprep.subr.mxu0 0.0
    %1160 = vmatpush2.xpose.msra.mxu0 0.0
    %1161 = vmatprep.subr.mxu0 0.0
    %1162 = vmatpush2.xpose.msra.mxu0 0.0
    %1163 = vmatprep.subr.mxu0 0.0
    %1164 = vmatpush2.xpose.msra.mxu0 0.0
    %1165 = vmatprep.subr.mxu0 0.0
    %1166 = vmatpush2.xpose.msra.mxu0 0.0
    %1167 = vmatprep.subr.mxu0 0.0
    %1168 = vmatpush2.xpose.msra.mxu0 0.0
    %1169 = vmatprep.subr.mxu0 0.0
    %1170 = vmatpush2.xpose.msra.mxu0 0.0
    %1171 = vmatprep.subr.mxu0 0.0
    %1172 = vmatpush2.xpose.msra.mxu0 0.0
    %1173 = vmatprep.subr.mxu0 0.0
    %1174 = vmatpush2.xpose.msra.mxu0 0.0
    %1175 = vmatprep.subr.mxu0 0.0
    %1176 = vmatpush2.xpose.msra.mxu0 0.0
    %1177 = vmatprep.mubr.f32.mxu0 0.0
    %1178 = vmatmul.mubr.f32.gmra.mxu0 %v1109
    %v1179 = vpop.f32.mrf.mxu0
    %v1180 = vadd.f32 0.0, %v1179
    %v1181 = vpop.f32.mrf.mxu0
    %1182 = vdwg.mxu0
    %v1183 = vsel %vm493, %v1102, -inf
    %1184 = vmax.xlane.f32.xlu0 %v1183
    %v1185 = vpop.xlane.xlu0 %1184
    %v1186 = vsel %vm493, %v1180, -inf
    %1187 = vmax.xlane.f32.xlu0 %v1186
    %v1188 = vpop.xlane.xlu0 %1187
    %v1189 = vsub.f32 %v1102, %v1185
    %v1190 = vsub.f32 %v1180, %v1188
    %v1191 = vmul.f32 %v1189, 1.442695
    %v1192 = vpow.pop %v1191
    %v1193 = vmul.f32 %v1190, 1.442695
    %v1194 = vpow.pop %v1193
    %v1195 = vsel %vm493, %v1192, 0.0
    %1196 = vadd.xlane.f32.xlu0 %v1195
    %v1197 = vpop.xlane.xlu0 %1196
    %v1198 = vsel %vm493, %v1194, 0.0
    %1199 = vadd.xlane.f32.xlu0 %v1198
    %v1200 = vpop.xlane.xlu0 %1199
    %v1201 = vrcp.pop %v1197
    %v1202 = vmul.f32 %v1192, %v1201
    %v1203 = vrcp.pop %v1200
    %v1204 = vmul.f32 %v1194, %v1203
    %v1205 = vsel %vm493, %v1202, 0.0
    %v1206 = vrot.slane %v1205, 4
    %v1207 = vadd.f32 %v1205, %v1206
    %v1208 = vrot.slane %v1207, 2
    %v1209 = vadd.f32 %v1207, %v1208
    %v1210 = vrot.slane %v1209, 1
    %v1211 = vadd.f32 %v1209, %v1210
    %v1212 = vsel %vm493, %v1204, 0.0
    %v1213 = vrot.slane %v1212, 4
    %v1214 = vadd.f32 %v1212, %v1213
    %v1215 = vrot.slane %v1214, 2
    %v1216 = vadd.f32 %v1214, %v1215
    %v1217 = vrot.slane %v1216, 1
    %v1218 = vadd.f32 %v1216, %v1217
    %v1219 = vmul.f32 %v1211, %v530
    %v1220 = vmul.f32 %v1218, %v530
    %1221 = vrot.lane.b32.xlu0 %v332, 120
    %v1222 = vpop.permute.xlu0 %1221
    %v1225 = vsel %vm493, %v1219, 0
    %1227 = vmatprep.subr.mxu0 0.0
    %1228 = vmatpush1.msra.mxu0 0.0
    %1229 = vmatprep.subr.mxu0 0.0
    %1230 = vmatpush1.msra.mxu0 0.0
    %1231 = vmatprep.subr.mxu0 0.0
    %1232 = vmatpush1.msra.mxu0 0.0
    %1233 = vmatprep.subr.mxu0 0.0
    %1234 = vmatpush1.msra.mxu0 0.0
    %1235 = vmatprep.subr.mxu0 0.0
    %1236 = vmatpush1.msra.mxu0 0.0
    %1237 = vmatprep.subr.mxu0 0.0
    %1238 = vmatpush1.msra.mxu0 0.0
    %1239 = vmatprep.subr.mxu0 0.0
    %1240 = vmatpush1.msra.mxu0 0.0
    %1241 = vmatprep.subr.mxu0 0.0
    %1242 = vmatpush1.msra.mxu0 0.0
    %1243 = vmatprep.subr.mxu0 0.0
    %1244 = vmatpush1.msra.mxu0 0.0
    %1245 = vmatprep.subr.mxu0 0.0
    %1246 = vmatpush1.msra.mxu0 0.0
    %1247 = vmatprep.subr.mxu0 0.0
    %1248 = vmatpush1.msra.mxu0 0.0
    %1249 = vmatprep.subr.mxu0 0.0
    %1250 = vmatpush1.msra.mxu0 0.0
    %1251 = vmatprep.subr.mxu0 0.0
    %1252 = vmatpush1.msra.mxu0 0.0
    %1253 = vmatprep.subr.mxu0 0.0
    %1254 = vmatpush1.msra.mxu0 0.0
    %1255 = vmatprep.subr.mxu0 0.0
    %1256 = vmatpush1.msra.mxu0 0.0
    %1257 = vmatprep.subr.mxu0 0.0
    %1258 = vmatpush1.msra.mxu0 %v1222
    %1259 = vmatprep.subr.mxu0 0.0
    %1260 = vmatpush2.msra.mxu0 0.0
    %1261 = vmatprep.subr.mxu0 0.0
    %1262 = vmatpush2.msra.mxu0 0.0
    %1263 = vmatprep.subr.mxu0 0.0
    %1264 = vmatpush2.msra.mxu0 0.0
    %1265 = vmatprep.subr.mxu0 0.0
    %1266 = vmatpush2.msra.mxu0 0.0
    %1267 = vmatprep.subr.mxu0 0.0
    %1268 = vmatpush2.msra.mxu0 0.0
    %1269 = vmatprep.subr.mxu0 0.0
    %1270 = vmatpush2.msra.mxu0 0.0
    %1271 = vmatprep.subr.mxu0 0.0
    %1272 = vmatpush2.msra.mxu0 0.0
    %1273 = vmatprep.subr.mxu0 0.0
    %1274 = vmatpush2.msra.mxu0 0.0
    %1275 = vmatprep.subr.mxu0 0.0
    %1276 = vmatpush2.msra.mxu0 0.0
    %1277 = vmatprep.subr.mxu0 0.0
    %1278 = vmatpush2.msra.mxu0 0.0
    %1279 = vmatprep.subr.mxu0 0.0
    %1280 = vmatpush2.msra.mxu0 0.0
    %1281 = vmatprep.subr.mxu0 0.0
    %1282 = vmatpush2.msra.mxu0 0.0
    %1283 = vmatprep.subr.mxu0 0.0
    %1284 = vmatpush2.msra.mxu0 0.0
    %1285 = vmatprep.subr.mxu0 0.0
    %1286 = vmatpush2.msra.mxu0 0.0
    %1287 = vmatprep.subr.mxu0 0.0
    %1288 = vmatpush2.msra.mxu0 0.0
    %1289 = vmatprep.subr.mxu0 0.0
    %1290 = vmatpush2.msra.mxu0 0.0
    %1291 = vmatprep.mubr.f32.mxu0 0.0
    %1292 = vmatmul.mubr.f32.gmra.mxu0 %v1225
    %v1293 = vpop.f32.mrf.mxu0
    %v1294 = vadd.f32 0.0, %v1293
    %v1295 = vpop.f32.mrf.mxu0
    %1296 = vdwg.mxu0
    %1297 = vrot.lane.b32.xlu0 %v337, 120
    %v1298 = vpop.permute.xlu0 %1297
    %v1301 = vsel %vm493, %v1220, 0
    %1303 = vmatprep.subr.mxu0 0.0
    %1304 = vmatpush1.msra.mxu0 0.0
    %1305 = vmatprep.subr.mxu0 0.0
    %1306 = vmatpush1.msra.mxu0 0.0
    %1307 = vmatprep.subr.mxu0 0.0
    %1308 = vmatpush1.msra.mxu0 0.0
    %1309 = vmatprep.subr.mxu0 0.0
    %1310 = vmatpush1.msra.mxu0 0.0
    %1311 = vmatprep.subr.mxu0 0.0
    %1312 = vmatpush1.msra.mxu0 0.0
    %1313 = vmatprep.subr.mxu0 0.0
    %1314 = vmatpush1.msra.mxu0 0.0
    %1315 = vmatprep.subr.mxu0 0.0
    %1316 = vmatpush1.msra.mxu0 0.0
    %1317 = vmatprep.subr.mxu0 0.0
    %1318 = vmatpush1.msra.mxu0 0.0
    %1319 = vmatprep.subr.mxu0 0.0
    %1320 = vmatpush1.msra.mxu0 0.0
    %1321 = vmatprep.subr.mxu0 0.0
    %1322 = vmatpush1.msra.mxu0 0.0
    %1323 = vmatprep.subr.mxu0 0.0
    %1324 = vmatpush1.msra.mxu0 0.0
    %1325 = vmatprep.subr.mxu0 0.0
    %1326 = vmatpush1.msra.mxu0 0.0
    %1327 = vmatprep.subr.mxu0 0.0
    %1328 = vmatpush1.msra.mxu0 0.0
    %1329 = vmatprep.subr.mxu0 0.0
    %1330 = vmatpush1.msra.mxu0 0.0
    %1331 = vmatprep.subr.mxu0 0.0
    %1332 = vmatpush1.msra.mxu0 0.0
    %1333 = vmatprep.subr.mxu0 0.0
    %1334 = vmatpush1.msra.mxu0 %v1298
    %1335 = vmatprep.subr.mxu0 0.0
    %1336 = vmatpush2.msra.mxu0 0.0
    %1337 = vmatprep.subr.mxu0 0.0
    %1338 = vmatpush2.msra.mxu0 0.0
    %1339 = vmatprep.subr.mxu0 0.0
    %1340 = vmatpush2.msra.mxu0 0.0
    %1341 = vmatprep.subr.mxu0 0.0
    %1342 = vmatpush2.msra.mxu0 0.0
    %1343 = vmatprep.subr.mxu0 0.0
    %1344 = vmatpush2.msra.mxu0 0.0
    %1345 = vmatprep.subr.mxu0 0.0
    %1346 = vmatpush2.msra.mxu0 0.0
    %1347 = vmatprep.subr.mxu0 0.0
    %1348 = vmatpush2.msra.mxu0 0.0
    %1349 = vmatprep.subr.mxu0 0.0
    %1350 = vmatpush2.msra.mxu0 0.0
    %1351 = vmatprep.subr.mxu0 0.0
    %1352 = vmatpush2.msra.mxu0 0.0
    %1353 = vmatprep.subr.mxu0 0.0
    %1354 = vmatpush2.msra.mxu0 0.0
    %1355 = vmatprep.subr.mxu0 0.0
    %1356 = vmatpush2.msra.mxu0 0.0
    %1357 = vmatprep.subr.mxu0 0.0
    %1358 = vmatpush2.msra.mxu0 0.0
    %1359 = vmatprep.subr.mxu0 0.0
    %1360 = vmatpush2.msra.mxu0 0.0
    %1361 = vmatprep.subr.mxu0 0.0
    %1362 = vmatpush2.msra.mxu0 0.0
    %1363 = vmatprep.subr.mxu0 0.0
    %1364 = vmatpush2.msra.mxu0 0.0
    %1365 = vmatprep.subr.mxu0 0.0
    %1366 = vmatpush2.msra.mxu0 0.0
    %1367 = vmatprep.mubr.f32.mxu0 0.0
    %1368 = vmatmul.mubr.f32.gmra.mxu0 %v1301
    %v1369 = vpop.f32.mrf.mxu0
    %v1370 = vadd.f32 0.0, %v1369
    %v1371 = vpop.f32.mrf.mxu0
    %1372 = vdwg.mxu0
    %1373 = vrot.lane.b32.xlu0 %v180, 116
    %v1374 = vpop.permute.xlu0 %1373
    %1375 = vrot.lane.b32.xlu0 %v253, 116
    %v1376 = vpop.permute.xlu0 %1375
    %v1377 = vsel %vm340, %v1374, 0
    %v1379 = vsel %vm340, %v1376, 0
    %1381 = vmatprep.subr.mxu0 0.0
    %1382 = vmatpush1.xpose.msra.mxu0 0.0
    %1383 = vmatprep.subr.mxu0 0.0
    %1384 = vmatpush1.xpose.msra.mxu0 0.0
    %1385 = vmatprep.subr.mxu0 0.0
    %1386 = vmatpush1.xpose.msra.mxu0 0.0
    %1387 = vmatprep.subr.mxu0 0.0
    %1388 = vmatpush1.xpose.msra.mxu0 0.0
    %1389 = vmatprep.subr.mxu0 0.0
    %1390 = vmatpush1.xpose.msra.mxu0 0.0
    %1391 = vmatprep.subr.mxu0 0.0
    %1392 = vmatpush1.xpose.msra.mxu0 0.0
    %1393 = vmatprep.subr.mxu0 0.0
    %1394 = vmatpush1.xpose.msra.mxu0 0.0
    %1395 = vmatprep.subr.mxu0 0.0
    %1396 = vmatpush1.xpose.msra.mxu0 0.0
    %1397 = vmatprep.subr.mxu0 0.0
    %1398 = vmatpush1.xpose.msra.mxu0 0.0
    %1399 = vmatprep.subr.mxu0 0.0
    %1400 = vmatpush1.xpose.msra.mxu0 0.0
    %1401 = vmatprep.subr.mxu0 0.0
    %1402 = vmatpush1.xpose.msra.mxu0 0.0
    %1403 = vmatprep.subr.mxu0 0.0
    %1404 = vmatpush1.xpose.msra.mxu0 0.0
    %1405 = vmatprep.subr.mxu0 0.0
    %1406 = vmatpush1.xpose.msra.mxu0 0.0
    %1407 = vmatprep.subr.mxu0 0.0
    %1408 = vmatpush1.xpose.msra.mxu0 0.0
    %1409 = vmatprep.subr.mxu0 0.0
    %1410 = vmatpush1.xpose.msra.mxu0 0.0
    %1411 = vmatprep.subr.mxu0 0.0
    %1412 = vmatpush1.xpose.msra.mxu0 %v1379
    %1413 = vmatprep.subr.mxu0 0.0
    %1414 = vmatpush2.xpose.msra.mxu0 0.0
    %1415 = vmatprep.subr.mxu0 0.0
    %1416 = vmatpush2.xpose.msra.mxu0 0.0
    %1417 = vmatprep.subr.mxu0 0.0
    %1418 = vmatpush2.xpose.msra.mxu0 0.0
    %1419 = vmatprep.subr.mxu0 0.0
    %1420 = vmatpush2.xpose.msra.mxu0 0.0
    %1421 = vmatprep.subr.mxu0 0.0
    %1422 = vmatpush2.xpose.msra.mxu0 0.0
    %1423 = vmatprep.subr.mxu0 0.0
    %1424 = vmatpush2.xpose.msra.mxu0 0.0
    %1425 = vmatprep.subr.mxu0 0.0
    %1426 = vmatpush2.xpose.msra.mxu0 0.0
    %1427 = vmatprep.subr.mxu0 0.0
    %1428 = vmatpush2.xpose.msra.mxu0 0.0
    %1429 = vmatprep.subr.mxu0 0.0
    %1430 = vmatpush2.xpose.msra.mxu0 0.0
    %1431 = vmatprep.subr.mxu0 0.0
    %1432 = vmatpush2.xpose.msra.mxu0 0.0
    %1433 = vmatprep.subr.mxu0 0.0
    %1434 = vmatpush2.xpose.msra.mxu0 0.0
    %1435 = vmatprep.subr.mxu0 0.0
    %1436 = vmatpush2.xpose.msra.mxu0 0.0
    %1437 = vmatprep.subr.mxu0 0.0
    %1438 = vmatpush2.xpose.msra.mxu0 0.0
    %1439 = vmatprep.subr.mxu0 0.0
    %1440 = vmatpush2.xpose.msra.mxu0 0.0
    %1441 = vmatprep.subr.mxu0 0.0
    %1442 = vmatpush2.xpose.msra.mxu0 0.0
    %1443 = vmatprep.subr.mxu0 0.0
    %1444 = vmatpush2.xpose.msra.mxu0 0.0
    %1445 = vmatprep.mubr.f32.mxu0 0.0
    %1446 = vmatmul.mubr.f32.gmra.mxu0 %v1377
    %v1447 = vpop.f32.mrf.mxu0
    %v1448 = vadd.f32 0.0, %v1447
    %v1449 = vpop.f32.mrf.mxu0
    %1450 = vdwg.mxu0
    %1451 = vrot.lane.b32.xlu0 %v181, 116
    %v1452 = vpop.permute.xlu0 %1451
    %1453 = vrot.lane.b32.xlu0 %v258, 116
    %v1454 = vpop.permute.xlu0 %1453
    %v1455 = vsel %vm340, %v1452, 0
    %v1457 = vsel %vm340, %v1454, 0
    %1459 = vmatprep.subr.mxu0 0.0
    %1460 = vmatpush1.xpose.msra.mxu0 0.0
    %1461 = vmatprep.subr.mxu0 0.0
    %1462 = vmatpush1.xpose.msra.mxu0 0.0
    %1463 = vmatprep.subr.mxu0 0.0
    %1464 = vmatpush1.xpose.msra.mxu0 0.0
    %1465 = vmatprep.subr.mxu0 0.0
    %1466 = vmatpush1.xpose.msra.mxu0 0.0
    %1467 = vmatprep.subr.mxu0 0.0
    %1468 = vmatpush1.xpose.msra.mxu0 0.0
    %1469 = vmatprep.subr.mxu0 0.0
    %1470 = vmatpush1.xpose.msra.mxu0 0.0
    %1471 = vmatprep.subr.mxu0 0.0
    %1472 = vmatpush1.xpose.msra.mxu0 0.0
    %1473 = vmatprep.subr.mxu0 0.0
    %1474 = vmatpush1.xpose.msra.mxu0 0.0
    %1475 = vmatprep.subr.mxu0 0.0
    %1476 = vmatpush1.xpose.msra.mxu0 0.0
    %1477 = vmatprep.subr.mxu0 0.0
    %1478 = vmatpush1.xpose.msra.mxu0 0.0
    %1479 = vmatprep.subr.mxu0 0.0
    %1480 = vmatpush1.xpose.msra.mxu0 0.0
    %1481 = vmatprep.subr.mxu0 0.0
    %1482 = vmatpush1.xpose.msra.mxu0 0.0
    %1483 = vmatprep.subr.mxu0 0.0
    %1484 = vmatpush1.xpose.msra.mxu0 0.0
    %1485 = vmatprep.subr.mxu0 0.0
    %1486 = vmatpush1.xpose.msra.mxu0 0.0
    %1487 = vmatprep.subr.mxu0 0.0
    %1488 = vmatpush1.xpose.msra.mxu0 0.0
    %1489 = vmatprep.subr.mxu0 0.0
    %1490 = vmatpush1.xpose.msra.mxu0 %v1457
    %1491 = vmatprep.subr.mxu0 0.0
    %1492 = vmatpush2.xpose.msra.mxu0 0.0
    %1493 = vmatprep.subr.mxu0 0.0
    %1494 = vmatpush2.xpose.msra.mxu0 0.0
    %1495 = vmatprep.subr.mxu0 0.0
    %1496 = vmatpush2.xpose.msra.mxu0 0.0
    %1497 = vmatprep.subr.mxu0 0.0
    %1498 = vmatpush2.xpose.msra.mxu0 0.0
    %1499 = vmatprep.subr.mxu0 0.0
    %1500 = vmatpush2.xpose.msra.mxu0 0.0
    %1501 = vmatprep.subr.mxu0 0.0
    %1502 = vmatpush2.xpose.msra.mxu0 0.0
    %1503 = vmatprep.subr.mxu0 0.0
    %1504 = vmatpush2.xpose.msra.mxu0 0.0
    %1505 = vmatprep.subr.mxu0 0.0
    %1506 = vmatpush2.xpose.msra.mxu0 0.0
    %1507 = vmatprep.subr.mxu0 0.0
    %1508 = vmatpush2.xpose.msra.mxu0 0.0
    %1509 = vmatprep.subr.mxu0 0.0
    %1510 = vmatpush2.xpose.msra.mxu0 0.0
    %1511 = vmatprep.subr.mxu0 0.0
    %1512 = vmatpush2.xpose.msra.mxu0 0.0
    %1513 = vmatprep.subr.mxu0 0.0
    %1514 = vmatpush2.xpose.msra.mxu0 0.0
    %1515 = vmatprep.subr.mxu0 0.0
    %1516 = vmatpush2.xpose.msra.mxu0 0.0
    %1517 = vmatprep.subr.mxu0 0.0
    %1518 = vmatpush2.xpose.msra.mxu0 0.0
    %1519 = vmatprep.subr.mxu0 0.0
    %1520 = vmatpush2.xpose.msra.mxu0 0.0
    %1521 = vmatprep.subr.mxu0 0.0
    %1522 = vmatpush2.xpose.msra.mxu0 0.0
    %1523 = vmatprep.mubr.f32.mxu0 0.0
    %1524 = vmatmul.mubr.f32.gmra.mxu0 %v1455
    %v1525 = vpop.f32.mrf.mxu0
    %v1526 = vadd.f32 0.0, %v1525
    %v1527 = vpop.f32.mrf.mxu0
    %1528 = vdwg.mxu0
    %v1529 = vsel %vm493, %v1448, -inf
    %1530 = vmax.xlane.f32.xlu0 %v1529
    %v1531 = vpop.xlane.xlu0 %1530
    %v1532 = vsel %vm493, %v1526, -inf
    %1533 = vmax.xlane.f32.xlu0 %v1532
    %v1534 = vpop.xlane.xlu0 %1533
    %v1535 = vsub.f32 %v1448, %v1531
    %v1536 = vsub.f32 %v1526, %v1534
    %v1537 = vmul.f32 %v1535, 1.442695
    %v1538 = vpow.pop %v1537
    %v1539 = vmul.f32 %v1536, 1.442695
    %v1540 = vpow.pop %v1539
    %v1541 = vsel %vm493, %v1538, 0.0
    %1542 = vadd.xlane.f32.xlu0 %v1541
    %v1543 = vpop.xlane.xlu0 %1542
    %v1544 = vsel %vm493, %v1540, 0.0
    %1545 = vadd.xlane.f32.xlu0 %v1544
    %v1546 = vpop.xlane.xlu0 %1545
    %v1547 = vrcp.pop %v1543
    %v1548 = vmul.f32 %v1538, %v1547
    %v1549 = vrcp.pop %v1546
    %v1550 = vmul.f32 %v1540, %v1549
    %v1551 = vsel %vm493, %v1548, 0.0
    %v1552 = vrot.slane %v1551, 4
    %v1553 = vadd.f32 %v1551, %v1552
    %v1554 = vrot.slane %v1553, 2
    %v1555 = vadd.f32 %v1553, %v1554
    %v1556 = vrot.slane %v1555, 1
    %v1557 = vadd.f32 %v1555, %v1556
    %v1558 = vsel %vm493, %v1550, 0.0
    %v1559 = vrot.slane %v1558, 4
    %v1560 = vadd.f32 %v1558, %v1559
    %v1561 = vrot.slane %v1560, 2
    %v1562 = vadd.f32 %v1560, %v1561
    %v1563 = vrot.slane %v1562, 1
    %v1564 = vadd.f32 %v1562, %v1563
    %v1565 = vmul.f32 %v1557, %v530
    %v1566 = vmul.f32 %v1564, %v530
    %1567 = vrot.lane.b32.xlu0 %v332, 116
    %v1568 = vpop.permute.xlu0 %1567
    %v1571 = vsel %vm493, %v1565, 0
    %1573 = vmatprep.subr.mxu0 0.0
    %1574 = vmatpush1.msra.mxu0 0.0
    %1575 = vmatprep.subr.mxu0 0.0
    %1576 = vmatpush1.msra.mxu0 0.0
    %1577 = vmatprep.subr.mxu0 0.0
    %1578 = vmatpush1.msra.mxu0 0.0
    %1579 = vmatprep.subr.mxu0 0.0
    %1580 = vmatpush1.msra.mxu0 0.0
    %1581 = vmatprep.subr.mxu0 0.0
    %1582 = vmatpush1.msra.mxu0 0.0
    %1583 = vmatprep.subr.mxu0 0.0
    %1584 = vmatpush1.msra.mxu0 0.0
    %1585 = vmatprep.subr.mxu0 0.0
    %1586 = vmatpush1.msra.mxu0 0.0
    %1587 = vmatprep.subr.mxu0 0.0
    %1588 = vmatpush1.msra.mxu0 0.0
    %1589 = vmatprep.subr.mxu0 0.0
    %1590 = vmatpush1.msra.mxu0 0.0
    %1591 = vmatprep.subr.mxu0 0.0
    %1592 = vmatpush1.msra.mxu0 0.0
    %1593 = vmatprep.subr.mxu0 0.0
    %1594 = vmatpush1.msra.mxu0 0.0
    %1595 = vmatprep.subr.mxu0 0.0
    %1596 = vmatpush1.msra.mxu0 0.0
    %1597 = vmatprep.subr.mxu0 0.0
    %1598 = vmatpush1.msra.mxu0 0.0
    %1599 = vmatprep.subr.mxu0 0.0
    %1600 = vmatpush1.msra.mxu0 0.0
    %1601 = vmatprep.subr.mxu0 0.0
    %1602 = vmatpush1.msra.mxu0 0.0
    %1603 = vmatprep.subr.mxu0 0.0
    %1604 = vmatpush1.msra.mxu0 %v1568
    %1605 = vmatprep.subr.mxu0 0.0
    %1606 = vmatpush2.msra.mxu0 0.0
    %1607 = vmatprep.subr.mxu0 0.0
    %1608 = vmatpush2.msra.mxu0 0.0
    %1609 = vmatprep.subr.mxu0 0.0
    %1610 = vmatpush2.msra.mxu0 0.0
    %1611 = vmatprep.subr.mxu0 0.0
    %1612 = vmatpush2.msra.mxu0 0.0
    %1613 = vmatprep.subr.mxu0 0.0
    %1614 = vmatpush2.msra.mxu0 0.0
    %1615 = vmatprep.subr.mxu0 0.0
    %1616 = vmatpush2.msra.mxu0 0.0
    %1617 = vmatprep.subr.mxu0 0.0
    %1618 = vmatpush2.msra.mxu0 0.0
    %1619 = vmatprep.subr.mxu0 0.0
    %1620 = vmatpush2.msra.mxu0 0.0
    %1621 = vmatprep.subr.mxu0 0.0
    %1622 = vmatpush2.msra.mxu0 0.0
    %1623 = vmatprep.subr.mxu0 0.0
    %1624 = vmatpush2.msra.mxu0 0.0
    %1625 = vmatprep.subr.mxu0 0.0
    %1626 = vmatpush2.msra.mxu0 0.0
    %1627 = vmatprep.subr.mxu0 0.0
    %1628 = vmatpush2.msra.mxu0 0.0
    %1629 = vmatprep.subr.mxu0 0.0
    %1630 = vmatpush2.msra.mxu0 0.0
    %1631 = vmatprep.subr.mxu0 0.0
    %1632 = vmatpush2.msra.mxu0 0.0
    %1633 = vmatprep.subr.mxu0 0.0
    %1634 = vmatpush2.msra.mxu0 0.0
    %1635 = vmatprep.subr.mxu0 0.0
    %1636 = vmatpush2.msra.mxu0 0.0
    %1637 = vmatprep.mubr.f32.mxu0 0.0
    %1638 = vmatmul.mubr.f32.gmra.mxu0 %v1571
    %v1639 = vpop.f32.mrf.mxu0
    %v1640 = vadd.f32 0.0, %v1639
    %v1641 = vpop.f32.mrf.mxu0
    %1642 = vdwg.mxu0
    %1643 = vrot.lane.b32.xlu0 %v337, 116
    %v1644 = vpop.permute.xlu0 %1643
    %v1647 = vsel %vm493, %v1566, 0
    %1649 = vmatprep.subr.mxu0 0.0
    %1650 = vmatpush1.msra.mxu0 0.0
    %1651 = vmatprep.subr.mxu0 0.0
    %1652 = vmatpush1.msra.mxu0 0.0
    %1653 = vmatprep.subr.mxu0 0.0
    %1654 = vmatpush1.msra.mxu0 0.0
    %1655 = vmatprep.subr.mxu0 0.0
    %1656 = vmatpush1.msra.mxu0 0.0
    %1657 = vmatprep.subr.mxu0 0.0
    %1658 = vmatpush1.msra.mxu0 0.0
    %1659 = vmatprep.subr.mxu0 0.0
    %1660 = vmatpush1.msra.mxu0 0.0
    %1661 = vmatprep.subr.mxu0 0.0
    %1662 = vmatpush1.msra.mxu0 0.0
    %1663 = vmatprep.subr.mxu0 0.0
    %1664 = vmatpush1.msra.mxu0 0.0
    %1665 = vmatprep.subr.mxu0 0.0
    %1666 = vmatpush1.msra.mxu0 0.0
    %1667 = vmatprep.subr.mxu0 0.0
    %1668 = vmatpush1.msra.mxu0 0.0
    %1669 = vmatprep.subr.mxu0 0.0
    %1670 = vmatpush1.msra.mxu0 0.0
    %1671 = vmatprep.subr.mxu0 0.0
    %1672 = vmatpush1.msra.mxu0 0.0
    %1673 = vmatprep.subr.mxu0 0.0
    %1674 = vmatpush1.msra.mxu0 0.0
    %1675 = vmatprep.subr.mxu0 0.0
    %1676 = vmatpush1.msra.mxu0 0.0
    %1677 = vmatprep.subr.mxu0 0.0
    %1678 = vmatpush1.msra.mxu0 0.0
    %1679 = vmatprep.subr.mxu0 0.0
    %1680 = vmatpush1.msra.mxu0 %v1644
    %1681 = vmatprep.subr.mxu0 0.0
    %1682 = vmatpush2.msra.mxu0 0.0
    %1683 = vmatprep.subr.mxu0 0.0
    %1684 = vmatpush2.msra.mxu0 0.0
    %1685 = vmatprep.subr.mxu0 0.0
    %1686 = vmatpush2.msra.mxu0 0.0
    %1687 = vmatprep.subr.mxu0 0.0
    %1688 = vmatpush2.msra.mxu0 0.0
    %1689 = vmatprep.subr.mxu0 0.0
    %1690 = vmatpush2.msra.mxu0 0.0
    %1691 = vmatprep.subr.mxu0 0.0
    %1692 = vmatpush2.msra.mxu0 0.0
    %1693 = vmatprep.subr.mxu0 0.0
    %1694 = vmatpush2.msra.mxu0 0.0
    %1695 = vmatprep.subr.mxu0 0.0
    %1696 = vmatpush2.msra.mxu0 0.0
    %1697 = vmatprep.subr.mxu0 0.0
    %1698 = vmatpush2.msra.mxu0 0.0
    %1699 = vmatprep.subr.mxu0 0.0
    %1700 = vmatpush2.msra.mxu0 0.0
    %1701 = vmatprep.subr.mxu0 0.0
    %1702 = vmatpush2.msra.mxu0 0.0
    %1703 = vmatprep.subr.mxu0 0.0
    %1704 = vmatpush2.msra.mxu0 0.0
    %1705 = vmatprep.subr.mxu0 0.0
    %1706 = vmatpush2.msra.mxu0 0.0
    %1707 = vmatprep.subr.mxu0 0.0
    %1708 = vmatpush2.msra.mxu0 0.0
    %1709 = vmatprep.subr.mxu0 0.0
    %1710 = vmatpush2.msra.mxu0 0.0
    %1711 = vmatprep.subr.mxu0 0.0
    %1712 = vmatpush2.msra.mxu0 0.0
    %1713 = vmatprep.mubr.f32.mxu0 0.0
    %1714 = vmatmul.mubr.f32.gmra.mxu0 %v1647
    %v1715 = vpop.f32.mrf.mxu0
    %v1716 = vadd.f32 0.0, %v1715
    %v1717 = vpop.f32.mrf.mxu0
    %1718 = vdwg.mxu0
    %1719 = vrot.lane.b32.xlu0 %v180, 112
    %v1720 = vpop.permute.xlu0 %1719
    %1721 = vrot.lane.b32.xlu0 %v253, 112
    %v1722 = vpop.permute.xlu0 %1721
    %v1723 = vsel %vm340, %v1720, 0
    %v1725 = vsel %vm340, %v1722, 0
    %1727 = vmatprep.subr.mxu0 0.0
    %1728 = vmatpush1.xpose.msra.mxu0 0.0
    %1729 = vmatprep.subr.mxu0 0.0
    %1730 = vmatpush1.xpose.msra.mxu0 0.0
    %1731 = vmatprep.subr.mxu0 0.0
    %1732 = vmatpush1.xpose.msra.mxu0 0.0
    %1733 = vmatprep.subr.mxu0 0.0
    %1734 = vmatpush1.xpose.msra.mxu0 0.0
    %1735 = vmatprep.subr.mxu0 0.0
    %1736 = vmatpush1.xpose.msra.mxu0 0.0
    %1737 = vmatprep.subr.mxu0 0.0
    %1738 = vmatpush1.xpose.msra.mxu0 0.0
    %1739 = vmatprep.subr.mxu0 0.0
    %1740 = vmatpush1.xpose.msra.mxu0 0.0
    %1741 = vmatprep.subr.mxu0 0.0
    %1742 = vmatpush1.xpose.msra.mxu0 0.0
    %1743 = vmatprep.subr.mxu0 0.0
    %1744 = vmatpush1.xpose.msra.mxu0 0.0
    %1745 = vmatprep.subr.mxu0 0.0
    %1746 = vmatpush1.xpose.msra.mxu0 0.0
    %1747 = vmatprep.subr.mxu0 0.0
    %1748 = vmatpush1.xpose.msra.mxu0 0.0
    %1749 = vmatprep.subr.mxu0 0.0
    %1750 = vmatpush1.xpose.msra.mxu0 0.0
    %1751 = vmatprep.subr.mxu0 0.0
    %1752 = vmatpush1.xpose.msra.mxu0 0.0
    %1753 = vmatprep.subr.mxu0 0.0
    %1754 = vmatpush1.xpose.msra.mxu0 0.0
    %1755 = vmatprep.subr.mxu0 0.0
    %1756 = vmatpush1.xpose.msra.mxu0 0.0
    %1757 = vmatprep.subr.mxu0 0.0
    %1758 = vmatpush1.xpose.msra.mxu0 %v1725
    %1759 = vmatprep.subr.mxu0 0.0
    %1760 = vmatpush2.xpose.msra.mxu0 0.0
    %1761 = vmatprep.subr.mxu0 0.0
    %1762 = vmatpush2.xpose.msra.mxu0 0.0
    %1763 = vmatprep.subr.mxu0 0.0
    %1764 = vmatpush2.xpose.msra.mxu0 0.0
    %1765 = vmatprep.subr.mxu0 0.0
    %1766 = vmatpush2.xpose.msra.mxu0 0.0
    %1767 = vmatprep.subr.mxu0 0.0
    %1768 = vmatpush2.xpose.msra.mxu0 0.0
    %1769 = vmatprep.subr.mxu0 0.0
    %1770 = vmatpush2.xpose.msra.mxu0 0.0
    %1771 = vmatprep.subr.mxu0 0.0
    %1772 = vmatpush2.xpose.msra.mxu0 0.0
    %1773 = vmatprep.subr.mxu0 0.0
    %1774 = vmatpush2.xpose.msra.mxu0 0.0
    %1775 = vmatprep.subr.mxu0 0.0
    %1776 = vmatpush2.xpose.msra.mxu0 0.0
    %1777 = vmatprep.subr.mxu0 0.0
    %1778 = vmatpush2.xpose.msra.mxu0 0.0
    %1779 = vmatprep.subr.mxu0 0.0
    %1780 = vmatpush2.xpose.msra.mxu0 0.0
    %1781 = vmatprep.subr.mxu0 0.0
    %1782 = vmatpush2.xpose.msra.mxu0 0.0
    %1783 = vmatprep.subr.mxu0 0.0
    %1784 = vmatpush2.xpose.msra.mxu0 0.0
    %1785 = vmatprep.subr.mxu0 0.0
    %1786 = vmatpush2.xpose.msra.mxu0 0.0
    %1787 = vmatprep.subr.mxu0 0.0
    %1788 = vmatpush2.xpose.msra.mxu0 0.0
    %1789 = vmatprep.subr.mxu0 0.0
    %1790 = vmatpush2.xpose.msra.mxu0 0.0
    %1791 = vmatprep.mubr.f32.mxu0 0.0
    %1792 = vmatmul.mubr.f32.gmra.mxu0 %v1723
    %v1793 = vpop.f32.mrf.mxu0
    %v1794 = vadd.f32 0.0, %v1793
    %v1795 = vpop.f32.mrf.mxu0
    %1796 = vdwg.mxu0
    %1797 = vrot.lane.b32.xlu0 %v181, 112
    %v1798 = vpop.permute.xlu0 %1797
    %1799 = vrot.lane.b32.xlu0 %v258, 112
    %v1800 = vpop.permute.xlu0 %1799
    %v1801 = vsel %vm340, %v1798, 0
    %v1803 = vsel %vm340, %v1800, 0
    %1805 = vmatprep.subr.mxu0 0.0
    %1806 = vmatpush1.xpose.msra.mxu0 0.0
    %1807 = vmatprep.subr.mxu0 0.0
    %1808 = vmatpush1.xpose.msra.mxu0 0.0
    %1809 = vmatprep.subr.mxu0 0.0
    %1810 = vmatpush1.xpose.msra.mxu0 0.0
    %1811 = vmatprep.subr.mxu0 0.0
    %1812 = vmatpush1.xpose.msra.mxu0 0.0
    %1813 = vmatprep.subr.mxu0 0.0
    %1814 = vmatpush1.xpose.msra.mxu0 0.0
    %1815 = vmatprep.subr.mxu0 0.0
    %1816 = vmatpush1.xpose.msra.mxu0 0.0
    %1817 = vmatprep.subr.mxu0 0.0
    %1818 = vmatpush1.xpose.msra.mxu0 0.0
    %1819 = vmatprep.subr.mxu0 0.0
    %1820 = vmatpush1.xpose.msra.mxu0 0.0
    %1821 = vmatprep.subr.mxu0 0.0
    %1822 = vmatpush1.xpose.msra.mxu0 0.0
    %1823 = vmatprep.subr.mxu0 0.0
    %1824 = vmatpush1.xpose.msra.mxu0 0.0
    %1825 = vmatprep.subr.mxu0 0.0
    %1826 = vmatpush1.xpose.msra.mxu0 0.0
    %1827 = vmatprep.subr.mxu0 0.0
    %1828 = vmatpush1.xpose.msra.mxu0 0.0
    %1829 = vmatprep.subr.mxu0 0.0
    %1830 = vmatpush1.xpose.msra.mxu0 0.0
    %1831 = vmatprep.subr.mxu0 0.0
    %1832 = vmatpush1.xpose.msra.mxu0 0.0
    %1833 = vmatprep.subr.mxu0 0.0
    %1834 = vmatpush1.xpose.msra.mxu0 0.0
    %1835 = vmatprep.subr.mxu0 0.0
    %1836 = vmatpush1.xpose.msra.mxu0 %v1803
    %1837 = vmatprep.subr.mxu0 0.0
    %1838 = vmatpush2.xpose.msra.mxu0 0.0
    %1839 = vmatprep.subr.mxu0 0.0
    %1840 = vmatpush2.xpose.msra.mxu0 0.0
    %1841 = vmatprep.subr.mxu0 0.0
    %1842 = vmatpush2.xpose.msra.mxu0 0.0
    %1843 = vmatprep.subr.mxu0 0.0
    %1844 = vmatpush2.xpose.msra.mxu0 0.0
    %1845 = vmatprep.subr.mxu0 0.0
    %1846 = vmatpush2.xpose.msra.mxu0 0.0
    %1847 = vmatprep.subr.mxu0 0.0
    %1848 = vmatpush2.xpose.msra.mxu0 0.0
    %1849 = vmatprep.subr.mxu0 0.0
    %1850 = vmatpush2.xpose.msra.mxu0 0.0
    %1851 = vmatprep.subr.mxu0 0.0
    %1852 = vmatpush2.xpose.msra.mxu0 0.0
    %1853 = vmatprep.subr.mxu0 0.0
    %1854 = vmatpush2.xpose.msra.mxu0 0.0
    %1855 = vmatprep.subr.mxu0 0.0
    %1856 = vmatpush2.xpose.msra.mxu0 0.0
    %1857 = vmatprep.subr.mxu0 0.0
    %1858 = vmatpush2.xpose.msra.mxu0 0.0
    %1859 = vmatprep.subr.mxu0 0.0
    %1860 = vmatpush2.xpose.msra.mxu0 0.0
    %1861 = vmatprep.subr.mxu0 0.0
    %1862 = vmatpush2.xpose.msra.mxu0 0.0
    %1863 = vmatprep.subr.mxu0 0.0
    %1864 = vmatpush2.xpose.msra.mxu0 0.0
    %1865 = vmatprep.subr.mxu0 0.0
    %1866 = vmatpush2.xpose.msra.mxu0 0.0
    %1867 = vmatprep.subr.mxu0 0.0
    %1868 = vmatpush2.xpose.msra.mxu0 0.0
    %1869 = vmatprep.mubr.f32.mxu0 0.0
    %1870 = vmatmul.mubr.f32.gmra.mxu0 %v1801
    %v1871 = vpop.f32.mrf.mxu0
    %v1872 = vadd.f32 0.0, %v1871
    %v1873 = vpop.f32.mrf.mxu0
    %1874 = vdwg.mxu0
    %v1875 = vsel %vm493, %v1794, -inf
    %1876 = vmax.xlane.f32.xlu0 %v1875
    %v1877 = vpop.xlane.xlu0 %1876
    %v1878 = vsel %vm493, %v1872, -inf
    %1879 = vmax.xlane.f32.xlu0 %v1878
    %v1880 = vpop.xlane.xlu0 %1879
    %v1881 = vsub.f32 %v1794, %v1877
    %v1882 = vsub.f32 %v1872, %v1880
    %v1883 = vmul.f32 %v1881, 1.442695
    %v1884 = vpow.pop %v1883
    %v1885 = vmul.f32 %v1882, 1.442695
    %v1886 = vpow.pop %v1885
    %v1887 = vsel %vm493, %v1884, 0.0
    %1888 = vadd.xlane.f32.xlu0 %v1887
    %v1889 = vpop.xlane.xlu0 %1888
    %v1890 = vsel %vm493, %v1886, 0.0
    %1891 = vadd.xlane.f32.xlu0 %v1890
    %v1892 = vpop.xlane.xlu0 %1891
    %v1893 = vrcp.pop %v1889
    %v1894 = vmul.f32 %v1884, %v1893
    %v1895 = vrcp.pop %v1892
    %v1896 = vmul.f32 %v1886, %v1895
    %v1897 = vsel %vm493, %v1894, 0.0
    %v1898 = vrot.slane %v1897, 4
    %v1899 = vadd.f32 %v1897, %v1898
    %v1900 = vrot.slane %v1899, 2
    %v1901 = vadd.f32 %v1899, %v1900
    %v1902 = vrot.slane %v1901, 1
    %v1903 = vadd.f32 %v1901, %v1902
    %v1904 = vsel %vm493, %v1896, 0.0
    %v1905 = vrot.slane %v1904, 4
    %v1906 = vadd.f32 %v1904, %v1905
    %v1907 = vrot.slane %v1906, 2
    %v1908 = vadd.f32 %v1906, %v1907
    %v1909 = vrot.slane %v1908, 1
    %v1910 = vadd.f32 %v1908, %v1909
    %v1911 = vmul.f32 %v1903, %v530
    %v1912 = vmul.f32 %v1910, %v530
    %1913 = vrot.lane.b32.xlu0 %v332, 112
    %v1914 = vpop.permute.xlu0 %1913
    %v1917 = vsel %vm493, %v1911, 0
    %1919 = vmatprep.subr.mxu0 0.0
    %1920 = vmatpush1.msra.mxu0 0.0
    %1921 = vmatprep.subr.mxu0 0.0
    %1922 = vmatpush1.msra.mxu0 0.0
    %1923 = vmatprep.subr.mxu0 0.0
    %1924 = vmatpush1.msra.mxu0 0.0
    %1925 = vmatprep.subr.mxu0 0.0
    %1926 = vmatpush1.msra.mxu0 0.0
    %1927 = vmatprep.subr.mxu0 0.0
    %1928 = vmatpush1.msra.mxu0 0.0
    %1929 = vmatprep.subr.mxu0 0.0
    %1930 = vmatpush1.msra.mxu0 0.0
    %1931 = vmatprep.subr.mxu0 0.0
    %1932 = vmatpush1.msra.mxu0 0.0
    %1933 = vmatprep.subr.mxu0 0.0
    %1934 = vmatpush1.msra.mxu0 0.0
    %1935 = vmatprep.subr.mxu0 0.0
    %1936 = vmatpush1.msra.mxu0 0.0
    %1937 = vmatprep.subr.mxu0 0.0
    %1938 = vmatpush1.msra.mxu0 0.0
    %1939 = vmatprep.subr.mxu0 0.0
    %1940 = vmatpush1.msra.mxu0 0.0
    %1941 = vmatprep.subr.mxu0 0.0
    %1942 = vmatpush1.msra.mxu0 0.0
    %1943 = vmatprep.subr.mxu0 0.0
    %1944 = vmatpush1.msra.mxu0 0.0
    %1945 = vmatprep.subr.mxu0 0.0
    %1946 = vmatpush1.msra.mxu0 0.0
    %1947 = vmatprep.subr.mxu0 0.0
    %1948 = vmatpush1.msra.mxu0 0.0
    %1949 = vmatprep.subr.mxu0 0.0
    %1950 = vmatpush1.msra.mxu0 %v1914
    %1951 = vmatprep.subr.mxu0 0.0
    %1952 = vmatpush2.msra.mxu0 0.0
    %1953 = vmatprep.subr.mxu0 0.0
    %1954 = vmatpush2.msra.mxu0 0.0
    %1955 = vmatprep.subr.mxu0 0.0
    %1956 = vmatpush2.msra.mxu0 0.0
    %1957 = vmatprep.subr.mxu0 0.0
    %1958 = vmatpush2.msra.mxu0 0.0
    %1959 = vmatprep.subr.mxu0 0.0
    %1960 = vmatpush2.msra.mxu0 0.0
    %1961 = vmatprep.subr.mxu0 0.0
    %1962 = vmatpush2.msra.mxu0 0.0
    %1963 = vmatprep.subr.mxu0 0.0
    %1964 = vmatpush2.msra.mxu0 0.0
    %1965 = vmatprep.subr.mxu0 0.0
    %1966 = vmatpush2.msra.mxu0 0.0
    %1967 = vmatprep.subr.mxu0 0.0
    %1968 = vmatpush2.msra.mxu0 0.0
    %1969 = vmatprep.subr.mxu0 0.0
    %1970 = vmatpush2.msra.mxu0 0.0
    %1971 = vmatprep.subr.mxu0 0.0
    %1972 = vmatpush2.msra.mxu0 0.0
    %1973 = vmatprep.subr.mxu0 0.0
    %1974 = vmatpush2.msra.mxu0 0.0
    %1975 = vmatprep.subr.mxu0 0.0
    %1976 = vmatpush2.msra.mxu0 0.0
    %1977 = vmatprep.subr.mxu0 0.0
    %1978 = vmatpush2.msra.mxu0 0.0
    %1979 = vmatprep.subr.mxu0 0.0
    %1980 = vmatpush2.msra.mxu0 0.0
    %1981 = vmatprep.subr.mxu0 0.0
    %1982 = vmatpush2.msra.mxu0 0.0
    %1983 = vmatprep.mubr.f32.mxu0 0.0
    %1984 = vmatmul.mubr.f32.gmra.mxu0 %v1917
    %v1985 = vpop.f32.mrf.mxu0
    %v1986 = vadd.f32 0.0, %v1985
    %v1987 = vpop.f32.mrf.mxu0
    %1988 = vdwg.mxu0
    %1989 = vrot.lane.b32.xlu0 %v337, 112
    %v1990 = vpop.permute.xlu0 %1989
    %v1993 = vsel %vm493, %v1912, 0
    %1995 = vmatprep.subr.mxu0 0.0
    %1996 = vmatpush1.msra.mxu0 0.0
    %1997 = vmatprep.subr.mxu0 0.0
    %1998 = vmatpush1.msra.mxu0 0.0
    %1999 = vmatprep.subr.mxu0 0.0
    %2000 = vmatpush1.msra.mxu0 0.0
    %2001 = vmatprep.subr.mxu0 0.0
    %2002 = vmatpush1.msra.mxu0 0.0
    %2003 = vmatprep.subr.mxu0 0.0
    %2004 = vmatpush1.msra.mxu0 0.0
    %2005 = vmatprep.subr.mxu0 0.0
    %2006 = vmatpush1.msra.mxu0 0.0
    %2007 = vmatprep.subr.mxu0 0.0
    %2008 = vmatpush1.msra.mxu0 0.0
    %2009 = vmatprep.subr.mxu0 0.0
    %2010 = vmatpush1.msra.mxu0 0.0
    %2011 = vmatprep.subr.mxu0 0.0
    %2012 = vmatpush1.msra.mxu0 0.0
    %2013 = vmatprep.subr.mxu0 0.0
    %2014 = vmatpush1.msra.mxu0 0.0
    %2015 = vmatprep.subr.mxu0 0.0
    %2016 = vmatpush1.msra.mxu0 0.0
    %2017 = vmatprep.subr.mxu0 0.0
    %2018 = vmatpush1.msra.mxu0 0.0
    %2019 = vmatprep.subr.mxu0 0.0
    %2020 = vmatpush1.msra.mxu0 0.0
    %2021 = vmatprep.subr.mxu0 0.0
    %2022 = vmatpush1.msra.mxu0 0.0
    %2023 = vmatprep.subr.mxu0 0.0
    %2024 = vmatpush1.msra.mxu0 0.0
    %2025 = vmatprep.subr.mxu0 0.0
    %2026 = vmatpush1.msra.mxu0 %v1990
    %2027 = vmatprep.subr.mxu0 0.0
    %2028 = vmatpush2.msra.mxu0 0.0
    %2029 = vmatprep.subr.mxu0 0.0
    %2030 = vmatpush2.msra.mxu0 0.0
    %2031 = vmatprep.subr.mxu0 0.0
    %2032 = vmatpush2.msra.mxu0 0.0
    %2033 = vmatprep.subr.mxu0 0.0
    %2034 = vmatpush2.msra.mxu0 0.0
    %2035 = vmatprep.subr.mxu0 0.0
    %2036 = vmatpush2.msra.mxu0 0.0
    %2037 = vmatprep.subr.mxu0 0.0
    %2038 = vmatpush2.msra.mxu0 0.0
    %2039 = vmatprep.subr.mxu0 0.0
    %2040 = vmatpush2.msra.mxu0 0.0
    %2041 = vmatprep.subr.mxu0 0.0
    %2042 = vmatpush2.msra.mxu0 0.0
    %2043 = vmatprep.subr.mxu0 0.0
    %2044 = vmatpush2.msra.mxu0 0.0
    %2045 = vmatprep.subr.mxu0 0.0
    %2046 = vmatpush2.msra.mxu0 0.0
    %2047 = vmatprep.subr.mxu0 0.0
    %2048 = vmatpush2.msra.mxu0 0.0
    %2049 = vmatprep.subr.mxu0 0.0
    %2050 = vmatpush2.msra.mxu0 0.0
    %2051 = vmatprep.subr.mxu0 0.0
    %2052 = vmatpush2.msra.mxu0 0.0
    %2053 = vmatprep.subr.mxu0 0.0
    %2054 = vmatpush2.msra.mxu0 0.0
    %2055 = vmatprep.subr.mxu0 0.0
    %2056 = vmatpush2.msra.mxu0 0.0
    %2057 = vmatprep.subr.mxu0 0.0
    %2058 = vmatpush2.msra.mxu0 0.0
    %2059 = vmatprep.mubr.f32.mxu0 0.0
    %2060 = vmatmul.mubr.f32.gmra.mxu0 %v1993
    %v2061 = vpop.f32.mrf.mxu0
    %v2062 = vadd.f32 0.0, %v2061
    %v2063 = vpop.f32.mrf.mxu0
    %2064 = vdwg.mxu0
    %2065 = vrot.lane.b32.xlu0 %v180, 108
    %v2066 = vpop.permute.xlu0 %2065
    %2067 = vrot.lane.b32.xlu0 %v253, 108
    %v2068 = vpop.permute.xlu0 %2067
    %v2069 = vsel %vm340, %v2066, 0
    %v2071 = vsel %vm340, %v2068, 0
    %2073 = vmatprep.subr.mxu0 0.0
    %2074 = vmatpush1.xpose.msra.mxu0 0.0
    %2075 = vmatprep.subr.mxu0 0.0
    %2076 = vmatpush1.xpose.msra.mxu0 0.0
    %2077 = vmatprep.subr.mxu0 0.0
    %2078 = vmatpush1.xpose.msra.mxu0 0.0
    %2079 = vmatprep.subr.mxu0 0.0
    %2080 = vmatpush1.xpose.msra.mxu0 0.0
    %2081 = vmatprep.subr.mxu0 0.0
    %2082 = vmatpush1.xpose.msra.mxu0 0.0
    %2083 = vmatprep.subr.mxu0 0.0
    %2084 = vmatpush1.xpose.msra.mxu0 0.0
    %2085 = vmatprep.subr.mxu0 0.0
    %2086 = vmatpush1.xpose.msra.mxu0 0.0
    %2087 = vmatprep.subr.mxu0 0.0
    %2088 = vmatpush1.xpose.msra.mxu0 0.0
    %2089 = vmatprep.subr.mxu0 0.0
    %2090 = vmatpush1.xpose.msra.mxu0 0.0
    %2091 = vmatprep.subr.mxu0 0.0
    %2092 = vmatpush1.xpose.msra.mxu0 0.0
    %2093 = vmatprep.subr.mxu0 0.0
    %2094 = vmatpush1.xpose.msra.mxu0 0.0
    %2095 = vmatprep.subr.mxu0 0.0
    %2096 = vmatpush1.xpose.msra.mxu0 0.0
    %2097 = vmatprep.subr.mxu0 0.0
    %2098 = vmatpush1.xpose.msra.mxu0 0.0
    %2099 = vmatprep.subr.mxu0 0.0
    %2100 = vmatpush1.xpose.msra.mxu0 0.0
    %2101 = vmatprep.subr.mxu0 0.0
    %2102 = vmatpush1.xpose.msra.mxu0 0.0
    %2103 = vmatprep.subr.mxu0 0.0
    %2104 = vmatpush1.xpose.msra.mxu0 %v2071
    %2105 = vmatprep.subr.mxu0 0.0
    %2106 = vmatpush2.xpose.msra.mxu0 0.0
    %2107 = vmatprep.subr.mxu0 0.0
    %2108 = vmatpush2.xpose.msra.mxu0 0.0
    %2109 = vmatprep.subr.mxu0 0.0
    %2110 = vmatpush2.xpose.msra.mxu0 0.0
    %2111 = vmatprep.subr.mxu0 0.0
    %2112 = vmatpush2.xpose.msra.mxu0 0.0
    %2113 = vmatprep.subr.mxu0 0.0
    %2114 = vmatpush2.xpose.msra.mxu0 0.0
    %2115 = vmatprep.subr.mxu0 0.0
    %2116 = vmatpush2.xpose.msra.mxu0 0.0
    %2117 = vmatprep.subr.mxu0 0.0
    %2118 = vmatpush2.xpose.msra.mxu0 0.0
    %2119 = vmatprep.subr.mxu0 0.0
    %2120 = vmatpush2.xpose.msra.mxu0 0.0
    %2121 = vmatprep.subr.mxu0 0.0
    %2122 = vmatpush2.xpose.msra.mxu0 0.0
    %2123 = vmatprep.subr.mxu0 0.0
    %2124 = vmatpush2.xpose.msra.mxu0 0.0
    %2125 = vmatprep.subr.mxu0 0.0
    %2126 = vmatpush2.xpose.msra.mxu0 0.0
    %2127 = vmatprep.subr.mxu0 0.0
    %2128 = vmatpush2.xpose.msra.mxu0 0.0
    %2129 = vmatprep.subr.mxu0 0.0
    %2130 = vmatpush2.xpose.msra.mxu0 0.0
    %2131 = vmatprep.subr.mxu0 0.0
    %2132 = vmatpush2.xpose.msra.mxu0 0.0
    %2133 = vmatprep.subr.mxu0 0.0
    %2134 = vmatpush2.xpose.msra.mxu0 0.0
    %2135 = vmatprep.subr.mxu0 0.0
    %2136 = vmatpush2.xpose.msra.mxu0 0.0
    %2137 = vmatprep.mubr.f32.mxu0 0.0
    %2138 = vmatmul.mubr.f32.gmra.mxu0 %v2069
    %v2139 = vpop.f32.mrf.mxu0
    %v2140 = vadd.f32 0.0, %v2139
    %v2141 = vpop.f32.mrf.mxu0
    %2142 = vdwg.mxu0
    %2143 = vrot.lane.b32.xlu0 %v181, 108
    %v2144 = vpop.permute.xlu0 %2143
    %2145 = vrot.lane.b32.xlu0 %v258, 108
    %v2146 = vpop.permute.xlu0 %2145
    %v2147 = vsel %vm340, %v2144, 0
    %v2149 = vsel %vm340, %v2146, 0
    %2151 = vmatprep.subr.mxu0 0.0
    %2152 = vmatpush1.xpose.msra.mxu0 0.0
    %2153 = vmatprep.subr.mxu0 0.0
    %2154 = vmatpush1.xpose.msra.mxu0 0.0
    %2155 = vmatprep.subr.mxu0 0.0
    %2156 = vmatpush1.xpose.msra.mxu0 0.0
    %2157 = vmatprep.subr.mxu0 0.0
    %2158 = vmatpush1.xpose.msra.mxu0 0.0
    %2159 = vmatprep.subr.mxu0 0.0
    %2160 = vmatpush1.xpose.msra.mxu0 0.0
    %2161 = vmatprep.subr.mxu0 0.0
    %2162 = vmatpush1.xpose.msra.mxu0 0.0
    %2163 = vmatprep.subr.mxu0 0.0
    %2164 = vmatpush1.xpose.msra.mxu0 0.0
    %2165 = vmatprep.subr.mxu0 0.0
    %2166 = vmatpush1.xpose.msra.mxu0 0.0
    %2167 = vmatprep.subr.mxu0 0.0
    %2168 = vmatpush1.xpose.msra.mxu0 0.0
    %2169 = vmatprep.subr.mxu0 0.0
    %2170 = vmatpush1.xpose.msra.mxu0 0.0
    %2171 = vmatprep.subr.mxu0 0.0
    %2172 = vmatpush1.xpose.msra.mxu0 0.0
    %2173 = vmatprep.subr.mxu0 0.0
    %2174 = vmatpush1.xpose.msra.mxu0 0.0
    %2175 = vmatprep.subr.mxu0 0.0
    %2176 = vmatpush1.xpose.msra.mxu0 0.0
    %2177 = vmatprep.subr.mxu0 0.0
    %2178 = vmatpush1.xpose.msra.mxu0 0.0
    %2179 = vmatprep.subr.mxu0 0.0
    %2180 = vmatpush1.xpose.msra.mxu0 0.0
    %2181 = vmatprep.subr.mxu0 0.0
    %2182 = vmatpush1.xpose.msra.mxu0 %v2149
    %2183 = vmatprep.subr.mxu0 0.0
    %2184 = vmatpush2.xpose.msra.mxu0 0.0
    %2185 = vmatprep.subr.mxu0 0.0
    %2186 = vmatpush2.xpose.msra.mxu0 0.0
    %2187 = vmatprep.subr.mxu0 0.0
    %2188 = vmatpush2.xpose.msra.mxu0 0.0
    %2189 = vmatprep.subr.mxu0 0.0
    %2190 = vmatpush2.xpose.msra.mxu0 0.0
    %2191 = vmatprep.subr.mxu0 0.0
    %2192 = vmatpush2.xpose.msra.mxu0 0.0
    %2193 = vmatprep.subr.mxu0 0.0
    %2194 = vmatpush2.xpose.msra.mxu0 0.0
    %2195 = vmatprep.subr.mxu0 0.0
    %2196 = vmatpush2.xpose.msra.mxu0 0.0
    %2197 = vmatprep.subr.mxu0 0.0
    %2198 = vmatpush2.xpose.msra.mxu0 0.0
    %2199 = vmatprep.subr.mxu0 0.0
    %2200 = vmatpush2.xpose.msra.mxu0 0.0
    %2201 = vmatprep.subr.mxu0 0.0
    %2202 = vmatpush2.xpose.msra.mxu0 0.0
    %2203 = vmatprep.subr.mxu0 0.0
    %2204 = vmatpush2.xpose.msra.mxu0 0.0
    %2205 = vmatprep.subr.mxu0 0.0
    %2206 = vmatpush2.xpose.msra.mxu0 0.0
    %2207 = vmatprep.subr.mxu0 0.0
    %2208 = vmatpush2.xpose.msra.mxu0 0.0
    %2209 = vmatprep.subr.mxu0 0.0
    %2210 = vmatpush2.xpose.msra.mxu0 0.0
    %2211 = vmatprep.subr.mxu0 0.0
    %2212 = vmatpush2.xpose.msra.mxu0 0.0
    %2213 = vmatprep.subr.mxu0 0.0
    %2214 = vmatpush2.xpose.msra.mxu0 0.0
    %2215 = vmatprep.mubr.f32.mxu0 0.0
    %2216 = vmatmul.mubr.f32.gmra.mxu0 %v2147
    %v2217 = vpop.f32.mrf.mxu0
    %v2218 = vadd.f32 0.0, %v2217
    %v2219 = vpop.f32.mrf.mxu0
    %2220 = vdwg.mxu0
    %v2221 = vsel %vm493, %v2140, -inf
    %2222 = vmax.xlane.f32.xlu0 %v2221
    %v2223 = vpop.xlane.xlu0 %2222
    %v2224 = vsel %vm493, %v2218, -inf
    %2225 = vmax.xlane.f32.xlu0 %v2224
    %v2226 = vpop.xlane.xlu0 %2225
    %v2227 = vsub.f32 %v2140, %v2223
    %v2228 = vsub.f32 %v2218, %v2226
    %v2229 = vmul.f32 %v2227, 1.442695
    %v2230 = vpow.pop %v2229
    %v2231 = vmul.f32 %v2228, 1.442695
    %v2232 = vpow.pop %v2231
    %v2233 = vsel %vm493, %v2230, 0.0
    %2234 = vadd.xlane.f32.xlu0 %v2233
    %v2235 = vpop.xlane.xlu0 %2234
    %v2236 = vsel %vm493, %v2232, 0.0
    %2237 = vadd.xlane.f32.xlu0 %v2236
    %v2238 = vpop.xlane.xlu0 %2237
    %v2239 = vrcp.pop %v2235
    %v2240 = vmul.f32 %v2230, %v2239
    %v2241 = vrcp.pop %v2238
    %v2242 = vmul.f32 %v2232, %v2241
    %v2243 = vsel %vm493, %v2240, 0.0
    %v2244 = vrot.slane %v2243, 4
    %v2245 = vadd.f32 %v2243, %v2244
    %v2246 = vrot.slane %v2245, 2
    %v2247 = vadd.f32 %v2245, %v2246
    %v2248 = vrot.slane %v2247, 1
    %v2249 = vadd.f32 %v2247, %v2248
    %v2250 = vsel %vm493, %v2242, 0.0
    %v2251 = vrot.slane %v2250, 4
    %v2252 = vadd.f32 %v2250, %v2251
    %v2253 = vrot.slane %v2252, 2
    %v2254 = vadd.f32 %v2252, %v2253
    %v2255 = vrot.slane %v2254, 1
    %v2256 = vadd.f32 %v2254, %v2255
    %v2257 = vmul.f32 %v2249, %v530
    %v2258 = vmul.f32 %v2256, %v530
    %2259 = vrot.lane.b32.xlu0 %v332, 108
    %v2260 = vpop.permute.xlu0 %2259
    %v2263 = vsel %vm493, %v2257, 0
    %2265 = vmatprep.subr.mxu0 0.0
    %2266 = vmatpush1.msra.mxu0 0.0
    %2267 = vmatprep.subr.mxu0 0.0
    %2268 = vmatpush1.msra.mxu0 0.0
    %2269 = vmatprep.subr.mxu0 0.0
    %2270 = vmatpush1.msra.mxu0 0.0
    %2271 = vmatprep.subr.mxu0 0.0
    %2272 = vmatpush1.msra.mxu0 0.0
    %2273 = vmatprep.subr.mxu0 0.0
    %2274 = vmatpush1.msra.mxu0 0.0
    %2275 = vmatprep.subr.mxu0 0.0
    %2276 = vmatpush1.msra.mxu0 0.0
    %2277 = vmatprep.subr.mxu0 0.0
    %2278 = vmatpush1.msra.mxu0 0.0
    %2279 = vmatprep.subr.mxu0 0.0
    %2280 = vmatpush1.msra.mxu0 0.0
    %2281 = vmatprep.subr.mxu0 0.0
    %2282 = vmatpush1.msra.mxu0 0.0
    %2283 = vmatprep.subr.mxu0 0.0
    %2284 = vmatpush1.msra.mxu0 0.0
    %2285 = vmatprep.subr.mxu0 0.0
    %2286 = vmatpush1.msra.mxu0 0.0
    %2287 = vmatprep.subr.mxu0 0.0
    %2288 = vmatpush1.msra.mxu0 0.0
    %2289 = vmatprep.subr.mxu0 0.0
    %2290 = vmatpush1.msra.mxu0 0.0
    %2291 = vmatprep.subr.mxu0 0.0
    %2292 = vmatpush1.msra.mxu0 0.0
    %2293 = vmatprep.subr.mxu0 0.0
    %2294 = vmatpush1.msra.mxu0 0.0
    %2295 = vmatprep.subr.mxu0 0.0
    %2296 = vmatpush1.msra.mxu0 %v2260
    %2297 = vmatprep.subr.mxu0 0.0
    %2298 = vmatpush2.msra.mxu0 0.0
    %2299 = vmatprep.subr.mxu0 0.0
    %2300 = vmatpush2.msra.mxu0 0.0
    %2301 = vmatprep.subr.mxu0 0.0
    %2302 = vmatpush2.msra.mxu0 0.0
    %2303 = vmatprep.subr.mxu0 0.0
    %2304 = vmatpush2.msra.mxu0 0.0
    %2305 = vmatprep.subr.mxu0 0.0
    %2306 = vmatpush2.msra.mxu0 0.0
    %2307 = vmatprep.subr.mxu0 0.0
    %2308 = vmatpush2.msra.mxu0 0.0
    %2309 = vmatprep.subr.mxu0 0.0
    %2310 = vmatpush2.msra.mxu0 0.0
    %2311 = vmatprep.subr.mxu0 0.0
    %2312 = vmatpush2.msra.mxu0 0.0
    %2313 = vmatprep.subr.mxu0 0.0
    %2314 = vmatpush2.msra.mxu0 0.0
    %2315 = vmatprep.subr.mxu0 0.0
    %2316 = vmatpush2.msra.mxu0 0.0
    %2317 = vmatprep.subr.mxu0 0.0
    %2318 = vmatpush2.msra.mxu0 0.0
    %2319 = vmatprep.subr.mxu0 0.0
    %2320 = vmatpush2.msra.mxu0 0.0
    %2321 = vmatprep.subr.mxu0 0.0
    %2322 = vmatpush2.msra.mxu0 0.0
    %2323 = vmatprep.subr.mxu0 0.0
    %2324 = vmatpush2.msra.mxu0 0.0
    %2325 = vmatprep.subr.mxu0 0.0
    %2326 = vmatpush2.msra.mxu0 0.0
    %2327 = vmatprep.subr.mxu0 0.0
    %2328 = vmatpush2.msra.mxu0 0.0
    %2329 = vmatprep.mubr.f32.mxu0 0.0
    %2330 = vmatmul.mubr.f32.gmra.mxu0 %v2263
    %v2331 = vpop.f32.mrf.mxu0
    %v2332 = vadd.f32 0.0, %v2331
    %v2333 = vpop.f32.mrf.mxu0
    %2334 = vdwg.mxu0
    %2335 = vrot.lane.b32.xlu0 %v337, 108
    %v2336 = vpop.permute.xlu0 %2335
    %v2339 = vsel %vm493, %v2258, 0
    %2341 = vmatprep.subr.mxu0 0.0
    %2342 = vmatpush1.msra.mxu0 0.0
    %2343 = vmatprep.subr.mxu0 0.0
    %2344 = vmatpush1.msra.mxu0 0.0
    %2345 = vmatprep.subr.mxu0 0.0
    %2346 = vmatpush1.msra.mxu0 0.0
    %2347 = vmatprep.subr.mxu0 0.0
    %2348 = vmatpush1.msra.mxu0 0.0
    %2349 = vmatprep.subr.mxu0 0.0
    %2350 = vmatpush1.msra.mxu0 0.0
    %2351 = vmatprep.subr.mxu0 0.0
    %2352 = vmatpush1.msra.mxu0 0.0
    %2353 = vmatprep.subr.mxu0 0.0
    %2354 = vmatpush1.msra.mxu0 0.0
    %2355 = vmatprep.subr.mxu0 0.0
    %2356 = vmatpush1.msra.mxu0 0.0
    %2357 = vmatprep.subr.mxu0 0.0
    %2358 = vmatpush1.msra.mxu0 0.0
    %2359 = vmatprep.subr.mxu0 0.0
    %2360 = vmatpush1.msra.mxu0 0.0
    %2361 = vmatprep.subr.mxu0 0.0
    %2362 = vmatpush1.msra.mxu0 0.0
    %2363 = vmatprep.subr.mxu0 0.0
    %2364 = vmatpush1.msra.mxu0 0.0
    %2365 = vmatprep.subr.mxu0 0.0
    %2366 = vmatpush1.msra.mxu0 0.0
    %2367 = vmatprep.subr.mxu0 0.0
    %2368 = vmatpush1.msra.mxu0 0.0
    %2369 = vmatprep.subr.mxu0 0.0
    %2370 = vmatpush1.msra.mxu0 0.0
    %2371 = vmatprep.subr.mxu0 0.0
    %2372 = vmatpush1.msra.mxu0 %v2336
    %2373 = vmatprep.subr.mxu0 0.0
    %2374 = vmatpush2.msra.mxu0 0.0
    %2375 = vmatprep.subr.mxu0 0.0
    %2376 = vmatpush2.msra.mxu0 0.0
    %2377 = vmatprep.subr.mxu0 0.0
    %2378 = vmatpush2.msra.mxu0 0.0
    %2379 = vmatprep.subr.mxu0 0.0
    %2380 = vmatpush2.msra.mxu0 0.0
    %2381 = vmatprep.subr.mxu0 0.0
    %2382 = vmatpush2.msra.mxu0 0.0
    %2383 = vmatprep.subr.mxu0 0.0
    %2384 = vmatpush2.msra.mxu0 0.0
    %2385 = vmatprep.subr.mxu0 0.0
    %2386 = vmatpush2.msra.mxu0 0.0
    %2387 = vmatprep.subr.mxu0 0.0
    %2388 = vmatpush2.msra.mxu0 0.0
    %2389 = vmatprep.subr.mxu0 0.0
    %2390 = vmatpush2.msra.mxu0 0.0
    %2391 = vmatprep.subr.mxu0 0.0
    %2392 = vmatpush2.msra.mxu0 0.0
    %2393 = vmatprep.subr.mxu0 0.0
    %2394 = vmatpush2.msra.mxu0 0.0
    %2395 = vmatprep.subr.mxu0 0.0
    %2396 = vmatpush2.msra.mxu0 0.0
    %2397 = vmatprep.subr.mxu0 0.0
    %2398 = vmatpush2.msra.mxu0 0.0
    %2399 = vmatprep.subr.mxu0 0.0
    %2400 = vmatpush2.msra.mxu0 0.0
    %2401 = vmatprep.subr.mxu0 0.0
    %2402 = vmatpush2.msra.mxu0 0.0
    %2403 = vmatprep.subr.mxu0 0.0
    %2404 = vmatpush2.msra.mxu0 0.0
    %2405 = vmatprep.mubr.f32.mxu0 0.0
    %2406 = vmatmul.mubr.f32.gmra.mxu0 %v2339
    %v2407 = vpop.f32.mrf.mxu0
    %v2408 = vadd.f32 0.0, %v2407
    %v2409 = vpop.f32.mrf.mxu0
    %2410 = vdwg.mxu0
    %2411 = vrot.lane.b32.xlu0 %v180, 104
    %v2412 = vpop.permute.xlu0 %2411
    %2413 = vrot.lane.b32.xlu0 %v253, 104
    %v2414 = vpop.permute.xlu0 %2413
    %v2415 = vsel %vm340, %v2412, 0
    %v2417 = vsel %vm340, %v2414, 0
    %2419 = vmatprep.subr.mxu0 0.0
    %2420 = vmatpush1.xpose.msra.mxu0 0.0
    %2421 = vmatprep.subr.mxu0 0.0
    %2422 = vmatpush1.xpose.msra.mxu0 0.0
    %2423 = vmatprep.subr.mxu0 0.0
    %2424 = vmatpush1.xpose.msra.mxu0 0.0
    %2425 = vmatprep.subr.mxu0 0.0
    %2426 = vmatpush1.xpose.msra.mxu0 0.0
    %2427 = vmatprep.subr.mxu0 0.0
    %2428 = vmatpush1.xpose.msra.mxu0 0.0
    %2429 = vmatprep.subr.mxu0 0.0
    %2430 = vmatpush1.xpose.msra.mxu0 0.0
    %2431 = vmatprep.subr.mxu0 0.0
    %2432 = vmatpush1.xpose.msra.mxu0 0.0
    %2433 = vmatprep.subr.mxu0 0.0
    %2434 = vmatpush1.xpose.msra.mxu0 0.0
    %2435 = vmatprep.subr.mxu0 0.0
    %2436 = vmatpush1.xpose.msra.mxu0 0.0
    %2437 = vmatprep.subr.mxu0 0.0
    %2438 = vmatpush1.xpose.msra.mxu0 0.0
    %2439 = vmatprep.subr.mxu0 0.0
    %2440 = vmatpush1.xpose.msra.mxu0 0.0
    %2441 = vmatprep.subr.mxu0 0.0
    %2442 = vmatpush1.xpose.msra.mxu0 0.0
    %2443 = vmatprep.subr.mxu0 0.0
    %2444 = vmatpush1.xpose.msra.mxu0 0.0
    %2445 = vmatprep.subr.mxu0 0.0
    %2446 = vmatpush1.xpose.msra.mxu0 0.0
    %2447 = vmatprep.subr.mxu0 0.0
    %2448 = vmatpush1.xpose.msra.mxu0 0.0
    %2449 = vmatprep.subr.mxu0 0.0
    %2450 = vmatpush1.xpose.msra.mxu0 %v2417
    %2451 = vmatprep.subr.mxu0 0.0
    %2452 = vmatpush2.xpose.msra.mxu0 0.0
    %2453 = vmatprep.subr.mxu0 0.0
    %2454 = vmatpush2.xpose.msra.mxu0 0.0
    %2455 = vmatprep.subr.mxu0 0.0
    %2456 = vmatpush2.xpose.msra.mxu0 0.0
    %2457 = vmatprep.subr.mxu0 0.0
    %2458 = vmatpush2.xpose.msra.mxu0 0.0
    %2459 = vmatprep.subr.mxu0 0.0
    %2460 = vmatpush2.xpose.msra.mxu0 0.0
    %2461 = vmatprep.subr.mxu0 0.0
    %2462 = vmatpush2.xpose.msra.mxu0 0.0
    %2463 = vmatprep.subr.mxu0 0.0
    %2464 = vmatpush2.xpose.msra.mxu0 0.0
    %2465 = vmatprep.subr.mxu0 0.0
    %2466 = vmatpush2.xpose.msra.mxu0 0.0
    %2467 = vmatprep.subr.mxu0 0.0
    %2468 = vmatpush2.xpose.msra.mxu0 0.0
    %2469 = vmatprep.subr.mxu0 0.0
    %2470 = vmatpush2.xpose.msra.mxu0 0.0
    %2471 = vmatprep.subr.mxu0 0.0
    %2472 = vmatpush2.xpose.msra.mxu0 0.0
    %2473 = vmatprep.subr.mxu0 0.0
    %2474 = vmatpush2.xpose.msra.mxu0 0.0
    %2475 = vmatprep.subr.mxu0 0.0
    %2476 = vmatpush2.xpose.msra.mxu0 0.0
    %2477 = vmatprep.subr.mxu0 0.0
    %2478 = vmatpush2.xpose.msra.mxu0 0.0
    %2479 = vmatprep.subr.mxu0 0.0
    %2480 = vmatpush2.xpose.msra.mxu0 0.0
    %2481 = vmatprep.subr.mxu0 0.0
    %2482 = vmatpush2.xpose.msra.mxu0 0.0
    %2483 = vmatprep.mubr.f32.mxu0 0.0
    %2484 = vmatmul.mubr.f32.gmra.mxu0 %v2415
    %v2485 = vpop.f32.mrf.mxu0
    %v2486 = vadd.f32 0.0, %v2485
    %v2487 = vpop.f32.mrf.mxu0
    %2488 = vdwg.mxu0
    %2489 = vrot.lane.b32.xlu0 %v181, 104
    %v2490 = vpop.permute.xlu0 %2489
    %2491 = vrot.lane.b32.xlu0 %v258, 104
    %v2492 = vpop.permute.xlu0 %2491
    %v2493 = vsel %vm340, %v2490, 0
    %v2495 = vsel %vm340, %v2492, 0
    %2497 = vmatprep.subr.mxu0 0.0
    %2498 = vmatpush1.xpose.msra.mxu0 0.0
    %2499 = vmatprep.subr.mxu0 0.0
    %2500 = vmatpush1.xpose.msra.mxu0 0.0
    %2501 = vmatprep.subr.mxu0 0.0
    %2502 = vmatpush1.xpose.msra.mxu0 0.0
    %2503 = vmatprep.subr.mxu0 0.0
    %2504 = vmatpush1.xpose.msra.mxu0 0.0
    %2505 = vmatprep.subr.mxu0 0.0
    %2506 = vmatpush1.xpose.msra.mxu0 0.0
    %2507 = vmatprep.subr.mxu0 0.0
    %2508 = vmatpush1.xpose.msra.mxu0 0.0
    %2509 = vmatprep.subr.mxu0 0.0
    %2510 = vmatpush1.xpose.msra.mxu0 0.0
    %2511 = vmatprep.subr.mxu0 0.0
    %2512 = vmatpush1.xpose.msra.mxu0 0.0
    %2513 = vmatprep.subr.mxu0 0.0
    %2514 = vmatpush1.xpose.msra.mxu0 0.0
    %2515 = vmatprep.subr.mxu0 0.0
    %2516 = vmatpush1.xpose.msra.mxu0 0.0
    %2517 = vmatprep.subr.mxu0 0.0
    %2518 = vmatpush1.xpose.msra.mxu0 0.0
    %2519 = vmatprep.subr.mxu0 0.0
    %2520 = vmatpush1.xpose.msra.mxu0 0.0
    %2521 = vmatprep.subr.mxu0 0.0
    %2522 = vmatpush1.xpose.msra.mxu0 0.0
    %2523 = vmatprep.subr.mxu0 0.0
    %2524 = vmatpush1.xpose.msra.mxu0 0.0
    %2525 = vmatprep.subr.mxu0 0.0
    %2526 = vmatpush1.xpose.msra.mxu0 0.0
    %2527 = vmatprep.subr.mxu0 0.0
    %2528 = vmatpush1.xpose.msra.mxu0 %v2495
    %2529 = vmatprep.subr.mxu0 0.0
    %2530 = vmatpush2.xpose.msra.mxu0 0.0
    %2531 = vmatprep.subr.mxu0 0.0
    %2532 = vmatpush2.xpose.msra.mxu0 0.0
    %2533 = vmatprep.subr.mxu0 0.0
    %2534 = vmatpush2.xpose.msra.mxu0 0.0
    %2535 = vmatprep.subr.mxu0 0.0
    %2536 = vmatpush2.xpose.msra.mxu0 0.0
    %2537 = vmatprep.subr.mxu0 0.0
    %2538 = vmatpush2.xpose.msra.mxu0 0.0
    %2539 = vmatprep.subr.mxu0 0.0
    %2540 = vmatpush2.xpose.msra.mxu0 0.0
    %2541 = vmatprep.subr.mxu0 0.0
    %2542 = vmatpush2.xpose.msra.mxu0 0.0
    %2543 = vmatprep.subr.mxu0 0.0
    %2544 = vmatpush2.xpose.msra.mxu0 0.0
    %2545 = vmatprep.subr.mxu0 0.0
    %2546 = vmatpush2.xpose.msra.mxu0 0.0
    %2547 = vmatprep.subr.mxu0 0.0
    %2548 = vmatpush2.xpose.msra.mxu0 0.0
    %2549 = vmatprep.subr.mxu0 0.0
    %2550 = vmatpush2.xpose.msra.mxu0 0.0
    %2551 = vmatprep.subr.mxu0 0.0
    %2552 = vmatpush2.xpose.msra.mxu0 0.0
    %2553 = vmatprep.subr.mxu0 0.0
    %2554 = vmatpush2.xpose.msra.mxu0 0.0
    %2555 = vmatprep.subr.mxu0 0.0
    %2556 = vmatpush2.xpose.msra.mxu0 0.0
    %2557 = vmatprep.subr.mxu0 0.0
    %2558 = vmatpush2.xpose.msra.mxu0 0.0
    %2559 = vmatprep.subr.mxu0 0.0
    %2560 = vmatpush2.xpose.msra.mxu0 0.0
    %2561 = vmatprep.mubr.f32.mxu0 0.0
    %2562 = vmatmul.mubr.f32.gmra.mxu0 %v2493
    %v2563 = vpop.f32.mrf.mxu0
    %v2564 = vadd.f32 0.0, %v2563
    %v2565 = vpop.f32.mrf.mxu0
    %2566 = vdwg.mxu0
    %v2567 = vsel %vm493, %v2486, -inf
    %2568 = vmax.xlane.f32.xlu0 %v2567
    %v2569 = vpop.xlane.xlu0 %2568
    %v2570 = vsel %vm493, %v2564, -inf
    %2571 = vmax.xlane.f32.xlu0 %v2570
    %v2572 = vpop.xlane.xlu0 %2571
    %v2573 = vsub.f32 %v2486, %v2569
    %v2574 = vsub.f32 %v2564, %v2572
    %v2575 = vmul.f32 %v2573, 1.442695
    %v2576 = vpow.pop %v2575
    %v2577 = vmul.f32 %v2574, 1.442695
    %v2578 = vpow.pop %v2577
    %v2579 = vsel %vm493, %v2576, 0.0
    %2580 = vadd.xlane.f32.xlu0 %v2579
    %v2581 = vpop.xlane.xlu0 %2580
    %v2582 = vsel %vm493, %v2578, 0.0
    %2583 = vadd.xlane.f32.xlu0 %v2582
    %v2584 = vpop.xlane.xlu0 %2583
    %v2585 = vrcp.pop %v2581
    %v2586 = vmul.f32 %v2576, %v2585
    %v2587 = vrcp.pop %v2584
    %v2588 = vmul.f32 %v2578, %v2587
    %v2589 = vsel %vm493, %v2586, 0.0
    %v2590 = vrot.slane %v2589, 4
    %v2591 = vadd.f32 %v2589, %v2590
    %v2592 = vrot.slane %v2591, 2
    %v2593 = vadd.f32 %v2591, %v2592
    %v2594 = vrot.slane %v2593, 1
    %v2595 = vadd.f32 %v2593, %v2594
    %v2596 = vsel %vm493, %v2588, 0.0
    %v2597 = vrot.slane %v2596, 4
    %v2598 = vadd.f32 %v2596, %v2597
    %v2599 = vrot.slane %v2598, 2
    %v2600 = vadd.f32 %v2598, %v2599
    %v2601 = vrot.slane %v2600, 1
    %v2602 = vadd.f32 %v2600, %v2601
    %v2603 = vmul.f32 %v2595, %v530
    %v2604 = vmul.f32 %v2602, %v530
    %2605 = vrot.lane.b32.xlu0 %v332, 104
    %v2606 = vpop.permute.xlu0 %2605
    %v2609 = vsel %vm493, %v2603, 0
    %2611 = vmatprep.subr.mxu0 0.0
    %2612 = vmatpush1.msra.mxu0 0.0
    %2613 = vmatprep.subr.mxu0 0.0
    %2614 = vmatpush1.msra.mxu0 0.0
    %2615 = vmatprep.subr.mxu0 0.0
    %2616 = vmatpush1.msra.mxu0 0.0
    %2617 = vmatprep.subr.mxu0 0.0
    %2618 = vmatpush1.msra.mxu0 0.0
    %2619 = vmatprep.subr.mxu0 0.0
    %2620 = vmatpush1.msra.mxu0 0.0
    %2621 = vmatprep.subr.mxu0 0.0
    %2622 = vmatpush1.msra.mxu0 0.0
    %2623 = vmatprep.subr.mxu0 0.0
    %2624 = vmatpush1.msra.mxu0 0.0
    %2625 = vmatprep.subr.mxu0 0.0
    %2626 = vmatpush1.msra.mxu0 0.0
    %2627 = vmatprep.subr.mxu0 0.0
    %2628 = vmatpush1.msra.mxu0 0.0
    %2629 = vmatprep.subr.mxu0 0.0
    %2630 = vmatpush1.msra.mxu0 0.0
    %2631 = vmatprep.subr.mxu0 0.0
    %2632 = vmatpush1.msra.mxu0 0.0
    %2633 = vmatprep.subr.mxu0 0.0
    %2634 = vmatpush1.msra.mxu0 0.0
    %2635 = vmatprep.subr.mxu0 0.0
    %2636 = vmatpush1.msra.mxu0 0.0
    %2637 = vmatprep.subr.mxu0 0.0
    %2638 = vmatpush1.msra.mxu0 0.0
    %2639 = vmatprep.subr.mxu0 0.0
    %2640 = vmatpush1.msra.mxu0 0.0
    %2641 = vmatprep.subr.mxu0 0.0
    %2642 = vmatpush1.msra.mxu0 %v2606
    %2643 = vmatprep.subr.mxu0 0.0
    %2644 = vmatpush2.msra.mxu0 0.0
    %2645 = vmatprep.subr.mxu0 0.0
    %2646 = vmatpush2.msra.mxu0 0.0
    %2647 = vmatprep.subr.mxu0 0.0
    %2648 = vmatpush2.msra.mxu0 0.0
    %2649 = vmatprep.subr.mxu0 0.0
    %2650 = vmatpush2.msra.mxu0 0.0
    %2651 = vmatprep.subr.mxu0 0.0
    %2652 = vmatpush2.msra.mxu0 0.0
    %2653 = vmatprep.subr.mxu0 0.0
    %2654 = vmatpush2.msra.mxu0 0.0
    %2655 = vmatprep.subr.mxu0 0.0
    %2656 = vmatpush2.msra.mxu0 0.0
    %2657 = vmatprep.subr.mxu0 0.0
    %2658 = vmatpush2.msra.mxu0 0.0
    %2659 = vmatprep.subr.mxu0 0.0
    %2660 = vmatpush2.msra.mxu0 0.0
    %2661 = vmatprep.subr.mxu0 0.0
    %2662 = vmatpush2.msra.mxu0 0.0
    %2663 = vmatprep.subr.mxu0 0.0
    %2664 = vmatpush2.msra.mxu0 0.0
    %2665 = vmatprep.subr.mxu0 0.0
    %2666 = vmatpush2.msra.mxu0 0.0
    %2667 = vmatprep.subr.mxu0 0.0
    %2668 = vmatpush2.msra.mxu0 0.0
    %2669 = vmatprep.subr.mxu0 0.0
    %2670 = vmatpush2.msra.mxu0 0.0
    %2671 = vmatprep.subr.mxu0 0.0
    %2672 = vmatpush2.msra.mxu0 0.0
    %2673 = vmatprep.subr.mxu0 0.0
    %2674 = vmatpush2.msra.mxu0 0.0
    %2675 = vmatprep.mubr.f32.mxu0 0.0
    %2676 = vmatmul.mubr.f32.gmra.mxu0 %v2609
    %v2677 = vpop.f32.mrf.mxu0
    %v2678 = vadd.f32 0.0, %v2677
    %v2679 = vpop.f32.mrf.mxu0
    %2680 = vdwg.mxu0
    %2681 = vrot.lane.b32.xlu0 %v337, 104
    %v2682 = vpop.permute.xlu0 %2681
    %v2685 = vsel %vm493, %v2604, 0
    %2687 = vmatprep.subr.mxu0 0.0
    %2688 = vmatpush1.msra.mxu0 0.0
    %2689 = vmatprep.subr.mxu0 0.0
    %2690 = vmatpush1.msra.mxu0 0.0
    %2691 = vmatprep.subr.mxu0 0.0
    %2692 = vmatpush1.msra.mxu0 0.0
    %2693 = vmatprep.subr.mxu0 0.0
    %2694 = vmatpush1.msra.mxu0 0.0
    %2695 = vmatprep.subr.mxu0 0.0
    %2696 = vmatpush1.msra.mxu0 0.0
    %2697 = vmatprep.subr.mxu0 0.0
    %2698 = vmatpush1.msra.mxu0 0.0
    %2699 = vmatprep.subr.mxu0 0.0
    %2700 = vmatpush1.msra.mxu0 0.0
    %2701 = vmatprep.subr.mxu0 0.0
    %2702 = vmatpush1.msra.mxu0 0.0
    %2703 = vmatprep.subr.mxu0 0.0
    %2704 = vmatpush1.msra.mxu0 0.0
    %2705 = vmatprep.subr.mxu0 0.0
    %2706 = vmatpush1.msra.mxu0 0.0
    %2707 = vmatprep.subr.mxu0 0.0
    %2708 = vmatpush1.msra.mxu0 0.0
    %2709 = vmatprep.subr.mxu0 0.0
    %2710 = vmatpush1.msra.mxu0 0.0
    %2711 = vmatprep.subr.mxu0 0.0
    %2712 = vmatpush1.msra.mxu0 0.0
    %2713 = vmatprep.subr.mxu0 0.0
    %2714 = vmatpush1.msra.mxu0 0.0
    %2715 = vmatprep.subr.mxu0 0.0
    %2716 = vmatpush1.msra.mxu0 0.0
    %2717 = vmatprep.subr.mxu0 0.0
    %2718 = vmatpush1.msra.mxu0 %v2682
    %2719 = vmatprep.subr.mxu0 0.0
    %2720 = vmatpush2.msra.mxu0 0.0
    %2721 = vmatprep.subr.mxu0 0.0
    %2722 = vmatpush2.msra.mxu0 0.0
    %2723 = vmatprep.subr.mxu0 0.0
    %2724 = vmatpush2.msra.mxu0 0.0
    %2725 = vmatprep.subr.mxu0 0.0
    %2726 = vmatpush2.msra.mxu0 0.0
    %2727 = vmatprep.subr.mxu0 0.0
    %2728 = vmatpush2.msra.mxu0 0.0
    %2729 = vmatprep.subr.mxu0 0.0
    %2730 = vmatpush2.msra.mxu0 0.0
    %2731 = vmatprep.subr.mxu0 0.0
    %2732 = vmatpush2.msra.mxu0 0.0
    %2733 = vmatprep.subr.mxu0 0.0
    %2734 = vmatpush2.msra.mxu0 0.0
    %2735 = vmatprep.subr.mxu0 0.0
    %2736 = vmatpush2.msra.mxu0 0.0
    %2737 = vmatprep.subr.mxu0 0.0
    %2738 = vmatpush2.msra.mxu0 0.0
    %2739 = vmatprep.subr.mxu0 0.0
    %2740 = vmatpush2.msra.mxu0 0.0
    %2741 = vmatprep.subr.mxu0 0.0
    %2742 = vmatpush2.msra.mxu0 0.0
    %2743 = vmatprep.subr.mxu0 0.0
    %2744 = vmatpush2.msra.mxu0 0.0
    %2745 = vmatprep.subr.mxu0 0.0
    %2746 = vmatpush2.msra.mxu0 0.0
    %2747 = vmatprep.subr.mxu0 0.0
    %2748 = vmatpush2.msra.mxu0 0.0
    %2749 = vmatprep.subr.mxu0 0.0
    %2750 = vmatpush2.msra.mxu0 0.0
    %2751 = vmatprep.mubr.f32.mxu0 0.0
    %2752 = vmatmul.mubr.f32.gmra.mxu0 %v2685
    %v2753 = vpop.f32.mrf.mxu0
    %v2754 = vadd.f32 0.0, %v2753
    %v2755 = vpop.f32.mrf.mxu0
    %2756 = vdwg.mxu0
    %2757 = vrot.lane.b32.xlu0 %v180, 100
    %v2758 = vpop.permute.xlu0 %2757
    %2759 = vrot.lane.b32.xlu0 %v253, 100
    %v2760 = vpop.permute.xlu0 %2759
    %v2761 = vsel %vm340, %v2758, 0
    %v2763 = vsel %vm340, %v2760, 0
    %2765 = vmatprep.subr.mxu0 0.0
    %2766 = vmatpush1.xpose.msra.mxu0 0.0
    %2767 = vmatprep.subr.mxu0 0.0
    %2768 = vmatpush1.xpose.msra.mxu0 0.0
    %2769 = vmatprep.subr.mxu0 0.0
    %2770 = vmatpush1.xpose.msra.mxu0 0.0
    %2771 = vmatprep.subr.mxu0 0.0
    %2772 = vmatpush1.xpose.msra.mxu0 0.0
    %2773 = vmatprep.subr.mxu0 0.0
    %2774 = vmatpush1.xpose.msra.mxu0 0.0
    %2775 = vmatprep.subr.mxu0 0.0
    %2776 = vmatpush1.xpose.msra.mxu0 0.0
    %2777 = vmatprep.subr.mxu0 0.0
    %2778 = vmatpush1.xpose.msra.mxu0 0.0
    %2779 = vmatprep.subr.mxu0 0.0
    %2780 = vmatpush1.xpose.msra.mxu0 0.0
    %2781 = vmatprep.subr.mxu0 0.0
    %2782 = vmatpush1.xpose.msra.mxu0 0.0
    %2783 = vmatprep.subr.mxu0 0.0
    %2784 = vmatpush1.xpose.msra.mxu0 0.0
    %2785 = vmatprep.subr.mxu0 0.0
    %2786 = vmatpush1.xpose.msra.mxu0 0.0
    %2787 = vmatprep.subr.mxu0 0.0
    %2788 = vmatpush1.xpose.msra.mxu0 0.0
    %2789 = vmatprep.subr.mxu0 0.0
    %2790 = vmatpush1.xpose.msra.mxu0 0.0
    %2791 = vmatprep.subr.mxu0 0.0
    %2792 = vmatpush1.xpose.msra.mxu0 0.0
    %2793 = vmatprep.subr.mxu0 0.0
    %2794 = vmatpush1.xpose.msra.mxu0 0.0
    %2795 = vmatprep.subr.mxu0 0.0
    %2796 = vmatpush1.xpose.msra.mxu0 %v2763
    %2797 = vmatprep.subr.mxu0 0.0
    %2798 = vmatpush2.xpose.msra.mxu0 0.0
    %2799 = vmatprep.subr.mxu0 0.0
    %2800 = vmatpush2.xpose.msra.mxu0 0.0
    %2801 = vmatprep.subr.mxu0 0.0
    %2802 = vmatpush2.xpose.msra.mxu0 0.0
    %2803 = vmatprep.subr.mxu0 0.0
    %2804 = vmatpush2.xpose.msra.mxu0 0.0
    %2805 = vmatprep.subr.mxu0 0.0
    %2806 = vmatpush2.xpose.msra.mxu0 0.0
    %2807 = vmatprep.subr.mxu0 0.0
    %2808 = vmatpush2.xpose.msra.mxu0 0.0
    %2809 = vmatprep.subr.mxu0 0.0
    %2810 = vmatpush2.xpose.msra.mxu0 0.0
    %2811 = vmatprep.subr.mxu0 0.0
    %2812 = vmatpush2.xpose.msra.mxu0 0.0
    %2813 = vmatprep.subr.mxu0 0.0
    %2814 = vmatpush2.xpose.msra.mxu0 0.0
    %2815 = vmatprep.subr.mxu0 0.0
    %2816 = vmatpush2.xpose.msra.mxu0 0.0
    %2817 = vmatprep.subr.mxu0 0.0
    %2818 = vmatpush2.xpose.msra.mxu0 0.0
    %2819 = vmatprep.subr.mxu0 0.0
    %2820 = vmatpush2.xpose.msra.mxu0 0.0
    %2821 = vmatprep.subr.mxu0 0.0
    %2822 = vmatpush2.xpose.msra.mxu0 0.0
    %2823 = vmatprep.subr.mxu0 0.0
    %2824 = vmatpush2.xpose.msra.mxu0 0.0
    %2825 = vmatprep.subr.mxu0 0.0
    %2826 = vmatpush2.xpose.msra.mxu0 0.0
    %2827 = vmatprep.subr.mxu0 0.0
    %2828 = vmatpush2.xpose.msra.mxu0 0.0
    %2829 = vmatprep.mubr.f32.mxu0 0.0
    %2830 = vmatmul.mubr.f32.gmra.mxu0 %v2761
    %v2831 = vpop.f32.mrf.mxu0
    %v2832 = vadd.f32 0.0, %v2831
    %v2833 = vpop.f32.mrf.mxu0
    %2834 = vdwg.mxu0
    %2835 = vrot.lane.b32.xlu0 %v181, 100
    %v2836 = vpop.permute.xlu0 %2835
    %2837 = vrot.lane.b32.xlu0 %v258, 100
    %v2838 = vpop.permute.xlu0 %2837
    %v2839 = vsel %vm340, %v2836, 0
    %v2841 = vsel %vm340, %v2838, 0
    %2843 = vmatprep.subr.mxu0 0.0
    %2844 = vmatpush1.xpose.msra.mxu0 0.0
    %2845 = vmatprep.subr.mxu0 0.0
    %2846 = vmatpush1.xpose.msra.mxu0 0.0
    %2847 = vmatprep.subr.mxu0 0.0
    %2848 = vmatpush1.xpose.msra.mxu0 0.0
    %2849 = vmatprep.subr.mxu0 0.0
    %2850 = vmatpush1.xpose.msra.mxu0 0.0
    %2851 = vmatprep.subr.mxu0 0.0
    %2852 = vmatpush1.xpose.msra.mxu0 0.0
    %2853 = vmatprep.subr.mxu0 0.0
    %2854 = vmatpush1.xpose.msra.mxu0 0.0
    %2855 = vmatprep.subr.mxu0 0.0
    %2856 = vmatpush1.xpose.msra.mxu0 0.0
    %2857 = vmatprep.subr.mxu0 0.0
    %2858 = vmatpush1.xpose.msra.mxu0 0.0
    %2859 = vmatprep.subr.mxu0 0.0
    %2860 = vmatpush1.xpose.msra.mxu0 0.0
    %2861 = vmatprep.subr.mxu0 0.0
    %2862 = vmatpush1.xpose.msra.mxu0 0.0
    %2863 = vmatprep.subr.mxu0 0.0
    %2864 = vmatpush1.xpose.msra.mxu0 0.0
    %2865 = vmatprep.subr.mxu0 0.0
    %2866 = vmatpush1.xpose.msra.mxu0 0.0
    %2867 = vmatprep.subr.mxu0 0.0
    %2868 = vmatpush1.xpose.msra.mxu0 0.0
    %2869 = vmatprep.subr.mxu0 0.0
    %2870 = vmatpush1.xpose.msra.mxu0 0.0
    %2871 = vmatprep.subr.mxu0 0.0
    %2872 = vmatpush1.xpose.msra.mxu0 0.0
    %2873 = vmatprep.subr.mxu0 0.0
    %2874 = vmatpush1.xpose.msra.mxu0 %v2841
    %2875 = vmatprep.subr.mxu0 0.0
    %2876 = vmatpush2.xpose.msra.mxu0 0.0
    %2877 = vmatprep.subr.mxu0 0.0
    %2878 = vmatpush2.xpose.msra.mxu0 0.0
    %2879 = vmatprep.subr.mxu0 0.0
    %2880 = vmatpush2.xpose.msra.mxu0 0.0
    %2881 = vmatprep.subr.mxu0 0.0
    %2882 = vmatpush2.xpose.msra.mxu0 0.0
    %2883 = vmatprep.subr.mxu0 0.0
    %2884 = vmatpush2.xpose.msra.mxu0 0.0
    %2885 = vmatprep.subr.mxu0 0.0
    %2886 = vmatpush2.xpose.msra.mxu0 0.0
    %2887 = vmatprep.subr.mxu0 0.0
    %2888 = vmatpush2.xpose.msra.mxu0 0.0
    %2889 = vmatprep.subr.mxu0 0.0
    %2890 = vmatpush2.xpose.msra.mxu0 0.0
    %2891 = vmatprep.subr.mxu0 0.0
    %2892 = vmatpush2.xpose.msra.mxu0 0.0
    %2893 = vmatprep.subr.mxu0 0.0
    %2894 = vmatpush2.xpose.msra.mxu0 0.0
    %2895 = vmatprep.subr.mxu0 0.0
    %2896 = vmatpush2.xpose.msra.mxu0 0.0
    %2897 = vmatprep.subr.mxu0 0.0
    %2898 = vmatpush2.xpose.msra.mxu0 0.0
    %2899 = vmatprep.subr.mxu0 0.0
    %2900 = vmatpush2.xpose.msra.mxu0 0.0
    %2901 = vmatprep.subr.mxu0 0.0
    %2902 = vmatpush2.xpose.msra.mxu0 0.0
    %2903 = vmatprep.subr.mxu0 0.0
    %2904 = vmatpush2.xpose.msra.mxu0 0.0
    %2905 = vmatprep.subr.mxu0 0.0
    %2906 = vmatpush2.xpose.msra.mxu0 0.0
    %2907 = vmatprep.mubr.f32.mxu0 0.0
    %2908 = vmatmul.mubr.f32.gmra.mxu0 %v2839
    %v2909 = vpop.f32.mrf.mxu0
    %v2910 = vadd.f32 0.0, %v2909
    %v2911 = vpop.f32.mrf.mxu0
    %2912 = vdwg.mxu0
    %v2913 = vsel %vm493, %v2832, -inf
    %2914 = vmax.xlane.f32.xlu0 %v2913
    %v2915 = vpop.xlane.xlu0 %2914
    %v2916 = vsel %vm493, %v2910, -inf
    %2917 = vmax.xlane.f32.xlu0 %v2916
    %v2918 = vpop.xlane.xlu0 %2917
    %v2919 = vsub.f32 %v2832, %v2915
    %v2920 = vsub.f32 %v2910, %v2918
    %v2921 = vmul.f32 %v2919, 1.442695
    %v2922 = vpow.pop %v2921
    %v2923 = vmul.f32 %v2920, 1.442695
    %v2924 = vpow.pop %v2923
    %v2925 = vsel %vm493, %v2922, 0.0
    %2926 = vadd.xlane.f32.xlu0 %v2925
    %v2927 = vpop.xlane.xlu0 %2926
    %v2928 = vsel %vm493, %v2924, 0.0
    %2929 = vadd.xlane.f32.xlu0 %v2928
    %v2930 = vpop.xlane.xlu0 %2929
    %v2931 = vrcp.pop %v2927
    %v2932 = vmul.f32 %v2922, %v2931
    %v2933 = vrcp.pop %v2930
    %v2934 = vmul.f32 %v2924, %v2933
    %v2935 = vsel %vm493, %v2932, 0.0
    %v2936 = vrot.slane %v2935, 4
    %v2937 = vadd.f32 %v2935, %v2936
    %v2938 = vrot.slane %v2937, 2
    %v2939 = vadd.f32 %v2937, %v2938
    %v2940 = vrot.slane %v2939, 1
    %v2941 = vadd.f32 %v2939, %v2940
    %v2942 = vsel %vm493, %v2934, 0.0
    %v2943 = vrot.slane %v2942, 4
    %v2944 = vadd.f32 %v2942, %v2943
    %v2945 = vrot.slane %v2944, 2
    %v2946 = vadd.f32 %v2944, %v2945
    %v2947 = vrot.slane %v2946, 1
    %v2948 = vadd.f32 %v2946, %v2947
    %v2949 = vmul.f32 %v2941, %v530
    %v2950 = vmul.f32 %v2948, %v530
    %2951 = vrot.lane.b32.xlu0 %v332, 100
    %v2952 = vpop.permute.xlu0 %2951
    %v2955 = vsel %vm493, %v2949, 0
    %2957 = vmatprep.subr.mxu0 0.0
    %2958 = vmatpush1.msra.mxu0 0.0
    %2959 = vmatprep.subr.mxu0 0.0
    %2960 = vmatpush1.msra.mxu0 0.0
    %2961 = vmatprep.subr.mxu0 0.0
    %2962 = vmatpush1.msra.mxu0 0.0
    %2963 = vmatprep.subr.mxu0 0.0
    %2964 = vmatpush1.msra.mxu0 0.0
    %2965 = vmatprep.subr.mxu0 0.0
    %2966 = vmatpush1.msra.mxu0 0.0
    %2967 = vmatprep.subr.mxu0 0.0
    %2968 = vmatpush1.msra.mxu0 0.0
    %2969 = vmatprep.subr.mxu0 0.0
    %2970 = vmatpush1.msra.mxu0 0.0
    %2971 = vmatprep.subr.mxu0 0.0
    %2972 = vmatpush1.msra.mxu0 0.0
    %2973 = vmatprep.subr.mxu0 0.0
    %2974 = vmatpush1.msra.mxu0 0.0
    %2975 = vmatprep.subr.mxu0 0.0
    %2976 = vmatpush1.msra.mxu0 0.0
    %2977 = vmatprep.subr.mxu0 0.0
    %2978 = vmatpush1.msra.mxu0 0.0
    %2979 = vmatprep.subr.mxu0 0.0
    %2980 = vmatpush1.msra.mxu0 0.0
    %2981 = vmatprep.subr.mxu0 0.0
    %2982 = vmatpush1.msra.mxu0 0.0
    %2983 = vmatprep.subr.mxu0 0.0
    %2984 = vmatpush1.msra.mxu0 0.0
    %2985 = vmatprep.subr.mxu0 0.0
    %2986 = vmatpush1.msra.mxu0 0.0
    %2987 = vmatprep.subr.mxu0 0.0
    %2988 = vmatpush1.msra.mxu0 %v2952
    %2989 = vmatprep.subr.mxu0 0.0
    %2990 = vmatpush2.msra.mxu0 0.0
    %2991 = vmatprep.subr.mxu0 0.0
    %2992 = vmatpush2.msra.mxu0 0.0
    %2993 = vmatprep.subr.mxu0 0.0
    %2994 = vmatpush2.msra.mxu0 0.0
    %2995 = vmatprep.subr.mxu0 0.0
    %2996 = vmatpush2.msra.mxu0 0.0
    %2997 = vmatprep.subr.mxu0 0.0
    %2998 = vmatpush2.msra.mxu0 0.0
    %2999 = vmatprep.subr.mxu0 0.0
    %3000 = vmatpush2.msra.mxu0 0.0
    %3001 = vmatprep.subr.mxu0 0.0
    %3002 = vmatpush2.msra.mxu0 0.0
    %3003 = vmatprep.subr.mxu0 0.0
    %3004 = vmatpush2.msra.mxu0 0.0
    %3005 = vmatprep.subr.mxu0 0.0
    %3006 = vmatpush2.msra.mxu0 0.0
    %3007 = vmatprep.subr.mxu0 0.0
    %3008 = vmatpush2.msra.mxu0 0.0
    %3009 = vmatprep.subr.mxu0 0.0
    %3010 = vmatpush2.msra.mxu0 0.0
    %3011 = vmatprep.subr.mxu0 0.0
    %3012 = vmatpush2.msra.mxu0 0.0
    %3013 = vmatprep.subr.mxu0 0.0
    %3014 = vmatpush2.msra.mxu0 0.0
    %3015 = vmatprep.subr.mxu0 0.0
    %3016 = vmatpush2.msra.mxu0 0.0
    %3017 = vmatprep.subr.mxu0 0.0
    %3018 = vmatpush2.msra.mxu0 0.0
    %3019 = vmatprep.subr.mxu0 0.0
    %3020 = vmatpush2.msra.mxu0 0.0
    %3021 = vmatprep.mubr.f32.mxu0 0.0
    %3022 = vmatmul.mubr.f32.gmra.mxu0 %v2955
    %v3023 = vpop.f32.mrf.mxu0
    %v3024 = vadd.f32 0.0, %v3023
    %v3025 = vpop.f32.mrf.mxu0
    %3026 = vdwg.mxu0
    %3027 = vrot.lane.b32.xlu0 %v337, 100
    %v3028 = vpop.permute.xlu0 %3027
    %v3031 = vsel %vm493, %v2950, 0
    %3033 = vmatprep.subr.mxu0 0.0
    %3034 = vmatpush1.msra.mxu0 0.0
    %3035 = vmatprep.subr.mxu0 0.0
    %3036 = vmatpush1.msra.mxu0 0.0
    %3037 = vmatprep.subr.mxu0 0.0
    %3038 = vmatpush1.msra.mxu0 0.0
    %3039 = vmatprep.subr.mxu0 0.0
    %3040 = vmatpush1.msra.mxu0 0.0
    %3041 = vmatprep.subr.mxu0 0.0
    %3042 = vmatpush1.msra.mxu0 0.0
    %3043 = vmatprep.subr.mxu0 0.0
    %3044 = vmatpush1.msra.mxu0 0.0
    %3045 = vmatprep.subr.mxu0 0.0
    %3046 = vmatpush1.msra.mxu0 0.0
    %3047 = vmatprep.subr.mxu0 0.0
    %3048 = vmatpush1.msra.mxu0 0.0
    %3049 = vmatprep.subr.mxu0 0.0
    %3050 = vmatpush1.msra.mxu0 0.0
    %3051 = vmatprep.subr.mxu0 0.0
    %3052 = vmatpush1.msra.mxu0 0.0
    %3053 = vmatprep.subr.mxu0 0.0
    %3054 = vmatpush1.msra.mxu0 0.0
    %3055 = vmatprep.subr.mxu0 0.0
    %3056 = vmatpush1.msra.mxu0 0.0
    %3057 = vmatprep.subr.mxu0 0.0
    %3058 = vmatpush1.msra.mxu0 0.0
    %3059 = vmatprep.subr.mxu0 0.0
    %3060 = vmatpush1.msra.mxu0 0.0
    %3061 = vmatprep.subr.mxu0 0.0
    %3062 = vmatpush1.msra.mxu0 0.0
    %3063 = vmatprep.subr.mxu0 0.0
    %3064 = vmatpush1.msra.mxu0 %v3028
    %3065 = vmatprep.subr.mxu0 0.0
    %3066 = vmatpush2.msra.mxu0 0.0
    %3067 = vmatprep.subr.mxu0 0.0
    %3068 = vmatpush2.msra.mxu0 0.0
    %3069 = vmatprep.subr.mxu0 0.0
    %3070 = vmatpush2.msra.mxu0 0.0
    %3071 = vmatprep.subr.mxu0 0.0
    %3072 = vmatpush2.msra.mxu0 0.0
    %3073 = vmatprep.subr.mxu0 0.0
    %3074 = vmatpush2.msra.mxu0 0.0
    %3075 = vmatprep.subr.mxu0 0.0
    %3076 = vmatpush2.msra.mxu0 0.0
    %3077 = vmatprep.subr.mxu0 0.0
    %3078 = vmatpush2.msra.mxu0 0.0
    %3079 = vmatprep.subr.mxu0 0.0
    %3080 = vmatpush2.msra.mxu0 0.0
    %3081 = vmatprep.subr.mxu0 0.0
    %3082 = vmatpush2.msra.mxu0 0.0
    %3083 = vmatprep.subr.mxu0 0.0
    %3084 = vmatpush2.msra.mxu0 0.0
    %3085 = vmatprep.subr.mxu0 0.0
    %3086 = vmatpush2.msra.mxu0 0.0
    %3087 = vmatprep.subr.mxu0 0.0
    %3088 = vmatpush2.msra.mxu0 0.0
    %3089 = vmatprep.subr.mxu0 0.0
    %3090 = vmatpush2.msra.mxu0 0.0
    %3091 = vmatprep.subr.mxu0 0.0
    %3092 = vmatpush2.msra.mxu0 0.0
    %3093 = vmatprep.subr.mxu0 0.0
    %3094 = vmatpush2.msra.mxu0 0.0
    %3095 = vmatprep.subr.mxu0 0.0
    %3096 = vmatpush2.msra.mxu0 0.0
    %3097 = vmatprep.mubr.f32.mxu0 0.0
    %3098 = vmatmul.mubr.f32.gmra.mxu0 %v3031
    %v3099 = vpop.f32.mrf.mxu0
    %v3100 = vadd.f32 0.0, %v3099
    %v3101 = vpop.f32.mrf.mxu0
    %3102 = vdwg.mxu0
    %v3105 = vrot.slane %v676, 7
    %vm3106 = vcmask 1041409
    %v3107 = vsel %vm3106, %v3105, %v603
    %v3111 = vrot.slane %v1024, 7
    %v3112 = vsel %vm3106, %v3111, %v947
    %3113 = vrot.lane.b32.xlu0 %v3112, 4
    %v3114 = vpop.permute.xlu0 %3113
    %v3118 = vrot.slane %v1370, 7
    %v3119 = vsel %vm3106, %v3118, %v1294
    %3120 = vrot.lane.b32.xlu0 %v3119, 8
    %v3121 = vpop.permute.xlu0 %3120
    %v3125 = vrot.slane %v1716, 7
    %v3126 = vsel %vm3106, %v3125, %v1640
    %3127 = vrot.lane.b32.xlu0 %v3126, 12
    %v3128 = vpop.permute.xlu0 %3127
    %v3132 = vrot.slane %v2062, 7
    %v3133 = vsel %vm3106, %v3132, %v1986
    %3134 = vrot.lane.b32.xlu0 %v3133, 16
    %v3135 = vpop.permute.xlu0 %3134
    %v3139 = vrot.slane %v2408, 7
    %v3140 = vsel %vm3106, %v3139, %v2332
    %3141 = vrot.lane.b32.xlu0 %v3140, 20
    %v3142 = vpop.permute.xlu0 %3141
    %v3146 = vrot.slane %v2754, 7
    %v3147 = vsel %vm3106, %v3146, %v2678
    %3148 = vrot.lane.b32.xlu0 %v3147, 24
    %v3149 = vpop.permute.xlu0 %3148
    %v3153 = vrot.slane %v3100, 7
    %v3154 = vsel %vm3106, %v3153, %v3024
    %3155 = vrot.lane.b32.xlu0 %v3154, 28
    %v3156 = vpop.permute.xlu0 %3155
    %v3158 = vsel %vm340, %v3107, %v3114
    %v3159 = vsel %vm493, %v3158, %v3121
    %vm3160 = vcmask 97280
    %v3161 = vsel %vm3160, %v3159, %v3128
    %vm3162 = vcmask 130048
    %v3163 = vsel %vm3162, %v3161, %v3135
    %vm3164 = vcmask 162816
    %v3165 = vsel %vm3164, %v3163, %v3142
    %vm3166 = vcmask 195584
    %v3167 = vsel %vm3166, %v3165, %v3149
    %vm3168 = vcmask 228352
    %v3169 = vsel %vm3168, %v3167, %v3156
    %v3170 = vld [vmem:[#allocation10] sm:$0xff]
    %v3171 = vld [vmem:[#allocation10 + $0x8] sm:$0xff]
    %v3172 = vld [vmem:[#allocation10 + $0x10] sm:$0xff]
    %v3173 = vld [vmem:[#allocation10 + $0x18] sm:$0xff]
    %v3174 = vld [vmem:[%s5] sm:$0x1]
    %v3176 = vlaneseq
    %v3177 = vshrl.u32 %v3176, 7
    %v3178 = vsub.s32 0, %v3177
    %v3179 = vrot.slane %v3174, %v3178
    %v3182 = vsel %vm98, %v3169, 0
    %3184 = vmatprep.subr.mxu0 0.0
    %3185 = vmatpush1.msra.mxu0 0.0
    %3186 = vmatprep.subr.mxu0 0.0
    %3187 = vmatpush1.msra.mxu0 0.0
    %3188 = vmatprep.subr.mxu0 0.0
    %3189 = vmatpush1.msra.mxu0 0.0
    %3190 = vmatprep.subr.mxu0 0.0
    %3191 = vmatpush1.msra.mxu0 0.0
    %3192 = vmatprep.subr.mxu0 0.0
    %3193 = vmatpush1.msra.mxu0 0.0
    %3194 = vmatprep.subr.mxu0 0.0
    %3195 = vmatpush1.msra.mxu0 0.0
    %3196 = vmatprep.subr.mxu0 0.0
    %3197 = vmatpush1.msra.mxu0 0.0
    %3198 = vmatprep.subr.mxu0 0.0
    %3199 = vmatpush1.msra.mxu0 0.0
    %3200 = vmatprep.subr.mxu0 0.0
    %3201 = vmatpush1.msra.mxu0 0.0
    %3202 = vmatprep.subr.mxu0 0.0
    %3203 = vmatpush1.msra.mxu0 0.0
    %3204 = vmatprep.subr.mxu0 0.0
    %3205 = vmatpush1.msra.mxu0 0.0
    %3206 = vmatprep.subr.mxu0 0.0
    %3207 = vmatpush1.msra.mxu0 0.0
    %3208 = vmatprep.subr.mxu0 0.0
    %3209 = vmatpush1.msra.mxu0 %v3173
    %3210 = vmatprep.subr.mxu0 0.0
    %3211 = vmatpush1.msra.mxu0 %v3172
    %3212 = vmatprep.subr.mxu0 0.0
    %3213 = vmatpush1.msra.mxu0 %v3171
    %3214 = vmatprep.subr.mxu0 0.0
    %3215 = vmatpush1.msra.mxu0 %v3170
    %3216 = vmatprep.subr.mxu0 0.0
    %3217 = vmatpush2.msra.mxu0 0.0
    %3218 = vmatprep.subr.mxu0 0.0
    %3219 = vmatpush2.msra.mxu0 0.0
    %3220 = vmatprep.subr.mxu0 0.0
    %3221 = vmatpush2.msra.mxu0 0.0
    %3222 = vmatprep.subr.mxu0 0.0
    %3223 = vmatpush2.msra.mxu0 0.0
    %3224 = vmatprep.subr.mxu0 0.0
    %3225 = vmatpush2.msra.mxu0 0.0
    %3226 = vmatprep.subr.mxu0 0.0
    %3227 = vmatpush2.msra.mxu0 0.0
    %3228 = vmatprep.subr.mxu0 0.0
    %3229 = vmatpush2.msra.mxu0 0.0
    %3230 = vmatprep.subr.mxu0 0.0
    %3231 = vmatpush2.msra.mxu0 0.0
    %3232 = vmatprep.subr.mxu0 0.0
    %3233 = vmatpush2.msra.mxu0 0.0
    %3234 = vmatprep.subr.mxu0 0.0
    %3235 = vmatpush2.msra.mxu0 0.0
    %3236 = vmatprep.subr.mxu0 0.0
    %3237 = vmatpush2.msra.mxu0 0.0
    %3238 = vmatprep.subr.mxu0 0.0
    %3239 = vmatpush2.msra.mxu0 0.0
    %3240 = vmatprep.subr.mxu0 0.0
    %3241 = vmatpush2.msra.mxu0 0.0
    %3242 = vmatprep.subr.mxu0 0.0
    %3243 = vmatpush2.msra.mxu0 0.0
    %3244 = vmatprep.subr.mxu0 0.0
    %3245 = vmatpush2.msra.mxu0 0.0
    %3246 = vmatprep.subr.mxu0 0.0
    %3247 = vmatpush2.msra.mxu0 0.0
    %3248 = vmatprep.mubr.f32.mxu0 0.0
    %3249 = vmatmul.mubr.f32.gmra.mxu0 %v3182
    %v3250 = vpop.f32.mrf.mxu0
    %v3251 = vadd.f32 %v3179, %v3250
    %v3252 = vpop.f32.mrf.mxu0
    %3253 = vdwg.mxu0
    %3254 = vst [vmem:[#allocation11] sm:$0x3] %v3251
    // Predicated region
    $region46: #{tpu_custom_call.1} parent=1 // pred_check
      _
    $region47: #{tpu_custom_call.1} parent=1 // pred_check_branch
      %3256 = sbr.rel (0) target = $region49
    $region48: #{tpu_custom_call.1} parent=1 // pred_region
      %s3258 = ssub.s32 32, 32
      %3259 = vsyncadd [#allocation4], %s3258
      %s3261 = sshll.u32 [#allocation11], 4
      %s3262 = int_to_ptr.vmem [resolvable:$true] %s3261
      %3264 = dma.vmem_to_hbm [thread:$0]  %s3262, 32, %s6, [#allocation4]
    $region49: #{tpu_custom_call.1} parent=1 // pred_fallthru
      _
    // Predicated region
    $region50: #{tpu_custom_call.1} parent=1 // pred_check
      _
    $region51: #{tpu_custom_call.1} parent=1 // pred_check_branch
      %3266 = sbr.rel (0) target = $region53
    $region52: #{tpu_custom_call.1} parent=1 // pred_region
      %3267 = dma.done [#allocation4], 32
    $region53: #{tpu_custom_call.1} parent=1 // pred_fallthru
      _
    %3268 = vsyncpa [#allocation3], 1
    %3269 = vsyncpa [#allocation6], 1
    %3270 = vsyncpa [#allocation9], 1
    %3271 = vsyncpa [#allocation4], 1

</llo_original>
